<compile_context>
chip_gen: v7x
topology: tpu7x:2x2x1
jax: 0.10.0
libtpu: 0.0.40
codegen_flags: <defaults>
</compile_context>

<pallas_src>
import functools

import jax
import jax.numpy as jnp
import numpy as np
from jax import lax
from jax.experimental import pallas as pl
from jax.experimental.pallas import tpu as pltpu

NEG_SLOPE = 0.01  # PyTorch nn.LeakyReLU default negative_slope


# ------------------------------------------------------------------ FFT glue
# TODO(synk): FFT has no Pallas TPU equivalent; use XLA's FFT (norm='ortho').
def fft2(x):
    return jnp.fft.fft2(x, norm="ortho")


def ifft2(x):
    return jnp.fft.ifft2(x, norm="ortho")


# --------------------------------------------------- fused CNNLayer (Pallas)
def _shift_masks(H, W):
    """(9, 1, H*W) masks: mask[k, 0, p] = 1 iff pixel p shifted by the k-th
    3x3 tap stays inside the image (encodes zero 'same' padding)."""
    p = np.arange(H * W)
    y, x = p // W, p % W
    m = np.zeros((9, 1, H * W), np.float32)
    for k in range(9):
        dy, dx = k // 3 - 1, k % 3 - 1
        m[k, 0] = ((y + dy >= 0) & (y + dy < H) & (x + dx >= 0) & (x + dx < W))
    return jnp.asarray(m)


def _prep_w(w_hwio):
    """(3,3,Cin,Cout) HWIO -> (9, Cout, Cin): each tap is a ready matmul LHS."""
    kh, kw, cin, cout = w_hwio.shape
    return jnp.transpose(w_hwio.reshape(kh * kw, cin, cout), (0, 2, 1))


def _cnn_kernel(x_ref, masks_ref, w1_ref, w2_ref, w3_ref, o_ref, *, H, W):
    """Per-image fused conv stack on (C, H*W) activations (pixels on lanes)."""
    HW = H * W

    def shift_lanes(h, s):
        # result[:, p] = h[:, p + s] if 0 <= p + s < HW else 0   (static s)
        if s == 0:
            return h
        c = h.shape[0]
        z = jnp.zeros((c, abs(s)), dtype=h.dtype)
        if s > 0:
            return jnp.concatenate([h[:, s:], z], axis=1)
        return jnp.concatenate([z, h[:, :HW + s]], axis=1)

    def conv3x3(h, w_ref, leaky):
        cin = h.shape[0]
        cout = w_ref.shape[1]
        acc = jnp.zeros((cout, HW), jnp.float32)
        for k in range(9):
            dy, dx = k // 3 - 1, k % 3 - 1
            if dy == 0 and dx == 0:
                hk = h                                   # center tap: no shift/mask
            else:
                hk = shift_lanes(h, dy * W + dx) * masks_ref[k]
            if cin < 8:
                # Tiny contraction: VPU outer-product accumulate (skip MXU).
                wk = w_ref[k]                            # (cout, cin)
                for ci in range(cin):
                    acc = acc + wk[:, ci:ci + 1] * hk[ci:ci + 1, :]
            else:
                acc = acc + jnp.dot(w_ref[k], hk,
                                    preferred_element_type=jnp.float32)
        if leaky:
            acc = jnp.where(acc >= 0.0, acc, NEG_SLOPE * acc)
        return acc

    h = conv3x3(x_ref[0], w1_ref, leaky=True)       # (nf, HW)
    h = conv3x3(h, w2_ref, leaky=True)              # (nf, HW)
    o_ref[0] = conv3x3(h, w3_ref, leaky=False)      # (2, HW), lane-dense store


def cnn_layer(x_ri, w1, w2, w3, H, W):
    """x_ri: (B, 2, H*W) float32  ->  (B, 2, H*W) float32."""
    B = x_ri.shape[0]
    HW = H * W
    masks = _shift_masks(H, W)
    w1p, w2p, w3p = _prep_w(w1), _prep_w(w2), _prep_w(w3)
    return pl.pallas_call(
        functools.partial(_cnn_kernel, H=H, W=W),
        out_shape=jax.ShapeDtypeStruct((B, 2, HW), jnp.float32),
        grid=(B,),
        in_specs=[
            pl.BlockSpec((1, 2, HW), lambda b: (b, 0, 0)),
            pl.BlockSpec(masks.shape, lambda b: (0, 0, 0)),   # constant blocks:
            pl.BlockSpec(w1p.shape, lambda b: (0, 0, 0)),     # fetched once,
            pl.BlockSpec(w2p.shape, lambda b: (0, 0, 0)),     # reused every step
            pl.BlockSpec(w3p.shape, lambda b: (0, 0, 0)),
        ],
        out_specs=pl.BlockSpec((1, 2, HW), lambda b: (b, 0, 0)),
        compiler_params=pltpu.CompilerParams(dimension_semantics=("parallel",)),
    )(x_ri, masks, w1p, w2p, w3p)


# ----------------------------------------------- data-consistency (Pallas)
def _resk_kernel(ksr_ref, ksi_ref, m_ref, k0r_ref, k0i_ref, rr_ref, ri_ref):
    m = m_ref[...]
    rr_ref[...] = ksr_ref[...] * m - k0r_ref[...]
    ri_ref[...] = ksi_ref[...] * m - k0i_ref[...]


def resk_pallas(ksr, ksi, mask, k0r, k0i):
    # Whole problem (B, H*W) fits one lane-dense VMEM block; no grid needed.
    out = jax.ShapeDtypeStruct(ksr.shape, jnp.float32)
    return pl.pallas_call(_resk_kernel, out_shape=(out, out))(
        ksr, ksi, mask, k0r, k0i)


def _combine_kernel(gamma_ref, s_ref, dc_ref, o_ref):
    g = jnp.maximum(gamma_ref[0], 0.0)          # relu(gamma), scalar in SMEM
    o_ref[...] = s_ref[...] - g * dc_ref[...]


def combine_pallas(gamma, s_ri, dc_ri):
    return pl.pallas_call(
        _combine_kernel,
        out_shape=jax.ShapeDtypeStruct(s_ri.shape, jnp.float32),
        in_specs=[
            pl.BlockSpec(memory_space=pltpu.MemorySpace.SMEM),
            pl.BlockSpec(memory_space=pltpu.MemorySpace.VMEM),
            pl.BlockSpec(memory_space=pltpu.MemorySpace.VMEM),
        ],
        out_specs=pl.BlockSpec(memory_space=pltpu.MemorySpace.VMEM),
    )(gamma, s_ri, dc_ri)


# ------------------------------------------------------------- SCell forward
def scell_forward(params, x, k0, mask):
    """x, k0: complex64 (B,H,W); mask: float32 (B,H,W).  Returns (x, k0, mask)."""
    B, H, W = x.shape
    HW = H * W

    # complex2real, channel-first flattened: (B, 2, H*W), pixels on lanes.
    x_ri = jnp.stack([jnp.real(x), jnp.imag(x)], axis=1)
    x_ri = x_ri.reshape(B, 2, HW).astype(jnp.float32)

    # CNNLayer: conv(2->nf)+LReLU, conv(nf->nf)+LReLU, conv(nf->2) — one kernel.
    s_ri = cnn_layer(x_ri, params["w1"], params["w2"], params["w3"], H, W)

    # real2complex
    s = (s_ri[:, 0, :] + 1j * s_ri[:, 1, :]).reshape(B, H, W)

    # dataconsis: ifft2(fft2(s) * mask - k0)
    ks = fft2(s)
    rr, ri = resk_pallas(
        jnp.real(ks).reshape(B, HW),
        jnp.imag(ks).reshape(B, HW),
        mask.reshape(B, HW).astype(jnp.float32),
        jnp.real(k0).reshape(B, HW),
        jnp.imag(k0).reshape(B, HW),
    )
    dc = ifft2((rr + 1j * ri).reshape(B, H, W))

    # x = s - relu(gamma) * dc    (learn_step=True, is_last=False)
    dc_ri = jnp.stack([jnp.real(dc), jnp.imag(dc)], axis=1)
    dc_ri = dc_ri.reshape(B, 2, HW).astype(jnp.float32)
    x_ri_out = combine_pallas(params["gamma"].astype(jnp.float32), s_ri, dc_ri)

    x_out = (x_ri_out[:, 0, :] + 1j * x_ri_out[:, 1, :]).reshape(B, H, W)
    return x_out, k0, mask


# -------------------------------------------------------- pure-JAX reference
def reference_forward(params, x, k0, mask):
    xr = jnp.stack([jnp.real(x), jnp.imag(x)], axis=-1).astype(jnp.float32)

    def conv(h, w, leaky):
        y = lax.conv_general_dilated(
            h, w, (1, 1), "SAME", dimension_numbers=("NHWC", "HWIO", "NHWC")
        )
        return jnp.where(y >= 0, y, NEG_SLOPE * y) if leaky else y

    h = conv(xr, params["w1"], True)
    h = conv(h, params["w2"], True)
    sr = conv(h, params["w3"], False)
    s = sr[..., 0] + 1j * sr[..., 1]
    resk = fft2(s) * mask - k0
    dc = ifft2(resk)
    gamma = jax.nn.relu(params["gamma"])[0]
    return s - gamma * dc


# --------------------------------------------------------------------- main
if __name__ == "__main__":
    B, H, W, NF = 2, 16, 16, 32

    key = jax.random.PRNGKey(0)
    k_w1, k_w2, k_w3, k_xr, k_xi, k_kr, k_ki, k_m = jax.random.split(key, 8)

    # Deterministic parameter init (HWIO layout; PyTorch is OIHW).
    params = {
        "w1": 0.1 * jax.random.normal(k_w1, (3, 3, 2, NF), jnp.float32),
        "w2": 0.1 * jax.random.normal(k_w2, (3, 3, NF, NF), jnp.float32),
        "w3": 0.1 * jax.random.normal(k_w3, (3, 3, NF, 2), jnp.float32),
        "gamma": jnp.array([1.0], jnp.float32),  # weight_init = 1
    }

    x = (jax.random.normal(k_xr, (B, H, W)) + 1j * jax.random.normal(k_xi, (B, H, W))).astype(jnp.complex64)
    k0 = (jax.random.normal(k_kr, (B, H, W)) + 1j * jax.random.normal(k_ki, (B, H, W))).astype(jnp.complex64)
    mask = (jax.random.uniform(k_m, (B, H, W)) > 0.5).astype(jnp.float32)

    out_x, out_k0, out_mask = jax.jit(scell_forward)(params, x, k0, mask)
    jax.block_until_ready(out_x)

    ref_x = reference_forward(params, x, k0, mask)
    np.testing.assert_allclose(np.real(out_x), np.real(ref_x), atol=1e-4, rtol=1e-4)
    np.testing.assert_allclose(np.imag(out_x), np.imag(ref_x), atol=1e-4, rtol=1e-4)

    print("KERNEL_OK")
</pallas_src>

<mosaic_0001>
module attributes {stable_mosaic.version = 11 : i64} {
  func.func @_cnn_kernel(%arg0: i32, %arg1: memref<1x2x256xf32, #tpu.memory_space<vmem>>, %arg2: memref<9x1x256xf32, #tpu.memory_space<vmem>>, %arg3: memref<9x32x2xf32, #tpu.memory_space<vmem>>, %arg4: memref<9x32x32xf32, #tpu.memory_space<vmem>>, %arg5: memref<9x2x32xf32, #tpu.memory_space<vmem>>, %arg6: memref<1x2x256xf32, #tpu.memory_space<vmem>>) attributes {dimension_semantics = [#tpu.dimension_semantics<parallel>], iteration_bounds = array<i64: 2>, scalar_prefetch = 0 : i64, scratch_operands = 0 : i64, tpu.core_type = #tpu.core_type<tc>, window_params = [{transform_indices = @transform_0, window_bounds = array<i64: 1, 2, 256>}, {pipeline_mode = #tpu.pipeline_mode<synchronous>, transform_indices = @transform_1, window_bounds = array<i64: 9, 1, 256>}, {pipeline_mode = #tpu.pipeline_mode<synchronous>, transform_indices = @transform_2, window_bounds = array<i64: 9, 32, 2>}, {pipeline_mode = #tpu.pipeline_mode<synchronous>, transform_indices = @transform_3, window_bounds = array<i64: 9, 32, 32>}, {pipeline_mode = #tpu.pipeline_mode<synchronous>, transform_indices = @transform_4, window_bounds = array<i64: 9, 2, 32>}, {transform_indices = @transform_5, window_bounds = array<i64: 1, 2, 256>}]} {
    %c0 = arith.constant 0 : index
    %c0_0 = arith.constant 0 : index
    %c0_1 = arith.constant 0 : index
    %0 = vector.load %arg1[%c0, %c0_0, %c0_1] : memref<1x2x256xf32, #tpu.memory_space<vmem>>, vector<1x2x256xf32>
    %1 = vector.shape_cast %0 : vector<1x2x256xf32> to vector<2x256xf32>
    %cst = arith.constant 0.000000e+00 : f32
    %2 = vector.broadcast %cst : f32 to vector<32x256xf32>
    %cst_2 = arith.constant 0.000000e+00 : f32
    %3 = vector.broadcast %cst_2 : f32 to vector<2x17xf32>
    %4 = vector.extract_strided_slice %1 {offsets = [0, 0], sizes = [2, 239], strides = [1, 1]} : vector<2x256xf32> to vector<2x239xf32>
    %5 = tpu.concatenate %3, %4 in 1 : vector<2x17xf32>, vector<2x239xf32> -> vector<2x256xf32>
    %c0_3 = arith.constant 0 : index
    %c0_4 = arith.constant 0 : index
    %c0_5 = arith.constant 0 : index
    %6 = vector.load %arg2[%c0_3, %c0_4, %c0_5] : memref<9x1x256xf32, #tpu.memory_space<vmem>>, vector<1x1x256xf32>
    %7 = vector.shape_cast %6 : vector<1x1x256xf32> to vector<1x256xf32>
    %8 = vector.broadcast %7 : vector<1x256xf32> to vector<2x256xf32>
    %9 = arith.mulf %5, %8 : vector<2x256xf32>
    %c0_6 = arith.constant 0 : index
    %c0_7 = arith.constant 0 : index
    %c0_8 = arith.constant 0 : index
    %10 = vector.load %arg3[%c0_6, %c0_7, %c0_8] : memref<9x32x2xf32, #tpu.memory_space<vmem>>, vector<1x32x2xf32>
    %11 = vector.shape_cast %10 : vector<1x32x2xf32> to vector<32x2xf32>
    %12 = vector.extract_strided_slice %11 {offsets = [0, 0], sizes = [32, 1], strides = [1, 1]} : vector<32x2xf32> to vector<32x1xf32>
    %13 = vector.extract_strided_slice %9 {offsets = [0, 0], sizes = [1, 256], strides = [1, 1]} : vector<2x256xf32> to vector<1x256xf32>
    %14 = vector.broadcast %12 : vector<32x1xf32> to vector<32x256xf32>
    %15 = vector.broadcast %13 : vector<1x256xf32> to vector<32x256xf32>
    %16 = arith.mulf %14, %15 : vector<32x256xf32>
    %17 = arith.addf %2, %16 : vector<32x256xf32>
    %18 = vector.extract_strided_slice %11 {offsets = [0, 1], sizes = [32, 1], strides = [1, 1]} : vector<32x2xf32> to vector<32x1xf32>
    %19 = vector.extract_strided_slice %9 {offsets = [1, 0], sizes = [1, 256], strides = [1, 1]} : vector<2x256xf32> to vector<1x256xf32>
    %20 = vector.broadcast %18 : vector<32x1xf32> to vector<32x256xf32>
    %21 = vector.broadcast %19 : vector<1x256xf32> to vector<32x256xf32>
    %22 = arith.mulf %20, %21 : vector<32x256xf32>
    %23 = arith.addf %17, %22 : vector<32x256xf32>
    %cst_9 = arith.constant 0.000000e+00 : f32
    %24 = vector.broadcast %cst_9 : f32 to vector<2x16xf32>
    %25 = vector.extract_strided_slice %1 {offsets = [0, 0], sizes = [2, 240], strides = [1, 1]} : vector<2x256xf32> to vector<2x240xf32>
    %26 = tpu.concatenate %24, %25 in 1 : vector<2x16xf32>, vector<2x240xf32> -> vector<2x256xf32>
    %c1 = arith.constant 1 : index
    %c0_10 = arith.constant 0 : index
    %c0_11 = arith.constant 0 : index
    %27 = vector.load %arg2[%c1, %c0_10, %c0_11] : memref<9x1x256xf32, #tpu.memory_space<vmem>>, vector<1x1x256xf32>
    %28 = vector.shape_cast %27 : vector<1x1x256xf32> to vector<1x256xf32>
    %29 = vector.broadcast %28 : vector<1x256xf32> to vector<2x256xf32>
    %30 = arith.mulf %26, %29 : vector<2x256xf32>
    %c1_12 = arith.constant 1 : index
    %c0_13 = arith.constant 0 : index
    %c0_14 = arith.constant 0 : index
    %31 = vector.load %arg3[%c1_12, %c0_13, %c0_14] : memref<9x32x2xf32, #tpu.memory_space<vmem>>, vector<1x32x2xf32>
    %32 = vector.shape_cast %31 : vector<1x32x2xf32> to vector<32x2xf32>
    %33 = vector.extract_strided_slice %32 {offsets = [0, 0], sizes = [32, 1], strides = [1, 1]} : vector<32x2xf32> to vector<32x1xf32>
    %34 = vector.extract_strided_slice %30 {offsets = [0, 0], sizes = [1, 256], strides = [1, 1]} : vector<2x256xf32> to vector<1x256xf32>
    %35 = vector.broadcast %33 : vector<32x1xf32> to vector<32x256xf32>
    %36 = vector.broadcast %34 : vector<1x256xf32> to vector<32x256xf32>
    %37 = arith.mulf %35, %36 : vector<32x256xf32>
    %38 = arith.addf %23, %37 : vector<32x256xf32>
    %39 = vector.extract_strided_slice %32 {offsets = [0, 1], sizes = [32, 1], strides = [1, 1]} : vector<32x2xf32> to vector<32x1xf32>
    %40 = vector.extract_strided_slice %30 {offsets = [1, 0], sizes = [1, 256], strides = [1, 1]} : vector<2x256xf32> to vector<1x256xf32>
    %41 = vector.broadcast %39 : vector<32x1xf32> to vector<32x256xf32>
    %42 = vector.broadcast %40 : vector<1x256xf32> to vector<32x256xf32>
    %43 = arith.mulf %41, %42 : vector<32x256xf32>
    %44 = arith.addf %38, %43 : vector<32x256xf32>
    %cst_15 = arith.constant 0.000000e+00 : f32
    %45 = vector.broadcast %cst_15 : f32 to vector<2x15xf32>
    %46 = vector.extract_strided_slice %1 {offsets = [0, 0], sizes = [2, 241], strides = [1, 1]} : vector<2x256xf32> to vector<2x241xf32>
    %47 = tpu.concatenate %45, %46 in 1 : vector<2x15xf32>, vector<2x241xf32> -> vector<2x256xf32>
    %c2 = arith.constant 2 : index
    %c0_16 = arith.constant 0 : index
    %c0_17 = arith.constant 0 : index
    %48 = vector.load %arg2[%c2, %c0_16, %c0_17] : memref<9x1x256xf32, #tpu.memory_space<vmem>>, vector<1x1x256xf32>
    %49 = vector.shape_cast %48 : vector<1x1x256xf32> to vector<1x256xf32>
    %50 = vector.broadcast %49 : vector<1x256xf32> to vector<2x256xf32>
    %51 = arith.mulf %47, %50 : vector<2x256xf32>
    %c2_18 = arith.constant 2 : index
    %c0_19 = arith.constant 0 : index
    %c0_20 = arith.constant 0 : index
    %52 = vector.load %arg3[%c2_18, %c0_19, %c0_20] : memref<9x32x2xf32, #tpu.memory_space<vmem>>, vector<1x32x2xf32>
    %53 = vector.shape_cast %52 : vector<1x32x2xf32> to vector<32x2xf32>
    %54 = vector.extract_strided_slice %53 {offsets = [0, 0], sizes = [32, 1], strides = [1, 1]} : vector<32x2xf32> to vector<32x1xf32>
    %55 = vector.extract_strided_slice %51 {offsets = [0, 0], sizes = [1, 256], strides = [1, 1]} : vector<2x256xf32> to vector<1x256xf32>
    %56 = vector.broadcast %54 : vector<32x1xf32> to vector<32x256xf32>
    %57 = vector.broadcast %55 : vector<1x256xf32> to vector<32x256xf32>
    %58 = arith.mulf %56, %57 : vector<32x256xf32>
    %59 = arith.addf %44, %58 : vector<32x256xf32>
    %60 = vector.extract_strided_slice %53 {offsets = [0, 1], sizes = [32, 1], strides = [1, 1]} : vector<32x2xf32> to vector<32x1xf32>
    %61 = vector.extract_strided_slice %51 {offsets = [1, 0], sizes = [1, 256], strides = [1, 1]} : vector<2x256xf32> to vector<1x256xf32>
    %62 = vector.broadcast %60 : vector<32x1xf32> to vector<32x256xf32>
    %63 = vector.broadcast %61 : vector<1x256xf32> to vector<32x256xf32>
    %64 = arith.mulf %62, %63 : vector<32x256xf32>
    %65 = arith.addf %59, %64 : vector<32x256xf32>
    %cst_21 = arith.constant 0.000000e+00 : f32
    %66 = vector.broadcast %cst_21 : f32 to vector<2x1xf32>
    %67 = vector.extract_strided_slice %1 {offsets = [0, 0], sizes = [2, 255], strides = [1, 1]} : vector<2x256xf32> to vector<2x255xf32>
    %68 = tpu.concatenate %66, %67 in 1 : vector<2x1xf32>, vector<2x255xf32> -> vector<2x256xf32>
    %c3 = arith.constant 3 : index
    %c0_22 = arith.constant 0 : index
    %c0_23 = arith.constant 0 : index
    %69 = vector.load %arg2[%c3, %c0_22, %c0_23] : memref<9x1x256xf32, #tpu.memory_space<vmem>>, vector<1x1x256xf32>
    %70 = vector.shape_cast %69 : vector<1x1x256xf32> to vector<1x256xf32>
    %71 = vector.broadcast %70 : vector<1x256xf32> to vector<2x256xf32>
    %72 = arith.mulf %68, %71 : vector<2x256xf32>
    %c3_24 = arith.constant 3 : index
    %c0_25 = arith.constant 0 : index
    %c0_26 = arith.constant 0 : index
    %73 = vector.load %arg3[%c3_24, %c0_25, %c0_26] : memref<9x32x2xf32, #tpu.memory_space<vmem>>, vector<1x32x2xf32>
    %74 = vector.shape_cast %73 : vector<1x32x2xf32> to vector<32x2xf32>
    %75 = vector.extract_strided_slice %74 {offsets = [0, 0], sizes = [32, 1], strides = [1, 1]} : vector<32x2xf32> to vector<32x1xf32>
    %76 = vector.extract_strided_slice %72 {offsets = [0, 0], sizes = [1, 256], strides = [1, 1]} : vector<2x256xf32> to vector<1x256xf32>
    %77 = vector.broadcast %75 : vector<32x1xf32> to vector<32x256xf32>
    %78 = vector.broadcast %76 : vector<1x256xf32> to vector<32x256xf32>
    %79 = arith.mulf %77, %78 : vector<32x256xf32>
    %80 = arith.addf %65, %79 : vector<32x256xf32>
    %81 = vector.extract_strided_slice %74 {offsets = [0, 1], sizes = [32, 1], strides = [1, 1]} : vector<32x2xf32> to vector<32x1xf32>
    %82 = vector.extract_strided_slice %72 {offsets = [1, 0], sizes = [1, 256], strides = [1, 1]} : vector<2x256xf32> to vector<1x256xf32>
    %83 = vector.broadcast %81 : vector<32x1xf32> to vector<32x256xf32>
    %84 = vector.broadcast %82 : vector<1x256xf32> to vector<32x256xf32>
    %85 = arith.mulf %83, %84 : vector<32x256xf32>
    %86 = arith.addf %80, %85 : vector<32x256xf32>
    %c4 = arith.constant 4 : index
    %c0_27 = arith.constant 0 : index
    %c0_28 = arith.constant 0 : index
    %87 = vector.load %arg3[%c4, %c0_27, %c0_28] : memref<9x32x2xf32, #tpu.memory_space<vmem>>, vector<1x32x2xf32>
    %88 = vector.shape_cast %87 : vector<1x32x2xf32> to vector<32x2xf32>
    %89 = vector.extract_strided_slice %88 {offsets = [0, 0], sizes = [32, 1], strides = [1, 1]} : vector<32x2xf32> to vector<32x1xf32>
    %90 = vector.extract_strided_slice %1 {offsets = [0, 0], sizes = [1, 256], strides = [1, 1]} : vector<2x256xf32> to vector<1x256xf32>
    %91 = vector.broadcast %89 : vector<32x1xf32> to vector<32x256xf32>
    %92 = vector.broadcast %90 : vector<1x256xf32> to vector<32x256xf32>
    %93 = arith.mulf %91, %92 : vector<32x256xf32>
    %94 = arith.addf %86, %93 : vector<32x256xf32>
    %95 = vector.extract_strided_slice %88 {offsets = [0, 1], sizes = [32, 1], strides = [1, 1]} : vector<32x2xf32> to vector<32x1xf32>
    %96 = vector.extract_strided_slice %1 {offsets = [1, 0], sizes = [1, 256], strides = [1, 1]} : vector<2x256xf32> to vector<1x256xf32>
    %97 = vector.broadcast %95 : vector<32x1xf32> to vector<32x256xf32>
    %98 = vector.broadcast %96 : vector<1x256xf32> to vector<32x256xf32>
    %99 = arith.mulf %97, %98 : vector<32x256xf32>
    %100 = arith.addf %94, %99 : vector<32x256xf32>
    %cst_29 = arith.constant 0.000000e+00 : f32
    %101 = vector.broadcast %cst_29 : f32 to vector<2x1xf32>
    %102 = vector.extract_strided_slice %1 {offsets = [0, 1], sizes = [2, 255], strides = [1, 1]} : vector<2x256xf32> to vector<2x255xf32>
    %103 = tpu.concatenate %102, %101 in 1 : vector<2x255xf32>, vector<2x1xf32> -> vector<2x256xf32>
    %c5 = arith.constant 5 : index
    %c0_30 = arith.constant 0 : index
    %c0_31 = arith.constant 0 : index
    %104 = vector.load %arg2[%c5, %c0_30, %c0_31] : memref<9x1x256xf32, #tpu.memory_space<vmem>>, vector<1x1x256xf32>
    %105 = vector.shape_cast %104 : vector<1x1x256xf32> to vector<1x256xf32>
    %106 = vector.broadcast %105 : vector<1x256xf32> to vector<2x256xf32>
    %107 = arith.mulf %103, %106 : vector<2x256xf32>
    %c5_32 = arith.constant 5 : index
    %c0_33 = arith.constant 0 : index
    %c0_34 = arith.constant 0 : index
    %108 = vector.load %arg3[%c5_32, %c0_33, %c0_34] : memref<9x32x2xf32, #tpu.memory_space<vmem>>, vector<1x32x2xf32>
    %109 = vector.shape_cast %108 : vector<1x32x2xf32> to vector<32x2xf32>
    %110 = vector.extract_strided_slice %109 {offsets = [0, 0], sizes = [32, 1], strides = [1, 1]} : vector<32x2xf32> to vector<32x1xf32>
    %111 = vector.extract_strided_slice %107 {offsets = [0, 0], sizes = [1, 256], strides = [1, 1]} : vector<2x256xf32> to vector<1x256xf32>
    %112 = vector.broadcast %110 : vector<32x1xf32> to vector<32x256xf32>
    %113 = vector.broadcast %111 : vector<1x256xf32> to vector<32x256xf32>
    %114 = arith.mulf %112, %113 : vector<32x256xf32>
    %115 = arith.addf %100, %114 : vector<32x256xf32>
    %116 = vector.extract_strided_slice %109 {offsets = [0, 1], sizes = [32, 1], strides = [1, 1]} : vector<32x2xf32> to vector<32x1xf32>
    %117 = vector.extract_strided_slice %107 {offsets = [1, 0], sizes = [1, 256], strides = [1, 1]} : vector<2x256xf32> to vector<1x256xf32>
    %118 = vector.broadcast %116 : vector<32x1xf32> to vector<32x256xf32>
    %119 = vector.broadcast %117 : vector<1x256xf32> to vector<32x256xf32>
    %120 = arith.mulf %118, %119 : vector<32x256xf32>
    %121 = arith.addf %115, %120 : vector<32x256xf32>
    %cst_35 = arith.constant 0.000000e+00 : f32
    %122 = vector.broadcast %cst_35 : f32 to vector<2x15xf32>
    %123 = vector.extract_strided_slice %1 {offsets = [0, 15], sizes = [2, 241], strides = [1, 1]} : vector<2x256xf32> to vector<2x241xf32>
    %124 = tpu.concatenate %123, %122 in 1 : vector<2x241xf32>, vector<2x15xf32> -> vector<2x256xf32>
    %c6 = arith.constant 6 : index
    %c0_36 = arith.constant 0 : index
    %c0_37 = arith.constant 0 : index
    %125 = vector.load %arg2[%c6, %c0_36, %c0_37] : memref<9x1x256xf32, #tpu.memory_space<vmem>>, vector<1x1x256xf32>
    %126 = vector.shape_cast %125 : vector<1x1x256xf32> to vector<1x256xf32>
    %127 = vector.broadcast %126 : vector<1x256xf32> to vector<2x256xf32>
    %128 = arith.mulf %124, %127 : vector<2x256xf32>
    %c6_38 = arith.constant 6 : index
    %c0_39 = arith.constant 0 : index
    %c0_40 = arith.constant 0 : index
    %129 = vector.load %arg3[%c6_38, %c0_39, %c0_40] : memref<9x32x2xf32, #tpu.memory_space<vmem>>, vector<1x32x2xf32>
    %130 = vector.shape_cast %129 : vector<1x32x2xf32> to vector<32x2xf32>
    %131 = vector.extract_strided_slice %130 {offsets = [0, 0], sizes = [32, 1], strides = [1, 1]} : vector<32x2xf32> to vector<32x1xf32>
    %132 = vector.extract_strided_slice %128 {offsets = [0, 0], sizes = [1, 256], strides = [1, 1]} : vector<2x256xf32> to vector<1x256xf32>
    %133 = vector.broadcast %131 : vector<32x1xf32> to vector<32x256xf32>
    %134 = vector.broadcast %132 : vector<1x256xf32> to vector<32x256xf32>
    %135 = arith.mulf %133, %134 : vector<32x256xf32>
    %136 = arith.addf %121, %135 : vector<32x256xf32>
    %137 = vector.extract_strided_slice %130 {offsets = [0, 1], sizes = [32, 1], strides = [1, 1]} : vector<32x2xf32> to vector<32x1xf32>
    %138 = vector.extract_strided_slice %128 {offsets = [1, 0], sizes = [1, 256], strides = [1, 1]} : vector<2x256xf32> to vector<1x256xf32>
    %139 = vector.broadcast %137 : vector<32x1xf32> to vector<32x256xf32>
    %140 = vector.broadcast %138 : vector<1x256xf32> to vector<32x256xf32>
    %141 = arith.mulf %139, %140 : vector<32x256xf32>
    %142 = arith.addf %136, %141 : vector<32x256xf32>
    %cst_41 = arith.constant 0.000000e+00 : f32
    %143 = vector.broadcast %cst_41 : f32 to vector<2x16xf32>
    %144 = vector.extract_strided_slice %1 {offsets = [0, 16], sizes = [2, 240], strides = [1, 1]} : vector<2x256xf32> to vector<2x240xf32>
    %145 = tpu.concatenate %144, %143 in 1 : vector<2x240xf32>, vector<2x16xf32> -> vector<2x256xf32>
    %c7 = arith.constant 7 : index
    %c0_42 = arith.constant 0 : index
    %c0_43 = arith.constant 0 : index
    %146 = vector.load %arg2[%c7, %c0_42, %c0_43] : memref<9x1x256xf32, #tpu.memory_space<vmem>>, vector<1x1x256xf32>
    %147 = vector.shape_cast %146 : vector<1x1x256xf32> to vector<1x256xf32>
    %148 = vector.broadcast %147 : vector<1x256xf32> to vector<2x256xf32>
    %149 = arith.mulf %145, %148 : vector<2x256xf32>
    %c7_44 = arith.constant 7 : index
    %c0_45 = arith.constant 0 : index
    %c0_46 = arith.constant 0 : index
    %150 = vector.load %arg3[%c7_44, %c0_45, %c0_46] : memref<9x32x2xf32, #tpu.memory_space<vmem>>, vector<1x32x2xf32>
    %151 = vector.shape_cast %150 : vector<1x32x2xf32> to vector<32x2xf32>
    %152 = vector.extract_strided_slice %151 {offsets = [0, 0], sizes = [32, 1], strides = [1, 1]} : vector<32x2xf32> to vector<32x1xf32>
    %153 = vector.extract_strided_slice %149 {offsets = [0, 0], sizes = [1, 256], strides = [1, 1]} : vector<2x256xf32> to vector<1x256xf32>
    %154 = vector.broadcast %152 : vector<32x1xf32> to vector<32x256xf32>
    %155 = vector.broadcast %153 : vector<1x256xf32> to vector<32x256xf32>
    %156 = arith.mulf %154, %155 : vector<32x256xf32>
    %157 = arith.addf %142, %156 : vector<32x256xf32>
    %158 = vector.extract_strided_slice %151 {offsets = [0, 1], sizes = [32, 1], strides = [1, 1]} : vector<32x2xf32> to vector<32x1xf32>
    %159 = vector.extract_strided_slice %149 {offsets = [1, 0], sizes = [1, 256], strides = [1, 1]} : vector<2x256xf32> to vector<1x256xf32>
    %160 = vector.broadcast %158 : vector<32x1xf32> to vector<32x256xf32>
    %161 = vector.broadcast %159 : vector<1x256xf32> to vector<32x256xf32>
    %162 = arith.mulf %160, %161 : vector<32x256xf32>
    %163 = arith.addf %157, %162 : vector<32x256xf32>
    %cst_47 = arith.constant 0.000000e+00 : f32
    %164 = vector.broadcast %cst_47 : f32 to vector<2x17xf32>
    %165 = vector.extract_strided_slice %1 {offsets = [0, 17], sizes = [2, 239], strides = [1, 1]} : vector<2x256xf32> to vector<2x239xf32>
    %166 = tpu.concatenate %165, %164 in 1 : vector<2x239xf32>, vector<2x17xf32> -> vector<2x256xf32>
    %c8 = arith.constant 8 : index
    %c0_48 = arith.constant 0 : index
    %c0_49 = arith.constant 0 : index
    %167 = vector.load %arg2[%c8, %c0_48, %c0_49] : memref<9x1x256xf32, #tpu.memory_space<vmem>>, vector<1x1x256xf32>
    %168 = vector.shape_cast %167 : vector<1x1x256xf32> to vector<1x256xf32>
    %169 = vector.broadcast %168 : vector<1x256xf32> to vector<2x256xf32>
    %170 = arith.mulf %166, %169 : vector<2x256xf32>
    %c8_50 = arith.constant 8 : index
    %c0_51 = arith.constant 0 : index
    %c0_52 = arith.constant 0 : index
    %171 = vector.load %arg3[%c8_50, %c0_51, %c0_52] : memref<9x32x2xf32, #tpu.memory_space<vmem>>, vector<1x32x2xf32>
    %172 = vector.shape_cast %171 : vector<1x32x2xf32> to vector<32x2xf32>
    %173 = vector.extract_strided_slice %172 {offsets = [0, 0], sizes = [32, 1], strides = [1, 1]} : vector<32x2xf32> to vector<32x1xf32>
    %174 = vector.extract_strided_slice %170 {offsets = [0, 0], sizes = [1, 256], strides = [1, 1]} : vector<2x256xf32> to vector<1x256xf32>
    %175 = vector.broadcast %173 : vector<32x1xf32> to vector<32x256xf32>
    %176 = vector.broadcast %174 : vector<1x256xf32> to vector<32x256xf32>
    %177 = arith.mulf %175, %176 : vector<32x256xf32>
    %178 = arith.addf %163, %177 : vector<32x256xf32>
    %179 = vector.extract_strided_slice %172 {offsets = [0, 1], sizes = [32, 1], strides = [1, 1]} : vector<32x2xf32> to vector<32x1xf32>
    %180 = vector.extract_strided_slice %170 {offsets = [1, 0], sizes = [1, 256], strides = [1, 1]} : vector<2x256xf32> to vector<1x256xf32>
    %181 = vector.broadcast %179 : vector<32x1xf32> to vector<32x256xf32>
    %182 = vector.broadcast %180 : vector<1x256xf32> to vector<32x256xf32>
    %183 = arith.mulf %181, %182 : vector<32x256xf32>
    %184 = arith.addf %178, %183 : vector<32x256xf32>
    %cst_53 = arith.constant 0.000000e+00 : f32
    %185 = vector.broadcast %cst_53 : f32 to vector<32x256xf32>
    %186 = arith.cmpf oge, %184, %185 : vector<32x256xf32>
    %cst_54 = arith.constant 0.00999999977 : f32
    %187 = vector.broadcast %cst_54 : f32 to vector<32x256xf32>
    %188 = arith.mulf %187, %184 : vector<32x256xf32>
    %189 = arith.select %186, %184, %188 : vector<32x256xi1>, vector<32x256xf32>
    %cst_55 = arith.constant 0.000000e+00 : f32
    %190 = vector.broadcast %cst_55 : f32 to vector<32x256xf32>
    %cst_56 = arith.constant 0.000000e+00 : f32
    %191 = vector.broadcast %cst_56 : f32 to vector<32x17xf32>
    %192 = vector.extract_strided_slice %189 {offsets = [0, 0], sizes = [32, 239], strides = [1, 1]} : vector<32x256xf32> to vector<32x239xf32>
    %193 = tpu.concatenate %191, %192 in 1 : vector<32x17xf32>, vector<32x239xf32> -> vector<32x256xf32>
    %c0_57 = arith.constant 0 : index
    %c0_58 = arith.constant 0 : index
    %c0_59 = arith.constant 0 : index
    %194 = vector.load %arg2[%c0_57, %c0_58, %c0_59] : memref<9x1x256xf32, #tpu.memory_space<vmem>>, vector<1x1x256xf32>
    %195 = vector.shape_cast %194 : vector<1x1x256xf32> to vector<1x256xf32>
    %196 = vector.broadcast %195 : vector<1x256xf32> to vector<32x256xf32>
    %197 = arith.mulf %193, %196 : vector<32x256xf32>
    %c0_60 = arith.constant 0 : index
    %c0_61 = arith.constant 0 : index
    %c0_62 = arith.constant 0 : index
    %198 = vector.load %arg4[%c0_60, %c0_61, %c0_62] : memref<9x32x32xf32, #tpu.memory_space<vmem>>, vector<1x32x32xf32>
    %199 = vector.shape_cast %198 : vector<1x32x32xf32> to vector<32x32xf32>
    %cst_63 = arith.constant dense<0.000000e+00> : vector<32x256xf32>
    %200 = tpu.matmul %199, %197, %cst_63 {dimension_numbers = #tpu.dot_dimension_numbers<[1], [0], [0], [1], [0, 0, 1, 1], [], []>} : vector<32x32xf32>, vector<32x256xf32>, vector<32x256xf32> -> vector<32x256xf32>
    %201 = arith.addf %190, %200 : vector<32x256xf32>
    %cst_64 = arith.constant 0.000000e+00 : f32
    %202 = vector.broadcast %cst_64 : f32 to vector<32x16xf32>
    %203 = vector.extract_strided_slice %189 {offsets = [0, 0], sizes = [32, 240], strides = [1, 1]} : vector<32x256xf32> to vector<32x240xf32>
    %204 = tpu.concatenate %202, %203 in 1 : vector<32x16xf32>, vector<32x240xf32> -> vector<32x256xf32>
    %c1_65 = arith.constant 1 : index
    %c0_66 = arith.constant 0 : index
    %c0_67 = arith.constant 0 : index
    %205 = vector.load %arg2[%c1_65, %c0_66, %c0_67] : memref<9x1x256xf32, #tpu.memory_space<vmem>>, vector<1x1x256xf32>
    %206 = vector.shape_cast %205 : vector<1x1x256xf32> to vector<1x256xf32>
    %207 = vector.broadcast %206 : vector<1x256xf32> to vector<32x256xf32>
    %208 = arith.mulf %204, %207 : vector<32x256xf32>
    %c1_68 = arith.constant 1 : index
    %c0_69 = arith.constant 0 : index
    %c0_70 = arith.constant 0 : index
    %209 = vector.load %arg4[%c1_68, %c0_69, %c0_70] : memref<9x32x32xf32, #tpu.memory_space<vmem>>, vector<1x32x32xf32>
    %210 = vector.shape_cast %209 : vector<1x32x32xf32> to vector<32x32xf32>
    %cst_71 = arith.constant dense<0.000000e+00> : vector<32x256xf32>
    %211 = tpu.matmul %210, %208, %cst_71 {dimension_numbers = #tpu.dot_dimension_numbers<[1], [0], [0], [1], [0, 0, 1, 1], [], []>} : vector<32x32xf32>, vector<32x256xf32>, vector<32x256xf32> -> vector<32x256xf32>
    %212 = arith.addf %201, %211 : vector<32x256xf32>
    %cst_72 = arith.constant 0.000000e+00 : f32
    %213 = vector.broadcast %cst_72 : f32 to vector<32x15xf32>
    %214 = vector.extract_strided_slice %189 {offsets = [0, 0], sizes = [32, 241], strides = [1, 1]} : vector<32x256xf32> to vector<32x241xf32>
    %215 = tpu.concatenate %213, %214 in 1 : vector<32x15xf32>, vector<32x241xf32> -> vector<32x256xf32>
    %c2_73 = arith.constant 2 : index
    %c0_74 = arith.constant 0 : index
    %c0_75 = arith.constant 0 : index
    %216 = vector.load %arg2[%c2_73, %c0_74, %c0_75] : memref<9x1x256xf32, #tpu.memory_space<vmem>>, vector<1x1x256xf32>
    %217 = vector.shape_cast %216 : vector<1x1x256xf32> to vector<1x256xf32>
    %218 = vector.broadcast %217 : vector<1x256xf32> to vector<32x256xf32>
    %219 = arith.mulf %215, %218 : vector<32x256xf32>
    %c2_76 = arith.constant 2 : index
    %c0_77 = arith.constant 0 : index
    %c0_78 = arith.constant 0 : index
    %220 = vector.load %arg4[%c2_76, %c0_77, %c0_78] : memref<9x32x32xf32, #tpu.memory_space<vmem>>, vector<1x32x32xf32>
    %221 = vector.shape_cast %220 : vector<1x32x32xf32> to vector<32x32xf32>
    %cst_79 = arith.constant dense<0.000000e+00> : vector<32x256xf32>
    %222 = tpu.matmul %221, %219, %cst_79 {dimension_numbers = #tpu.dot_dimension_numbers<[1], [0], [0], [1], [0, 0, 1, 1], [], []>} : vector<32x32xf32>, vector<32x256xf32>, vector<32x256xf32> -> vector<32x256xf32>
    %223 = arith.addf %212, %222 : vector<32x256xf32>
    %cst_80 = arith.constant 0.000000e+00 : f32
    %224 = vector.broadcast %cst_80 : f32 to vector<32x1xf32>
    %225 = vector.extract_strided_slice %189 {offsets = [0, 0], sizes = [32, 255], strides = [1, 1]} : vector<32x256xf32> to vector<32x255xf32>
    %226 = tpu.concatenate %224, %225 in 1 : vector<32x1xf32>, vector<32x255xf32> -> vector<32x256xf32>
    %c3_81 = arith.constant 3 : index
    %c0_82 = arith.constant 0 : index
    %c0_83 = arith.constant 0 : index
    %227 = vector.load %arg2[%c3_81, %c0_82, %c0_83] : memref<9x1x256xf32, #tpu.memory_space<vmem>>, vector<1x1x256xf32>
    %228 = vector.shape_cast %227 : vector<1x1x256xf32> to vector<1x256xf32>
    %229 = vector.broadcast %228 : vector<1x256xf32> to vector<32x256xf32>
    %230 = arith.mulf %226, %229 : vector<32x256xf32>
    %c3_84 = arith.constant 3 : index
    %c0_85 = arith.constant 0 : index
    %c0_86 = arith.constant 0 : index
    %231 = vector.load %arg4[%c3_84, %c0_85, %c0_86] : memref<9x32x32xf32, #tpu.memory_space<vmem>>, vector<1x32x32xf32>
    %232 = vector.shape_cast %231 : vector<1x32x32xf32> to vector<32x32xf32>
    %cst_87 = arith.constant dense<0.000000e+00> : vector<32x256xf32>
    %233 = tpu.matmul %232, %230, %cst_87 {dimension_numbers = #tpu.dot_dimension_numbers<[1], [0], [0], [1], [0, 0, 1, 1], [], []>} : vector<32x32xf32>, vector<32x256xf32>, vector<32x256xf32> -> vector<32x256xf32>
    %234 = arith.addf %223, %233 : vector<32x256xf32>
    %c4_88 = arith.constant 4 : index
    %c0_89 = arith.constant 0 : index
    %c0_90 = arith.constant 0 : index
    %235 = vector.load %arg4[%c4_88, %c0_89, %c0_90] : memref<9x32x32xf32, #tpu.memory_space<vmem>>, vector<1x32x32xf32>
    %236 = vector.shape_cast %235 : vector<1x32x32xf32> to vector<32x32xf32>
    %cst_91 = arith.constant dense<0.000000e+00> : vector<32x256xf32>
    %237 = tpu.matmul %236, %189, %cst_91 {dimension_numbers = #tpu.dot_dimension_numbers<[1], [0], [0], [1], [0, 0, 1, 1], [], []>} : vector<32x32xf32>, vector<32x256xf32>, vector<32x256xf32> -> vector<32x256xf32>
    %238 = arith.addf %234, %237 : vector<32x256xf32>
    %cst_92 = arith.constant 0.000000e+00 : f32
    %239 = vector.broadcast %cst_92 : f32 to vector<32x1xf32>
    %240 = vector.extract_strided_slice %189 {offsets = [0, 1], sizes = [32, 255], strides = [1, 1]} : vector<32x256xf32> to vector<32x255xf32>
    %241 = tpu.concatenate %240, %239 in 1 : vector<32x255xf32>, vector<32x1xf32> -> vector<32x256xf32>
    %c5_93 = arith.constant 5 : index
    %c0_94 = arith.constant 0 : index
    %c0_95 = arith.constant 0 : index
    %242 = vector.load %arg2[%c5_93, %c0_94, %c0_95] : memref<9x1x256xf32, #tpu.memory_space<vmem>>, vector<1x1x256xf32>
    %243 = vector.shape_cast %242 : vector<1x1x256xf32> to vector<1x256xf32>
    %244 = vector.broadcast %243 : vector<1x256xf32> to vector<32x256xf32>
    %245 = arith.mulf %241, %244 : vector<32x256xf32>
    %c5_96 = arith.constant 5 : index
    %c0_97 = arith.constant 0 : index
    %c0_98 = arith.constant 0 : index
    %246 = vector.load %arg4[%c5_96, %c0_97, %c0_98] : memref<9x32x32xf32, #tpu.memory_space<vmem>>, vector<1x32x32xf32>
    %247 = vector.shape_cast %246 : vector<1x32x32xf32> to vector<32x32xf32>
    %cst_99 = arith.constant dense<0.000000e+00> : vector<32x256xf32>
    %248 = tpu.matmul %247, %245, %cst_99 {dimension_numbers = #tpu.dot_dimension_numbers<[1], [0], [0], [1], [0, 0, 1, 1], [], []>} : vector<32x32xf32>, vector<32x256xf32>, vector<32x256xf32> -> vector<32x256xf32>
    %249 = arith.addf %238, %248 : vector<32x256xf32>
    %cst_100 = arith.constant 0.000000e+00 : f32
    %250 = vector.broadcast %cst_100 : f32 to vector<32x15xf32>
    %251 = vector.extract_strided_slice %189 {offsets = [0, 15], sizes = [32, 241], strides = [1, 1]} : vector<32x256xf32> to vector<32x241xf32>
    %252 = tpu.concatenate %251, %250 in 1 : vector<32x241xf32>, vector<32x15xf32> -> vector<32x256xf32>
    %c6_101 = arith.constant 6 : index
    %c0_102 = arith.constant 0 : index
    %c0_103 = arith.constant 0 : index
    %253 = vector.load %arg2[%c6_101, %c0_102, %c0_103] : memref<9x1x256xf32, #tpu.memory_space<vmem>>, vector<1x1x256xf32>
    %254 = vector.shape_cast %253 : vector<1x1x256xf32> to vector<1x256xf32>
    %255 = vector.broadcast %254 : vector<1x256xf32> to vector<32x256xf32>
    %256 = arith.mulf %252, %255 : vector<32x256xf32>
    %c6_104 = arith.constant 6 : index
    %c0_105 = arith.constant 0 : index
    %c0_106 = arith.constant 0 : index
    %257 = vector.load %arg4[%c6_104, %c0_105, %c0_106] : memref<9x32x32xf32, #tpu.memory_space<vmem>>, vector<1x32x32xf32>
    %258 = vector.shape_cast %257 : vector<1x32x32xf32> to vector<32x32xf32>
    %cst_107 = arith.constant dense<0.000000e+00> : vector<32x256xf32>
    %259 = tpu.matmul %258, %256, %cst_107 {dimension_numbers = #tpu.dot_dimension_numbers<[1], [0], [0], [1], [0, 0, 1, 1], [], []>} : vector<32x32xf32>, vector<32x256xf32>, vector<32x256xf32> -> vector<32x256xf32>
    %260 = arith.addf %249, %259 : vector<32x256xf32>
    %cst_108 = arith.constant 0.000000e+00 : f32
    %261 = vector.broadcast %cst_108 : f32 to vector<32x16xf32>
    %262 = vector.extract_strided_slice %189 {offsets = [0, 16], sizes = [32, 240], strides = [1, 1]} : vector<32x256xf32> to vector<32x240xf32>
    %263 = tpu.concatenate %262, %261 in 1 : vector<32x240xf32>, vector<32x16xf32> -> vector<32x256xf32>
    %c7_109 = arith.constant 7 : index
    %c0_110 = arith.constant 0 : index
    %c0_111 = arith.constant 0 : index
    %264 = vector.load %arg2[%c7_109, %c0_110, %c0_111] : memref<9x1x256xf32, #tpu.memory_space<vmem>>, vector<1x1x256xf32>
    %265 = vector.shape_cast %264 : vector<1x1x256xf32> to vector<1x256xf32>
    %266 = vector.broadcast %265 : vector<1x256xf32> to vector<32x256xf32>
    %267 = arith.mulf %263, %266 : vector<32x256xf32>
    %c7_112 = arith.constant 7 : index
    %c0_113 = arith.constant 0 : index
    %c0_114 = arith.constant 0 : index
    %268 = vector.load %arg4[%c7_112, %c0_113, %c0_114] : memref<9x32x32xf32, #tpu.memory_space<vmem>>, vector<1x32x32xf32>
    %269 = vector.shape_cast %268 : vector<1x32x32xf32> to vector<32x32xf32>
    %cst_115 = arith.constant dense<0.000000e+00> : vector<32x256xf32>
    %270 = tpu.matmul %269, %267, %cst_115 {dimension_numbers = #tpu.dot_dimension_numbers<[1], [0], [0], [1], [0, 0, 1, 1], [], []>} : vector<32x32xf32>, vector<32x256xf32>, vector<32x256xf32> -> vector<32x256xf32>
    %271 = arith.addf %260, %270 : vector<32x256xf32>
    %cst_116 = arith.constant 0.000000e+00 : f32
    %272 = vector.broadcast %cst_116 : f32 to vector<32x17xf32>
    %273 = vector.extract_strided_slice %189 {offsets = [0, 17], sizes = [32, 239], strides = [1, 1]} : vector<32x256xf32> to vector<32x239xf32>
    %274 = tpu.concatenate %273, %272 in 1 : vector<32x239xf32>, vector<32x17xf32> -> vector<32x256xf32>
    %c8_117 = arith.constant 8 : index
    %c0_118 = arith.constant 0 : index
    %c0_119 = arith.constant 0 : index
    %275 = vector.load %arg2[%c8_117, %c0_118, %c0_119] : memref<9x1x256xf32, #tpu.memory_space<vmem>>, vector<1x1x256xf32>
    %276 = vector.shape_cast %275 : vector<1x1x256xf32> to vector<1x256xf32>
    %277 = vector.broadcast %276 : vector<1x256xf32> to vector<32x256xf32>
    %278 = arith.mulf %274, %277 : vector<32x256xf32>
    %c8_120 = arith.constant 8 : index
    %c0_121 = arith.constant 0 : index
    %c0_122 = arith.constant 0 : index
    %279 = vector.load %arg4[%c8_120, %c0_121, %c0_122] : memref<9x32x32xf32, #tpu.memory_space<vmem>>, vector<1x32x32xf32>
    %280 = vector.shape_cast %279 : vector<1x32x32xf32> to vector<32x32xf32>
    %cst_123 = arith.constant dense<0.000000e+00> : vector<32x256xf32>
    %281 = tpu.matmul %280, %278, %cst_123 {dimension_numbers = #tpu.dot_dimension_numbers<[1], [0], [0], [1], [0, 0, 1, 1], [], []>} : vector<32x32xf32>, vector<32x256xf32>, vector<32x256xf32> -> vector<32x256xf32>
    %282 = arith.addf %271, %281 : vector<32x256xf32>
    %cst_124 = arith.constant 0.000000e+00 : f32
    %283 = vector.broadcast %cst_124 : f32 to vector<32x256xf32>
    %284 = arith.cmpf oge, %282, %283 : vector<32x256xf32>
    %cst_125 = arith.constant 0.00999999977 : f32
    %285 = vector.broadcast %cst_125 : f32 to vector<32x256xf32>
    %286 = arith.mulf %285, %282 : vector<32x256xf32>
    %287 = arith.select %284, %282, %286 : vector<32x256xi1>, vector<32x256xf32>
    %cst_126 = arith.constant 0.000000e+00 : f32
    %288 = vector.broadcast %cst_126 : f32 to vector<2x256xf32>
    %cst_127 = arith.constant 0.000000e+00 : f32
    %289 = vector.broadcast %cst_127 : f32 to vector<32x17xf32>
    %290 = vector.extract_strided_slice %287 {offsets = [0, 0], sizes = [32, 239], strides = [1, 1]} : vector<32x256xf32> to vector<32x239xf32>
    %291 = tpu.concatenate %289, %290 in 1 : vector<32x17xf32>, vector<32x239xf32> -> vector<32x256xf32>
    %c0_128 = arith.constant 0 : index
    %c0_129 = arith.constant 0 : index
    %c0_130 = arith.constant 0 : index
    %292 = vector.load %arg2[%c0_128, %c0_129, %c0_130] : memref<9x1x256xf32, #tpu.memory_space<vmem>>, vector<1x1x256xf32>
    %293 = vector.shape_cast %292 : vector<1x1x256xf32> to vector<1x256xf32>
    %294 = vector.broadcast %293 : vector<1x256xf32> to vector<32x256xf32>
    %295 = arith.mulf %291, %294 : vector<32x256xf32>
    %c0_131 = arith.constant 0 : index
    %c0_132 = arith.constant 0 : index
    %c0_133 = arith.constant 0 : index
    %296 = vector.load %arg5[%c0_131, %c0_132, %c0_133] : memref<9x2x32xf32, #tpu.memory_space<vmem>>, vector<1x2x32xf32>
    %297 = vector.shape_cast %296 : vector<1x2x32xf32> to vector<2x32xf32>
    %cst_134 = arith.constant dense<0.000000e+00> : vector<2x256xf32>
    %298 = tpu.matmul %297, %295, %cst_134 {dimension_numbers = #tpu.dot_dimension_numbers<[1], [0], [0], [1], [0, 0, 1, 1], [], []>} : vector<2x32xf32>, vector<32x256xf32>, vector<2x256xf32> -> vector<2x256xf32>
    %299 = arith.addf %288, %298 : vector<2x256xf32>
    %cst_135 = arith.constant 0.000000e+00 : f32
    %300 = vector.broadcast %cst_135 : f32 to vector<32x16xf32>
    %301 = vector.extract_strided_slice %287 {offsets = [0, 0], sizes = [32, 240], strides = [1, 1]} : vector<32x256xf32> to vector<32x240xf32>
    %302 = tpu.concatenate %300, %301 in 1 : vector<32x16xf32>, vector<32x240xf32> -> vector<32x256xf32>
    %c1_136 = arith.constant 1 : index
    %c0_137 = arith.constant 0 : index
    %c0_138 = arith.constant 0 : index
    %303 = vector.load %arg2[%c1_136, %c0_137, %c0_138] : memref<9x1x256xf32, #tpu.memory_space<vmem>>, vector<1x1x256xf32>
    %304 = vector.shape_cast %303 : vector<1x1x256xf32> to vector<1x256xf32>
    %305 = vector.broadcast %304 : vector<1x256xf32> to vector<32x256xf32>
    %306 = arith.mulf %302, %305 : vector<32x256xf32>
    %c1_139 = arith.constant 1 : index
    %c0_140 = arith.constant 0 : index
    %c0_141 = arith.constant 0 : index
    %307 = vector.load %arg5[%c1_139, %c0_140, %c0_141] : memref<9x2x32xf32, #tpu.memory_space<vmem>>, vector<1x2x32xf32>
    %308 = vector.shape_cast %307 : vector<1x2x32xf32> to vector<2x32xf32>
    %cst_142 = arith.constant dense<0.000000e+00> : vector<2x256xf32>
    %309 = tpu.matmul %308, %306, %cst_142 {dimension_numbers = #tpu.dot_dimension_numbers<[1], [0], [0], [1], [0, 0, 1, 1], [], []>} : vector<2x32xf32>, vector<32x256xf32>, vector<2x256xf32> -> vector<2x256xf32>
    %310 = arith.addf %299, %309 : vector<2x256xf32>
    %cst_143 = arith.constant 0.000000e+00 : f32
    %311 = vector.broadcast %cst_143 : f32 to vector<32x15xf32>
    %312 = vector.extract_strided_slice %287 {offsets = [0, 0], sizes = [32, 241], strides = [1, 1]} : vector<32x256xf32> to vector<32x241xf32>
    %313 = tpu.concatenate %311, %312 in 1 : vector<32x15xf32>, vector<32x241xf32> -> vector<32x256xf32>
    %c2_144 = arith.constant 2 : index
    %c0_145 = arith.constant 0 : index
    %c0_146 = arith.constant 0 : index
    %314 = vector.load %arg2[%c2_144, %c0_145, %c0_146] : memref<9x1x256xf32, #tpu.memory_space<vmem>>, vector<1x1x256xf32>
    %315 = vector.shape_cast %314 : vector<1x1x256xf32> to vector<1x256xf32>
    %316 = vector.broadcast %315 : vector<1x256xf32> to vector<32x256xf32>
    %317 = arith.mulf %313, %316 : vector<32x256xf32>
    %c2_147 = arith.constant 2 : index
    %c0_148 = arith.constant 0 : index
    %c0_149 = arith.constant 0 : index
    %318 = vector.load %arg5[%c2_147, %c0_148, %c0_149] : memref<9x2x32xf32, #tpu.memory_space<vmem>>, vector<1x2x32xf32>
    %319 = vector.shape_cast %318 : vector<1x2x32xf32> to vector<2x32xf32>
    %cst_150 = arith.constant dense<0.000000e+00> : vector<2x256xf32>
    %320 = tpu.matmul %319, %317, %cst_150 {dimension_numbers = #tpu.dot_dimension_numbers<[1], [0], [0], [1], [0, 0, 1, 1], [], []>} : vector<2x32xf32>, vector<32x256xf32>, vector<2x256xf32> -> vector<2x256xf32>
    %321 = arith.addf %310, %320 : vector<2x256xf32>
    %cst_151 = arith.constant 0.000000e+00 : f32
    %322 = vector.broadcast %cst_151 : f32 to vector<32x1xf32>
    %323 = vector.extract_strided_slice %287 {offsets = [0, 0], sizes = [32, 255], strides = [1, 1]} : vector<32x256xf32> to vector<32x255xf32>
    %324 = tpu.concatenate %322, %323 in 1 : vector<32x1xf32>, vector<32x255xf32> -> vector<32x256xf32>
    %c3_152 = arith.constant 3 : index
    %c0_153 = arith.constant 0 : index
    %c0_154 = arith.constant 0 : index
    %325 = vector.load %arg2[%c3_152, %c0_153, %c0_154] : memref<9x1x256xf32, #tpu.memory_space<vmem>>, vector<1x1x256xf32>
    %326 = vector.shape_cast %325 : vector<1x1x256xf32> to vector<1x256xf32>
    %327 = vector.broadcast %326 : vector<1x256xf32> to vector<32x256xf32>
    %328 = arith.mulf %324, %327 : vector<32x256xf32>
    %c3_155 = arith.constant 3 : index
    %c0_156 = arith.constant 0 : index
    %c0_157 = arith.constant 0 : index
    %329 = vector.load %arg5[%c3_155, %c0_156, %c0_157] : memref<9x2x32xf32, #tpu.memory_space<vmem>>, vector<1x2x32xf32>
    %330 = vector.shape_cast %329 : vector<1x2x32xf32> to vector<2x32xf32>
    %cst_158 = arith.constant dense<0.000000e+00> : vector<2x256xf32>
    %331 = tpu.matmul %330, %328, %cst_158 {dimension_numbers = #tpu.dot_dimension_numbers<[1], [0], [0], [1], [0, 0, 1, 1], [], []>} : vector<2x32xf32>, vector<32x256xf32>, vector<2x256xf32> -> vector<2x256xf32>
    %332 = arith.addf %321, %331 : vector<2x256xf32>
    %c4_159 = arith.constant 4 : index
    %c0_160 = arith.constant 0 : index
    %c0_161 = arith.constant 0 : index
    %333 = vector.load %arg5[%c4_159, %c0_160, %c0_161] : memref<9x2x32xf32, #tpu.memory_space<vmem>>, vector<1x2x32xf32>
    %334 = vector.shape_cast %333 : vector<1x2x32xf32> to vector<2x32xf32>
    %cst_162 = arith.constant dense<0.000000e+00> : vector<2x256xf32>
    %335 = tpu.matmul %334, %287, %cst_162 {dimension_numbers = #tpu.dot_dimension_numbers<[1], [0], [0], [1], [0, 0, 1, 1], [], []>} : vector<2x32xf32>, vector<32x256xf32>, vector<2x256xf32> -> vector<2x256xf32>
    %336 = arith.addf %332, %335 : vector<2x256xf32>
    %cst_163 = arith.constant 0.000000e+00 : f32
    %337 = vector.broadcast %cst_163 : f32 to vector<32x1xf32>
    %338 = vector.extract_strided_slice %287 {offsets = [0, 1], sizes = [32, 255], strides = [1, 1]} : vector<32x256xf32> to vector<32x255xf32>
    %339 = tpu.concatenate %338, %337 in 1 : vector<32x255xf32>, vector<32x1xf32> -> vector<32x256xf32>
    %c5_164 = arith.constant 5 : index
    %c0_165 = arith.constant 0 : index
    %c0_166 = arith.constant 0 : index
    %340 = vector.load %arg2[%c5_164, %c0_165, %c0_166] : memref<9x1x256xf32, #tpu.memory_space<vmem>>, vector<1x1x256xf32>
    %341 = vector.shape_cast %340 : vector<1x1x256xf32> to vector<1x256xf32>
    %342 = vector.broadcast %341 : vector<1x256xf32> to vector<32x256xf32>
    %343 = arith.mulf %339, %342 : vector<32x256xf32>
    %c5_167 = arith.constant 5 : index
    %c0_168 = arith.constant 0 : index
    %c0_169 = arith.constant 0 : index
    %344 = vector.load %arg5[%c5_167, %c0_168, %c0_169] : memref<9x2x32xf32, #tpu.memory_space<vmem>>, vector<1x2x32xf32>
    %345 = vector.shape_cast %344 : vector<1x2x32xf32> to vector<2x32xf32>
    %cst_170 = arith.constant dense<0.000000e+00> : vector<2x256xf32>
    %346 = tpu.matmul %345, %343, %cst_170 {dimension_numbers = #tpu.dot_dimension_numbers<[1], [0], [0], [1], [0, 0, 1, 1], [], []>} : vector<2x32xf32>, vector<32x256xf32>, vector<2x256xf32> -> vector<2x256xf32>
    %347 = arith.addf %336, %346 : vector<2x256xf32>
    %cst_171 = arith.constant 0.000000e+00 : f32
    %348 = vector.broadcast %cst_171 : f32 to vector<32x15xf32>
    %349 = vector.extract_strided_slice %287 {offsets = [0, 15], sizes = [32, 241], strides = [1, 1]} : vector<32x256xf32> to vector<32x241xf32>
    %350 = tpu.concatenate %349, %348 in 1 : vector<32x241xf32>, vector<32x15xf32> -> vector<32x256xf32>
    %c6_172 = arith.constant 6 : index
    %c0_173 = arith.constant 0 : index
    %c0_174 = arith.constant 0 : index
    %351 = vector.load %arg2[%c6_172, %c0_173, %c0_174] : memref<9x1x256xf32, #tpu.memory_space<vmem>>, vector<1x1x256xf32>
    %352 = vector.shape_cast %351 : vector<1x1x256xf32> to vector<1x256xf32>
    %353 = vector.broadcast %352 : vector<1x256xf32> to vector<32x256xf32>
    %354 = arith.mulf %350, %353 : vector<32x256xf32>
    %c6_175 = arith.constant 6 : index
    %c0_176 = arith.constant 0 : index
    %c0_177 = arith.constant 0 : index
    %355 = vector.load %arg5[%c6_175, %c0_176, %c0_177] : memref<9x2x32xf32, #tpu.memory_space<vmem>>, vector<1x2x32xf32>
    %356 = vector.shape_cast %355 : vector<1x2x32xf32> to vector<2x32xf32>
    %cst_178 = arith.constant dense<0.000000e+00> : vector<2x256xf32>
    %357 = tpu.matmul %356, %354, %cst_178 {dimension_numbers = #tpu.dot_dimension_numbers<[1], [0], [0], [1], [0, 0, 1, 1], [], []>} : vector<2x32xf32>, vector<32x256xf32>, vector<2x256xf32> -> vector<2x256xf32>
    %358 = arith.addf %347, %357 : vector<2x256xf32>
    %cst_179 = arith.constant 0.000000e+00 : f32
    %359 = vector.broadcast %cst_179 : f32 to vector<32x16xf32>
    %360 = vector.extract_strided_slice %287 {offsets = [0, 16], sizes = [32, 240], strides = [1, 1]} : vector<32x256xf32> to vector<32x240xf32>
    %361 = tpu.concatenate %360, %359 in 1 : vector<32x240xf32>, vector<32x16xf32> -> vector<32x256xf32>
    %c7_180 = arith.constant 7 : index
    %c0_181 = arith.constant 0 : index
    %c0_182 = arith.constant 0 : index
    %362 = vector.load %arg2[%c7_180, %c0_181, %c0_182] : memref<9x1x256xf32, #tpu.memory_space<vmem>>, vector<1x1x256xf32>
    %363 = vector.shape_cast %362 : vector<1x1x256xf32> to vector<1x256xf32>
    %364 = vector.broadcast %363 : vector<1x256xf32> to vector<32x256xf32>
    %365 = arith.mulf %361, %364 : vector<32x256xf32>
    %c7_183 = arith.constant 7 : index
    %c0_184 = arith.constant 0 : index
    %c0_185 = arith.constant 0 : index
    %366 = vector.load %arg5[%c7_183, %c0_184, %c0_185] : memref<9x2x32xf32, #tpu.memory_space<vmem>>, vector<1x2x32xf32>
    %367 = vector.shape_cast %366 : vector<1x2x32xf32> to vector<2x32xf32>
    %cst_186 = arith.constant dense<0.000000e+00> : vector<2x256xf32>
    %368 = tpu.matmul %367, %365, %cst_186 {dimension_numbers = #tpu.dot_dimension_numbers<[1], [0], [0], [1], [0, 0, 1, 1], [], []>} : vector<2x32xf32>, vector<32x256xf32>, vector<2x256xf32> -> vector<2x256xf32>
    %369 = arith.addf %358, %368 : vector<2x256xf32>
    %cst_187 = arith.constant 0.000000e+00 : f32
    %370 = vector.broadcast %cst_187 : f32 to vector<32x17xf32>
    %371 = vector.extract_strided_slice %287 {offsets = [0, 17], sizes = [32, 239], strides = [1, 1]} : vector<32x256xf32> to vector<32x239xf32>
    %372 = tpu.concatenate %371, %370 in 1 : vector<32x239xf32>, vector<32x17xf32> -> vector<32x256xf32>
    %c8_188 = arith.constant 8 : index
    %c0_189 = arith.constant 0 : index
    %c0_190 = arith.constant 0 : index
    %373 = vector.load %arg2[%c8_188, %c0_189, %c0_190] : memref<9x1x256xf32, #tpu.memory_space<vmem>>, vector<1x1x256xf32>
    %374 = vector.shape_cast %373 : vector<1x1x256xf32> to vector<1x256xf32>
    %375 = vector.broadcast %374 : vector<1x256xf32> to vector<32x256xf32>
    %376 = arith.mulf %372, %375 : vector<32x256xf32>
    %c8_191 = arith.constant 8 : index
    %c0_192 = arith.constant 0 : index
    %c0_193 = arith.constant 0 : index
    %377 = vector.load %arg5[%c8_191, %c0_192, %c0_193] : memref<9x2x32xf32, #tpu.memory_space<vmem>>, vector<1x2x32xf32>
    %378 = vector.shape_cast %377 : vector<1x2x32xf32> to vector<2x32xf32>
    %cst_194 = arith.constant dense<0.000000e+00> : vector<2x256xf32>
    %379 = tpu.matmul %378, %376, %cst_194 {dimension_numbers = #tpu.dot_dimension_numbers<[1], [0], [0], [1], [0, 0, 1, 1], [], []>} : vector<2x32xf32>, vector<32x256xf32>, vector<2x256xf32> -> vector<2x256xf32>
    %380 = arith.addf %369, %379 : vector<2x256xf32>
    %c0_195 = arith.constant 0 : index
    %c0_196 = arith.constant 0 : index
    %c0_197 = arith.constant 0 : index
    %381 = vector.load %arg6[%c0_195, %c0_196, %c0_197] : memref<1x2x256xf32, #tpu.memory_space<vmem>>, vector<1x2x256xf32>
    %382 = vector.shape_cast %381 : vector<1x2x256xf32> to vector<2x256xf32>
    %383 = vector.shape_cast %380 : vector<2x256xf32> to vector<1x2x256xf32>
    tpu.vector_store %arg6[%c0_195, %c0_196, %c0_197], %383 {strides = array<i32>} : memref<1x2x256xf32, #tpu.memory_space<vmem>>, vector<1x2x256xf32>,
    return
  }
  func.func @transform_0(%arg0: i32) -> (i32, i32, i32) {
    %c0_i32 = arith.constant 0 : i32
    %c0_i32_0 = arith.constant 0 : i32
    %c0_i32_1 = arith.constant 0 : i32
    return %arg0, %c0_i32, %c0_i32_0 : i32, i32, i32
  }
  func.func @transform_1(%arg0: i32) -> (i32, i32, i32) {
    %c0_i32 = arith.constant 0 : i32
    %c0_i32_0 = arith.constant 0 : i32
    %c0_i32_1 = arith.constant 0 : i32
    %c0_i32_2 = arith.constant 0 : i32
    return %c0_i32, %c0_i32_0, %c0_i32_1 : i32, i32, i32
  }
  func.func @transform_2(%arg0: i32) -> (i32, i32, i32) {
    %c0_i32 = arith.constant 0 : i32
    %c0_i32_0 = arith.constant 0 : i32
    %c0_i32_1 = arith.constant 0 : i32
    %c0_i32_2 = arith.constant 0 : i32
    return %c0_i32, %c0_i32_0, %c0_i32_1 : i32, i32, i32
  }
  func.func @transform_3(%arg0: i32) -> (i32, i32, i32) {
    %c0_i32 = arith.constant 0 : i32
    %c0_i32_0 = arith.constant 0 : i32
    %c0_i32_1 = arith.constant 0 : i32
    %c0_i32_2 = arith.constant 0 : i32
    return %c0_i32, %c0_i32_0, %c0_i32_1 : i32, i32, i32
  }
  func.func @transform_4(%arg0: i32) -> (i32, i32, i32) {
    %c0_i32 = arith.constant 0 : i32
    %c0_i32_0 = arith.constant 0 : i32
    %c0_i32_1 = arith.constant 0 : i32
    %c0_i32_2 = arith.constant 0 : i32
    return %c0_i32, %c0_i32_0, %c0_i32_1 : i32, i32, i32
  }
  func.func @transform_5(%arg0: i32) -> (i32, i32, i32) {
    %c0_i32 = arith.constant 0 : i32
    %c0_i32_0 = arith.constant 0 : i32
    %c0_i32_1 = arith.constant 0 : i32
    return %arg0, %c0_i32, %c0_i32_0 : i32, i32, i32
  }
}

module attributes {stable_mosaic.version = 11 : i64} {
  func.func @_resk_kernel(%arg0: memref<2x256xf32, #tpu.memory_space<vmem>>, %arg1: memref<2x256xf32, #tpu.memory_space<vmem>>, %arg2: memref<2x256xf32, #tpu.memory_space<vmem>>, %arg3: memref<2x256xf32, #tpu.memory_space<vmem>>, %arg4: memref<2x256xf32, #tpu.memory_space<vmem>>, %arg5: memref<2x256xf32, #tpu.memory_space<vmem>>, %arg6: memref<2x256xf32, #tpu.memory_space<vmem>>) attributes {dimension_semantics = [], scalar_prefetch = 0 : i64, scratch_operands = 0 : i64, tpu.core_type = #tpu.core_type<tc>} {
    %c0 = arith.constant 0 : index
    %c0_0 = arith.constant 0 : index
    %0 = vector.load %arg2[%c0, %c0_0] : memref<2x256xf32, #tpu.memory_space<vmem>>, vector<2x256xf32>
    %c0_1 = arith.constant 0 : index
    %c0_2 = arith.constant 0 : index
    %1 = vector.load %arg0[%c0_1, %c0_2] : memref<2x256xf32, #tpu.memory_space<vmem>>, vector<2x256xf32>
    %2 = arith.mulf %1, %0 : vector<2x256xf32>
    %c0_3 = arith.constant 0 : index
    %c0_4 = arith.constant 0 : index
    %3 = vector.load %arg3[%c0_3, %c0_4] : memref<2x256xf32, #tpu.memory_space<vmem>>, vector<2x256xf32>
    %4 = arith.subf %2, %3 : vector<2x256xf32>
    %c0_5 = arith.constant 0 : index
    %c0_6 = arith.constant 0 : index
    %5 = vector.load %arg5[%c0_5, %c0_6] : memref<2x256xf32, #tpu.memory_space<vmem>>, vector<2x256xf32>
    tpu.vector_store %arg5[%c0_5, %c0_6], %4 {strides = array<i32>} : memref<2x256xf32, #tpu.memory_space<vmem>>, vector<2x256xf32>,
    %c0_7 = arith.constant 0 : index
    %c0_8 = arith.constant 0 : index
    %6 = vector.load %arg1[%c0_7, %c0_8] : memref<2x256xf32, #tpu.memory_space<vmem>>, vector<2x256xf32>
    %7 = arith.mulf %6, %0 : vector<2x256xf32>
    %c0_9 = arith.constant 0 : index
    %c0_10 = arith.constant 0 : index
    %8 = vector.load %arg4[%c0_9, %c0_10] : memref<2x256xf32, #tpu.memory_space<vmem>>, vector<2x256xf32>
    %9 = arith.subf %7, %8 : vector<2x256xf32>
    %c0_11 = arith.constant 0 : index
    %c0_12 = arith.constant 0 : index
    %10 = vector.load %arg6[%c0_11, %c0_12] : memref<2x256xf32, #tpu.memory_space<vmem>>, vector<2x256xf32>
    tpu.vector_store %arg6[%c0_11, %c0_12], %9 {strides = array<i32>} : memref<2x256xf32, #tpu.memory_space<vmem>>, vector<2x256xf32>,
    return
  }
}

module attributes {stable_mosaic.version = 11 : i64} {
  func.func @_combine_kernel(%arg0: memref<1xf32, #tpu.memory_space<smem>>, %arg1: memref<2x2x256xf32, #tpu.memory_space<vmem>>, %arg2: memref<2x2x256xf32, #tpu.memory_space<vmem>>, %arg3: memref<2x2x256xf32, #tpu.memory_space<vmem>>) attributes {dimension_semantics = [], scalar_prefetch = 0 : i64, scratch_operands = 0 : i64, tpu.core_type = #tpu.core_type<tc>} {
    %c0 = arith.constant 0 : index
    %0 = memref.load %arg0[%c0] : memref<1xf32, #tpu.memory_space<smem>>
    %cst = arith.constant 0.000000e+00 : f32
    %1 = arith.maximumf %0, %cst : f32
    %c0_0 = arith.constant 0 : index
    %c0_1 = arith.constant 0 : index
    %c0_2 = arith.constant 0 : index
    %2 = vector.load %arg1[%c0_0, %c0_1, %c0_2] : memref<2x2x256xf32, #tpu.memory_space<vmem>>, vector<2x2x256xf32>
    %c0_3 = arith.constant 0 : index
    %c0_4 = arith.constant 0 : index
    %c0_5 = arith.constant 0 : index
    %3 = vector.load %arg2[%c0_3, %c0_4, %c0_5] : memref<2x2x256xf32, #tpu.memory_space<vmem>>, vector<2x2x256xf32>
    %4 = vector.broadcast %1 : f32 to vector<2x2x256xf32>
    %5 = arith.mulf %4, %3 : vector<2x2x256xf32>
    %6 = arith.subf %2, %5 : vector<2x2x256xf32>
    %c0_6 = arith.constant 0 : index
    %c0_7 = arith.constant 0 : index
    %c0_8 = arith.constant 0 : index
    %7 = vector.load %arg3[%c0_6, %c0_7, %c0_8] : memref<2x2x256xf32, #tpu.memory_space<vmem>>, vector<2x2x256xf32>
    tpu.vector_store %arg3[%c0_6, %c0_7, %c0_8], %6 {strides = array<i32>} : memref<2x2x256xf32, #tpu.memory_space<vmem>>, vector<2x2x256xf32>,
    return
  }
}

</mosaic_0001>

<llo_original>
// kernel: custom-call
$region0: #{custom-call}
  %s0 = inlined_call_operand.hbm [shape: c64[2,16,16], index: 0, kind: input, shape index: {}]
  %s1 = inlined_call_operand.vmem [shape: f32[2,16,16], index: 1, kind: output, shape index: {}]
  $region1: #{custom-call} parent=0
    #allocation0 [shape = 's32[1]{0}', space=sflag, size = 0x4, scoped, tag = 'scoped memory for custom-call']
    %2 = vsyncpa [#allocation0], 0
    %s3 = sshll.u32 %s1, 4
    %s4 = int_to_ptr.vmem [resolvable:$true] %s3
    %6 = dma.hbm_to_vmem [thread:$0]  %s0, 512, %s4, [#allocation0]
    %7 = dma.done [#allocation0], 512
    %8 = vsyncpa [#allocation0], 1

// kernel: custom-call.1
$region0: #{custom-call.1}
  %s0 = inlined_call_operand.hbm [shape: c64[2,16,16], index: 0, kind: input, shape index: {}]
  %s1 = inlined_call_operand.vmem [shape: f32[2,16,16], index: 1, kind: output, shape index: {}]
  %s2 = scalar_lea.hbm %s0, 512
  $region1: #{custom-call.1} parent=0
    #allocation0 [shape = 's32[1]{0}', space=sflag, size = 0x4, scoped, tag = 'scoped memory for custom-call.1']
    %3 = vsyncpa [#allocation0], 0
    %s4 = sshll.u32 %s1, 4
    %s5 = int_to_ptr.vmem [resolvable:$true] %s4
    %7 = dma.hbm_to_vmem [thread:$0]  %s2, 512, %s5, [#allocation0]
    %8 = dma.done [#allocation0], 512
    %9 = vsyncpa [#allocation0], 1

// kernel: scell_forward.4
$region0: #{scell_forward.4}
  #allocation0 [shape = 'u32[]', space=smem, size = 0x4, offset = 0x4, fixed_abs, tag = 'smem constant byte address 0x4 - core index']
  #allocation1 [shape = 'u32[144,128]{1,0:T(1,128)}', space=vmem, size = 0x12000, scoped, tag = 'internal scratch']
  %s0 = inlined_call_operand.vmem [shape: f32[2,256], index: 0, kind: input, shape index: {}]
  %s1 = inlined_call_operand.vmem [shape: f32[2,256], index: 1, kind: input, shape index: {}]
  %s2 = inlined_call_operand.vmem [shape: f32[2,256], index: 2, kind: input, shape index: {}]
  %s3 = inlined_call_operand.vmem [shape: f32[2,256], index: 3, kind: input, shape index: {}]
  %s4 = inlined_call_operand.vmem [shape: f32[2,256], index: 4, kind: input, shape index: {}]
  %s5 = inlined_call_operand.vmem [shape: f32[2,256], index: 5, kind: output, shape index: {0}]
  %s6 = inlined_call_operand.vmem [shape: f32[2,256], index: 6, kind: output, shape index: {1}]
  %7 = xla_tuple %s5, %s6
  %s8 = sld [smem:[#allocation0]]
  $region38: #{scell_forward.4} parent=0
    _
  %s10 = ssub.s32 1, %s8
  %s11 = scalar_select 0, %s10, %s8
  // Predicated region
  $region2: #{scell_forward.4} parent=0 // pred_check
    _
  $region3: #{scell_forward.4} parent=0 // pred_check_branch
    %13 = sbr.rel (0) target = $region5
  $region4: #{scell_forward.4} parent=0 // pred_region
    _
  $region5: #{scell_forward.4} parent=0 // pred_fallthru
    _
  // Predicated region
  $region6: #{scell_forward.4} parent=0 // pred_check
    _
  $region7: #{scell_forward.4} parent=0 // pred_check_branch
    %15 = sbr.rel (0) target = $region9
  $region8: #{scell_forward.4} parent=0 // pred_region
    _
  $region9: #{scell_forward.4} parent=0 // pred_fallthru
    _
  // Predicated region
  $region10: #{scell_forward.4} parent=0 // pred_check
    _
  $region11: #{scell_forward.4} parent=0 // pred_check_branch
    %17 = sbr.rel (0) target = $region13
  $region12: #{scell_forward.4} parent=0 // pred_region
    _
  $region13: #{scell_forward.4} parent=0 // pred_fallthru
    _
  // Predicated region
  $region14: #{scell_forward.4} parent=0 // pred_check
    _
  $region15: #{scell_forward.4} parent=0 // pred_check_branch
    %19 = sbr.rel (0) target = $region17
  $region16: #{scell_forward.4} parent=0 // pred_region
    _
  $region17: #{scell_forward.4} parent=0 // pred_fallthru
    _
  // Predicated region
  $region18: #{scell_forward.4} parent=0 // pred_check
    _
  $region19: #{scell_forward.4} parent=0 // pred_check_branch
    %21 = sbr.rel (0) target = $region21
  $region20: #{scell_forward.4} parent=0 // pred_region
    _
  $region21: #{scell_forward.4} parent=0 // pred_fallthru
    _
  %v22 = vld [vmem:[%s2] sm:$0xf]
  %v23 = vld [vmem:[%s0] sm:$0xf]
  %v24 = vmul.f32 %v23, %v22
  %v25 = vld [vmem:[%s3] sm:$0xf]
  %v26 = vsub.f32 %v24, %v25
  %27 = vst [vmem:[%s5] sm:$0xf] %v26
  %v28 = vld [vmem:[%s1] sm:$0xf]
  %v29 = vmul.f32 %v28, %v22
  %v30 = vld [vmem:[%s4] sm:$0xf]
  %v31 = vsub.f32 %v29, %v30
  %32 = vst [vmem:[%s6] sm:$0xf] %v31
  // Predicated region
  $region22: #{scell_forward.4} parent=0 // pred_check
    _
  $region23: #{scell_forward.4} parent=0 // pred_check_branch
    %34 = sbr.rel (0) target = $region25
  $region24: #{scell_forward.4} parent=0 // pred_region
    _
  $region25: #{scell_forward.4} parent=0 // pred_fallthru
    _
  // Predicated region
  $region26: #{scell_forward.4} parent=0 // pred_check
    _
  $region27: #{scell_forward.4} parent=0 // pred_check_branch
    %36 = sbr.rel (0) target = $region29
  $region28: #{scell_forward.4} parent=0 // pred_region
    _
  $region29: #{scell_forward.4} parent=0 // pred_fallthru
    _
  // Predicated region
  $region30: #{scell_forward.4} parent=0 // pred_check
    _
  $region31: #{scell_forward.4} parent=0 // pred_check_branch
    %38 = sbr.rel (0) target = $region33
  $region32: #{scell_forward.4} parent=0 // pred_region
    _
  $region33: #{scell_forward.4} parent=0 // pred_fallthru
    _
  // Predicated region
  $region34: #{scell_forward.4} parent=0 // pred_check
    _
  $region35: #{scell_forward.4} parent=0 // pred_check_branch
    %40 = sbr.rel (0) target = $region37
  $region36: #{scell_forward.4} parent=0 // pred_region
    _
  $region37: #{scell_forward.4} parent=0 // pred_fallthru
    _

// kernel: custom-call.4
$region0: #{custom-call.4}
  %s0 = inlined_call_operand.vmem [shape: f32[2,16,16], index: 0, kind: input, shape index: {}]
  %s1 = inlined_call_operand.vmem [shape: f32[2,16,16], index: 1, kind: input, shape index: {}]
  %s2 = inlined_call_operand.vmem [shape: c64[2,16,16], index: 2, kind: output, shape index: {}]
  %s4 = scalar_lea.vmem %s2, 32
  %v5 = vld [vmem:[%s0] sm:$0xff]
  %6 = vst [vmem:[%s2] sm:$0xff] %v5
  %s7 = scalar_lea.vmem %s2, 8
  %s8 = scalar_lea.vmem %s0, 8
  %v9 = vld [vmem:[%s8] sm:$0xff]
  %10 = vst [vmem:[%s7] sm:$0xff] %v9
  %s11 = scalar_lea.vmem %s2, 16
  %s12 = scalar_lea.vmem %s0, 16
  %v13 = vld [vmem:[%s12] sm:$0xff]
  %14 = vst [vmem:[%s11] sm:$0xff] %v13
  %s15 = scalar_lea.vmem %s2, 24
  %s16 = scalar_lea.vmem %s0, 24
  %v17 = vld [vmem:[%s16] sm:$0xff]
  %18 = vst [vmem:[%s15] sm:$0xff] %v17
  %v19 = vld [vmem:[%s1] sm:$0xff]
  %20 = vst [vmem:[%s4] sm:$0xff] %v19
  %s21 = scalar_lea.vmem %s4, 8
  %s22 = scalar_lea.vmem %s1, 8
  %v23 = vld [vmem:[%s22] sm:$0xff]
  %24 = vst [vmem:[%s21] sm:$0xff] %v23
  %s25 = scalar_lea.vmem %s4, 16
  %s26 = scalar_lea.vmem %s1, 16
  %v27 = vld [vmem:[%s26] sm:$0xff]
  %28 = vst [vmem:[%s25] sm:$0xff] %v27
  %s29 = scalar_lea.vmem %s4, 24
  %s30 = scalar_lea.vmem %s1, 24
  %v31 = vld [vmem:[%s30] sm:$0xff]
  %32 = vst [vmem:[%s29] sm:$0xff] %v31

// kernel: custom-call.5
$region0: #{custom-call.5}
  %s0 = inlined_call_operand.vmem [shape: f32[2,16,16], index: 0, kind: input, shape index: {}]
  %s1 = inlined_call_operand.vmem [shape: f32[2,16,16], index: 1, kind: input, shape index: {}]
  %s2 = inlined_call_operand.hbm [shape: c64[2,16,16], index: 2, kind: output, shape index: {}]
  %s3 = scalar_lea.hbm %s2, 512
  $region1: #{custom-call.5} parent=0
    #allocation0 [shape = 's32[1]{0}', space=sflag, size = 0x4, scoped, tag = 'scoped memory for custom-call.5']
    %4 = vsyncpa [#allocation0], 0
    %s5 = sshll.u32 %s0, 4
    %s6 = int_to_ptr.vmem [resolvable:$true] %s5
    %8 = dma.vmem_to_hbm [thread:$0]  %s6, 512, %s2, [#allocation0]
    %9 = dma.done [#allocation0], 512
    %10 = vsyncpa [#allocation0], 1
  $region2: #{custom-call.5} parent=0
    #allocation1 [shape = 's32[1]{0}', space=sflag, size = 0x4, scoped, tag = 'scoped memory for custom-call.5']
    %11 = vsyncpa [#allocation1], 0
    %s12 = sshll.u32 %s1, 4
    %s13 = int_to_ptr.vmem [resolvable:$true] %s12
    %15 = dma.vmem_to_hbm [thread:$0]  %s13, 512, %s3, [#allocation1]
    %16 = dma.done [#allocation1], 512
    %17 = vsyncpa [#allocation1], 1

// kernel: scell_forward.5
$region0: #{scell_forward.5}
  #allocation0 [shape = 'u32[]', space=smem, size = 0x4, offset = 0x4, fixed_abs, tag = 'smem constant byte address 0x4 - core index']
  #allocation1 [shape = 'u32[144,128]{1,0:T(1,128)}', space=vmem, size = 0x12000, scoped, tag = 'internal scratch']
  #allocation2 [shape = 'f32[1]{0:T(128)S(6)}', space=smem, size = 0x200, scoped, tag = 'scoped memory for scell_forward.5']
  %s0 = inlined_call_operand.<no memory space> [shape: f32[1], index: 0, kind: input, shape index: {}]
  %s1 = inlined_call_operand.vmem [shape: f32[2,2,256], index: 1, kind: input, shape index: {}]
  %s2 = inlined_call_operand.vmem [shape: f32[2,2,256], index: 2, kind: input, shape index: {}]
  %s3 = inlined_call_operand.vmem [shape: f32[2,2,256], index: 3, kind: output, shape index: {}]
  %s4 = sld [smem:[#allocation0]]
  $region22: #{scell_forward.5} parent=0
    _
  %s6 = ssub.s32 1, %s4
  %s7 = scalar_select 0, %s6, %s4
  %8 = sst [smem:[#allocation2]] %s0
  // Predicated region
  $region2: #{scell_forward.5} parent=0 // pred_check
    _
  $region3: #{scell_forward.5} parent=0 // pred_check_branch
    %10 = sbr.rel (0) target = $region5
  $region4: #{scell_forward.5} parent=0 // pred_region
    _
  $region5: #{scell_forward.5} parent=0 // pred_fallthru
    _
  // Predicated region
  $region6: #{scell_forward.5} parent=0 // pred_check
    _
  $region7: #{scell_forward.5} parent=0 // pred_check_branch
    %12 = sbr.rel (0) target = $region9
  $region8: #{scell_forward.5} parent=0 // pred_region
    _
  $region9: #{scell_forward.5} parent=0 // pred_fallthru
    _
  // Predicated region
  $region10: #{scell_forward.5} parent=0 // pred_check
    _
  $region11: #{scell_forward.5} parent=0 // pred_check_branch
    %14 = sbr.rel (0) target = $region13
  $region12: #{scell_forward.5} parent=0 // pred_region
    _
  $region13: #{scell_forward.5} parent=0 // pred_fallthru
    _
  %s15 = sld [smem:[#allocation2]]
  %s16 = smax.f32 %s15, 0.0
  %v17 = vld [vmem:[%s1] sm:$0xf]
  %v18 = vld [vmem:[%s1 + $0x4] sm:$0xf]
  %v19 = vld [vmem:[%s2] sm:$0xf]
  %v20 = vld [vmem:[%s2 + $0x4] sm:$0xf]
  %v21 = vstv %s16
  %v22 = vmul.f32 %v21, %v19
  %v23 = vmul.f32 %v21, %v20
  %v24 = vsub.f32 %v17, %v22
  %v25 = vsub.f32 %v18, %v23
  %26 = vst [vmem:[%s3] sm:$0xf] %v24
  %27 = vst [vmem:[%s3 + $0x4] sm:$0xf] %v25
  // Predicated region
  $region14: #{scell_forward.5} parent=0 // pred_check
    _
  $region15: #{scell_forward.5} parent=0 // pred_check_branch
    %29 = sbr.rel (0) target = $region17
  $region16: #{scell_forward.5} parent=0 // pred_region
    _
  $region17: #{scell_forward.5} parent=0 // pred_fallthru
    _
  // Predicated region
  $region18: #{scell_forward.5} parent=0 // pred_check
    _
  $region19: #{scell_forward.5} parent=0 // pred_check_branch
    %31 = sbr.rel (0) target = $region21
  $region20: #{scell_forward.5} parent=0 // pred_region
    _
  $region21: #{scell_forward.5} parent=0 // pred_fallthru
    _

// kernel: scell_forward.3
$region0: #{scell_forward.3}
  #allocation0 [shape = 'u32[]', space=smem, size = 0x4, offset = 0x4, fixed_abs, tag = 'smem constant byte address 0x4 - core index']
  #allocation1 [shape = 'u32[144,128]{1,0:T(1,128)}', space=vmem, size = 0x12000, scoped, tag = 'internal scratch']
  %s0 = inlined_call_operand.vmem [shape: f32[2,2,256], index: 0, kind: input, shape index: {}]
  %s1 = inlined_call_operand.vmem [shape: f32[9,1,256], index: 1, kind: input, shape index: {}]
  %s2 = inlined_call_operand.vmem [shape: f32[9,32,2], index: 2, kind: input, shape index: {}]
  %s3 = inlined_call_operand.vmem [shape: f32[9,32,32], index: 3, kind: input, shape index: {}]
  %s4 = inlined_call_operand.vmem [shape: f32[9,2,32], index: 4, kind: input, shape index: {}]
  %s5 = inlined_call_operand.vmem [shape: f32[2,2,256], index: 5, kind: output, shape index: {}]
  %s6 = sld [smem:[#allocation0]]
  $region53: #{scell_forward.3} parent=0
    _
  %s8 = ssub.s32 1, %s6
  %s9 = scalar_select 0, %s8, %s6
  loop: start=0, step=1, limit=4
  $region2: #{scell_forward.3} parent=0 // loop_pre_header
    _
  $region3: #{scell_forward.3} parent=0 // loop_header
    %s11 = sphi 0, %s15
    %p12 = scmp.ge.s32.totalorder %s11, 4
    %s21 = sphi 0, %s23
    %s24 = sphi 0, %s21
    %s25 = sphi 0, %s24
    %s41 = sphi 0, %s25
    %s45 = sphi 0, %s45
    %s47 = sphi 0, %s45
    %s48 = sphi 0, %s47
    %s62 = sphi 0, %s48
    %s66 = sphi 0, %s66
    %s68 = sphi 0, %s66
    %s69 = sphi 0, %s68
    %s83 = sphi 0, %s69
    %s87 = sphi 0, %s87
    %s89 = sphi 0, %s87
    %s90 = sphi 0, %s89
    %s104 = sphi 0, %s90
    %s108 = sphi 0, %s108
    %s110 = sphi 0, %s108
    %s111 = sphi 0, %s110
    %s125 = sphi 0, %s111
    %s131 = sphi 0, %s133
    %s134 = sphi 0, %s131
    %s135 = sphi 0, %s134
    %s151 = sphi 0, %s135
  $region4: #{scell_forward.3} parent=0 // loop_header_branch
    %14 = sbr.rel (%p12) target = $region8
  $region5: #{scell_forward.3} parent=0 // loop_body
    %s16 = ssub.s32 %s11, 1
    %s17 = ssub.s32 %s11, 2
    %s18 = sadd.s32 %s11, 1
    %s19 = ssub.s32 %s11, %s18
    %p20 = scmp.eq.s32.totalorder %s19, 0
    %s22 = sadd.s32 %s21, 1
    %s23 = scalar_select %p20, %s21, %s22
    %p26 = pneg %p20
    %p27 = scmp.eq.s32.totalorder %s11, 1
    %p28 = por %p26, %p27
    %p29 = scmp.ne.s32.totalorder %s21, %s24
    %p30 = scmp.eq.s32.totalorder %s11, 0
    %p31 = por %p29, %p30
    %p32 = scmp.ne.s32.totalorder %s21, %s24
    %p33 = scmp.eq.s32.totalorder %s16, 1
    %p34 = por %p32, %p33
    %p35 = scmp.ne.s32.totalorder %s24, %s25
    %p36 = scmp.eq.s32.totalorder %s16, 0
    %p37 = por %p35, %p36
    %p38 = scmp.ne.s32.totalorder %s24, %s25
    %p39 = scmp.eq.s32.totalorder %s17, 1
    %p40 = por %p38, %p39
    %p42 = scmp.ne.s32.totalorder %s25, %s41
    %p43 = scmp.eq.s32.totalorder %s17, 0
    %p44 = por %p42, %p43
    %s46 = sadd.s32 %s45, 1
    %p49 = scmp.eq.s32.totalorder %s11, 1
    %p50 = scmp.ne.s32.totalorder %s45, %s47
    %p51 = scmp.eq.s32.totalorder %s11, 0
    %p52 = por %p50, %p51
    %p53 = scmp.ne.s32.totalorder %s45, %s47
    %p54 = scmp.eq.s32.totalorder %s16, 1
    %p55 = por %p53, %p54
    %p56 = scmp.ne.s32.totalorder %s47, %s48
    %p57 = scmp.eq.s32.totalorder %s16, 0
    %p58 = por %p56, %p57
    %p59 = scmp.ne.s32.totalorder %s47, %s48
    %p60 = scmp.eq.s32.totalorder %s17, 1
    %p61 = por %p59, %p60
    %p63 = scmp.ne.s32.totalorder %s48, %s62
    %p64 = scmp.eq.s32.totalorder %s17, 0
    %p65 = por %p63, %p64
    %s67 = sadd.s32 %s66, 1
    %p70 = scmp.eq.s32.totalorder %s11, 1
    %p71 = scmp.ne.s32.totalorder %s66, %s68
    %p72 = scmp.eq.s32.totalorder %s11, 0
    %p73 = por %p71, %p72
    %p74 = scmp.ne.s32.totalorder %s66, %s68
    %p75 = scmp.eq.s32.totalorder %s16, 1
    %p76 = por %p74, %p75
    %p77 = scmp.ne.s32.totalorder %s68, %s69
    %p78 = scmp.eq.s32.totalorder %s16, 0
    %p79 = por %p77, %p78
    %p80 = scmp.ne.s32.totalorder %s68, %s69
    %p81 = scmp.eq.s32.totalorder %s17, 1
    %p82 = por %p80, %p81
    %p84 = scmp.ne.s32.totalorder %s69, %s83
    %p85 = scmp.eq.s32.totalorder %s17, 0
    %p86 = por %p84, %p85
    %s88 = sadd.s32 %s87, 1
    %p91 = scmp.eq.s32.totalorder %s11, 1
    %p92 = scmp.ne.s32.totalorder %s87, %s89
    %p93 = scmp.eq.s32.totalorder %s11, 0
    %p94 = por %p92, %p93
    %p95 = scmp.ne.s32.totalorder %s87, %s89
    %p96 = scmp.eq.s32.totalorder %s16, 1
    %p97 = por %p95, %p96
    %p98 = scmp.ne.s32.totalorder %s89, %s90
    %p99 = scmp.eq.s32.totalorder %s16, 0
    %p100 = por %p98, %p99
    %p101 = scmp.ne.s32.totalorder %s89, %s90
    %p102 = scmp.eq.s32.totalorder %s17, 1
    %p103 = por %p101, %p102
    %p105 = scmp.ne.s32.totalorder %s90, %s104
    %p106 = scmp.eq.s32.totalorder %s17, 0
    %p107 = por %p105, %p106
    %s109 = sadd.s32 %s108, 1
    %p112 = scmp.eq.s32.totalorder %s11, 1
    %p113 = scmp.ne.s32.totalorder %s108, %s110
    %p114 = scmp.eq.s32.totalorder %s11, 0
    %p115 = por %p113, %p114
    %p116 = scmp.ne.s32.totalorder %s108, %s110
    %p117 = scmp.eq.s32.totalorder %s16, 1
    %p118 = por %p116, %p117
    %p119 = scmp.ne.s32.totalorder %s110, %s111
    %p120 = scmp.eq.s32.totalorder %s16, 0
    %p121 = por %p119, %p120
    %p122 = scmp.ne.s32.totalorder %s110, %s111
    %p123 = scmp.eq.s32.totalorder %s17, 1
    %p124 = por %p122, %p123
    %p126 = scmp.ne.s32.totalorder %s111, %s125
    %p127 = scmp.eq.s32.totalorder %s17, 0
    %p128 = por %p126, %p127
    %s129 = ssub.s32 %s11, %s18
    %p130 = scmp.eq.s32.totalorder %s129, 0
    %s132 = sadd.s32 %s131, 1
    %s133 = scalar_select %p130, %s131, %s132
    %p136 = pneg %p130
    %p137 = scmp.eq.s32.totalorder %s11, 1
    %p138 = por %p136, %p137
    %p139 = scmp.ne.s32.totalorder %s131, %s134
    %p140 = scmp.eq.s32.totalorder %s11, 0
    %p141 = por %p139, %p140
    %p142 = scmp.ne.s32.totalorder %s131, %s134
    %p143 = scmp.eq.s32.totalorder %s16, 1
    %p144 = por %p142, %p143
    %p145 = scmp.ne.s32.totalorder %s134, %s135
    %p146 = scmp.eq.s32.totalorder %s16, 0
    %p147 = por %p145, %p146
    %p148 = scmp.ne.s32.totalorder %s134, %s135
    %p149 = scmp.eq.s32.totalorder %s17, 1
    %p150 = por %p148, %p149
    %p152 = scmp.ne.s32.totalorder %s135, %s151
    %p153 = scmp.eq.s32.totalorder %s17, 0
    %p154 = por %p152, %p153
    %p155 = scmp.le.s32.totalorder 1, %s11
    %p156 = scmp.lt.s32.totalorder %s11, 3
    %p157 = pnand %p155, %p156
    %p158 = pneg %p157
    // Predicated region
    $region9: #{scell_forward.3} parent=5 // pred_check
      _
    $region10: #{scell_forward.3} parent=5 // pred_check_branch
      %160 = sbr.rel (%p157) target = $region12
    $region11: #{scell_forward.3} parent=5 // pred_region
      %s161 = ssub.s32 %s11, 1
      // Predicated region
      $region13: #{scell_forward.3} parent=11 // pred_check
        %p162 = pneg %p58
      $region14: #{scell_forward.3} parent=11 // pred_check_branch
        %164 = sbr.rel (%p162) target = $region16
      $region15: #{scell_forward.3} parent=11 // pred_region
        _
      $region16: #{scell_forward.3} parent=11 // pred_fallthru
        _
      // Predicated region
      $region17: #{scell_forward.3} parent=11 // pred_check
        %p165 = pneg %p79
      $region18: #{scell_forward.3} parent=11 // pred_check_branch
        %167 = sbr.rel (%p165) target = $region20
      $region19: #{scell_forward.3} parent=11 // pred_region
        _
      $region20: #{scell_forward.3} parent=11 // pred_fallthru
        _
      // Predicated region
      $region21: #{scell_forward.3} parent=11 // pred_check
        %p168 = pneg %p100
      $region22: #{scell_forward.3} parent=11 // pred_check_branch
        %170 = sbr.rel (%p168) target = $region24
      $region23: #{scell_forward.3} parent=11 // pred_region
        _
      $region24: #{scell_forward.3} parent=11 // pred_fallthru
        _
      // Predicated region
      $region25: #{scell_forward.3} parent=11 // pred_check
        %p171 = pneg %p121
      $region26: #{scell_forward.3} parent=11 // pred_check_branch
        %173 = sbr.rel (%p171) target = $region28
      $region27: #{scell_forward.3} parent=11 // pred_region
        _
      $region28: #{scell_forward.3} parent=11 // pred_fallthru
        _
    $region12: #{scell_forward.3} parent=5 // pred_fallthru
      _
    %p174 = scmp.lt.s32.totalorder %s11, 2
    // Predicated region
    $region29: #{scell_forward.3} parent=5 // pred_check
      %p175 = pneg %p174
    $region30: #{scell_forward.3} parent=5 // pred_check_branch
      %177 = sbr.rel (%p175) target = $region32
    $region31: #{scell_forward.3} parent=5 // pred_region
      // Predicated region
      $region33: #{scell_forward.3} parent=31 // pred_check
        %p178 = pneg %p31
      $region34: #{scell_forward.3} parent=31 // pred_check_branch
        %180 = sbr.rel (%p178) target = $region36
      $region35: #{scell_forward.3} parent=31 // pred_region
        %p181 = scmp.lt.s32.totalorder %s11, 1
        %s182 = scalar_select %p181, %s11, 1
        %s183 = smul.addr %s182, 2
        %s184 = smul.addr %s183, 2
        %s185 = scalar_lea.vmem %s0, %s184
      $region36: #{scell_forward.3} parent=31 // pred_fallthru
        _
    $region32: #{scell_forward.3} parent=5 // pred_fallthru
      _
    %p186 = scmp.le.s32.totalorder 1, %s11
    %p187 = scmp.lt.s32.totalorder %s11, 3
    %p188 = pnand %p186, %p187
    %p189 = pneg %p188
    // Predicated region
    $region37: #{scell_forward.3} parent=5 // pred_check
      _
    $region38: #{scell_forward.3} parent=5 // pred_check_branch
      %191 = sbr.rel (%p188) target = $region40
    $region39: #{scell_forward.3} parent=5 // pred_region
      %s192 = ssub.s32 %s11, 1
      %p193 = scmp.lt.s32.totalorder %s16, 1
      %s194 = scalar_select %p193, %s16, 1
      %s195 = smul.addr %s194, 2
      %s196 = smul.addr %s195, 2
      %s197 = scalar_lea.vmem %s0, %s196
      %p198 = pneg %p37
      %p199 = pneg %p34
      %p200 = pneg %p58
      %p201 = pneg %p55
      %p202 = pneg %p79
      %p203 = pneg %p76
      %p204 = pneg %p100
      %p205 = pneg %p97
      %p206 = pneg %p121
      %p207 = pneg %p118
      %p208 = pneg %p147
      %p209 = pneg %p144
      %p210 = scmp.lt.s32.totalorder %s16, 1
      %s211 = scalar_select %p210, %s16, 1
      %s212 = smul.addr %s211, 2
      %s213 = smul.addr %s212, 2
      %s214 = scalar_lea.vmem %s5, %s213
      %p215 = scmp.lt.s32.totalorder %s16, 1
      %s216 = scalar_select %p215, %s16, 1
      %s217 = smul.addr %s216, 2
      %s218 = smul.addr %s217, 2
      %s219 = scalar_lea.vmem %s0, %s218
      %p220 = scmp.lt.s32.totalorder %s16, 1
      %s221 = scalar_select %p220, %s16, 1
      %s222 = smul.addr %s221, 2
      %s223 = smul.addr %s222, 2
      %s224 = scalar_lea.vmem %s5, %s223
      %v225 = vld [vmem:[%s219] sm:$0xf]
      %v228 = vunpack.c.l.s4 1983009808
      %v229 = vunpack.c.0.s8 %v228
      %v230 = vlaneseq
      %v231 = vshrl.u32 %v230, 7
      %v232 = vsub.s32 %v229, %v231
      %v233 = vrot.slane %v225, %v232
      %v234 = vcombine.high %v233, %v233
      %235 = vrot.lane.b32.xlu0 %v233, 17
      %v236 = vpop.permute.xlu0 %235
      %237 = vrot.lane.b32.xlu0 %v234, 17
      %v238 = vpop.permute.xlu0 %237
      %vm239 = vcmask 138240
      %v240 = vsel %vm239, %v236, %v238
      %v243 = vsel %vm239, 0.0, %v236
      %v244 = vld [vmem:[%s1] sm:$0x3]
      %v246 = vlaneseq
      %v247 = vshrl.u32 %v246, 7
      %v248 = vsub.s32 0, %v247
      %v249 = vrot.slane %v244, %v248
      %v250 = vlaneseq
      %v251 = vshrl.u32 %v250, 7
      %v252 = vsub.s32 1, %v251
      %v253 = vrot.slane %v244, %v252
      %v256 = vmul.f32 %v243, %v249
      %v257 = vmul.f32 %v240, %v253
      %v258 = vld [vmem:[%s2] sm:$0xff]
      %v259 = vld [vmem:[%s2 + $0x8] sm:$0xff]
      %v260 = vld [vmem:[%s2 + $0x10] sm:$0xff]
      %v261 = vld [vmem:[%s2 + $0x18] sm:$0xff]
      %263 = vset.pattern.permute.xlu0 0
      %264 = vperm.xlu0 %263, %v258
      %v265 = vpop.permute.xlu0 %264
      %268 = vset.pattern.permute.xlu0 0
      %269 = vperm.xlu0 %268, %v259
      %v270 = vpop.permute.xlu0 %269
      %273 = vset.pattern.permute.xlu0 0
      %274 = vperm.xlu0 %273, %v260
      %v275 = vpop.permute.xlu0 %274
      %278 = vset.pattern.permute.xlu0 0
      %279 = vperm.xlu0 %278, %v261
      %v280 = vpop.permute.xlu0 %279
      %v282 = vlaneseq
      %v283 = vshrl.u32 %v282, 7
      %v284 = vsub.s32 0, %v283
      %v285 = vrot.slane %v256, %v284
      %v286 = vlaneseq
      %v287 = vshrl.u32 %v286, 7
      %v288 = vsub.s32 0, %v287
      %v289 = vrot.slane %v257, %v288
      %v290 = vmul.f32 %v265, %v285
      %v291 = vmul.f32 %v265, %v289
      %v292 = vmul.f32 %v270, %v285
      %v293 = vmul.f32 %v270, %v289
      %v294 = vmul.f32 %v275, %v285
      %v295 = vmul.f32 %v275, %v289
      %v296 = vmul.f32 %v280, %v285
      %v297 = vmul.f32 %v280, %v289
      %v298 = vadd.f32 %v290, 0.0
      %v299 = vadd.f32 %v291, 0.0
      %v300 = vadd.f32 %v292, 0.0
      %v301 = vadd.f32 %v293, 0.0
      %v302 = vadd.f32 %v294, 0.0
      %v303 = vadd.f32 %v295, 0.0
      %v304 = vadd.f32 %v296, 0.0
      %v305 = vadd.f32 %v297, 0.0
      %306 = vset.pattern.permute.xlu0 1
      %307 = vperm.xlu0 %306, %v258
      %v308 = vpop.permute.xlu0 %307
      %310 = vset.pattern.permute.xlu0 1
      %311 = vperm.xlu0 %310, %v259
      %v312 = vpop.permute.xlu0 %311
      %314 = vset.pattern.permute.xlu0 1
      %315 = vperm.xlu0 %314, %v260
      %v316 = vpop.permute.xlu0 %315
      %318 = vset.pattern.permute.xlu0 1
      %319 = vperm.xlu0 %318, %v261
      %v320 = vpop.permute.xlu0 %319
      %v322 = vlaneseq
      %v323 = vshrl.u32 %v322, 7
      %v324 = vsub.s32 1, %v323
      %v325 = vrot.slane %v256, %v324
      %v326 = vlaneseq
      %v327 = vshrl.u32 %v326, 7
      %v328 = vsub.s32 1, %v327
      %v329 = vrot.slane %v257, %v328
      %v330 = vmul.f32 %v308, %v325
      %v331 = vmul.f32 %v308, %v329
      %v332 = vmul.f32 %v312, %v325
      %v333 = vmul.f32 %v312, %v329
      %v334 = vmul.f32 %v316, %v325
      %v335 = vmul.f32 %v316, %v329
      %v336 = vmul.f32 %v320, %v325
      %v337 = vmul.f32 %v320, %v329
      %v338 = vadd.f32 %v298, %v330
      %v339 = vadd.f32 %v299, %v331
      %v340 = vadd.f32 %v300, %v332
      %v341 = vadd.f32 %v301, %v333
      %v342 = vadd.f32 %v302, %v334
      %v343 = vadd.f32 %v303, %v335
      %v344 = vadd.f32 %v304, %v336
      %v345 = vadd.f32 %v305, %v337
      %346 = vrot.lane.b32.xlu0 %v233, 16
      %v347 = vpop.permute.xlu0 %346
      %348 = vrot.lane.b32.xlu0 %v234, 16
      %v349 = vpop.permute.xlu0 %348
      %vm350 = vcmask 130048
      %v351 = vsel %vm350, %v347, %v349
      %v354 = vsel %vm350, 0.0, %v347
      %s355 = scalar_lea.vmem %s1, 2
      %v356 = vld [vmem:[%s355] sm:$0x3]
      %v358 = vlaneseq
      %v359 = vshrl.u32 %v358, 7
      %v360 = vsub.s32 0, %v359
      %v361 = vrot.slane %v356, %v360
      %v362 = vlaneseq
      %v363 = vshrl.u32 %v362, 7
      %v364 = vsub.s32 1, %v363
      %v365 = vrot.slane %v356, %v364
      %v368 = vmul.f32 %v354, %v361
      %v369 = vmul.f32 %v351, %v365
      %s370 = scalar_lea.vmem %s2, 32
      %v371 = vld [vmem:[%s370] sm:$0xff]
      %v372 = vld [vmem:[%s370 + $0x8] sm:$0xff]
      %v373 = vld [vmem:[%s370 + $0x10] sm:$0xff]
      %v374 = vld [vmem:[%s370 + $0x18] sm:$0xff]
      %376 = vset.pattern.permute.xlu0 0
      %377 = vperm.xlu0 %376, %v371
      %v378 = vpop.permute.xlu0 %377
      %381 = vset.pattern.permute.xlu0 0
      %382 = vperm.xlu0 %381, %v372
      %v383 = vpop.permute.xlu0 %382
      %386 = vset.pattern.permute.xlu0 0
      %387 = vperm.xlu0 %386, %v373
      %v388 = vpop.permute.xlu0 %387
      %391 = vset.pattern.permute.xlu0 0
      %392 = vperm.xlu0 %391, %v374
      %v393 = vpop.permute.xlu0 %392
      %v395 = vlaneseq
      %v396 = vshrl.u32 %v395, 7
      %v397 = vsub.s32 0, %v396
      %v398 = vrot.slane %v368, %v397
      %v399 = vlaneseq
      %v400 = vshrl.u32 %v399, 7
      %v401 = vsub.s32 0, %v400
      %v402 = vrot.slane %v369, %v401
      %v403 = vmul.f32 %v378, %v398
      %v404 = vmul.f32 %v378, %v402
      %v405 = vmul.f32 %v383, %v398
      %v406 = vmul.f32 %v383, %v402
      %v407 = vmul.f32 %v388, %v398
      %v408 = vmul.f32 %v388, %v402
      %v409 = vmul.f32 %v393, %v398
      %v410 = vmul.f32 %v393, %v402
      %v411 = vadd.f32 %v338, %v403
      %v412 = vadd.f32 %v339, %v404
      %v413 = vadd.f32 %v340, %v405
      %v414 = vadd.f32 %v341, %v406
      %v415 = vadd.f32 %v342, %v407
      %v416 = vadd.f32 %v343, %v408
      %v417 = vadd.f32 %v344, %v409
      %v418 = vadd.f32 %v345, %v410
      %419 = vset.pattern.permute.xlu0 1
      %420 = vperm.xlu0 %419, %v371
      %v421 = vpop.permute.xlu0 %420
      %423 = vset.pattern.permute.xlu0 1
      %424 = vperm.xlu0 %423, %v372
      %v425 = vpop.permute.xlu0 %424
      %427 = vset.pattern.permute.xlu0 1
      %428 = vperm.xlu0 %427, %v373
      %v429 = vpop.permute.xlu0 %428
      %431 = vset.pattern.permute.xlu0 1
      %432 = vperm.xlu0 %431, %v374
      %v433 = vpop.permute.xlu0 %432
      %v435 = vlaneseq
      %v436 = vshrl.u32 %v435, 7
      %v437 = vsub.s32 1, %v436
      %v438 = vrot.slane %v368, %v437
      %v439 = vlaneseq
      %v440 = vshrl.u32 %v439, 7
      %v441 = vsub.s32 1, %v440
      %v442 = vrot.slane %v369, %v441
      %v443 = vmul.f32 %v421, %v438
      %v444 = vmul.f32 %v421, %v442
      %v445 = vmul.f32 %v425, %v438
      %v446 = vmul.f32 %v425, %v442
      %v447 = vmul.f32 %v429, %v438
      %v448 = vmul.f32 %v429, %v442
      %v449 = vmul.f32 %v433, %v438
      %v450 = vmul.f32 %v433, %v442
      %v451 = vadd.f32 %v411, %v443
      %v452 = vadd.f32 %v412, %v444
      %v453 = vadd.f32 %v413, %v445
      %v454 = vadd.f32 %v414, %v446
      %v455 = vadd.f32 %v415, %v447
      %v456 = vadd.f32 %v416, %v448
      %v457 = vadd.f32 %v417, %v449
      %v458 = vadd.f32 %v418, %v450
      %459 = vrot.lane.b32.xlu0 %v233, 15
      %v460 = vpop.permute.xlu0 %459
      %461 = vrot.lane.b32.xlu0 %v234, 15
      %v462 = vpop.permute.xlu0 %461
      %vm463 = vcmask 121856
      %v464 = vsel %vm463, %v460, %v462
      %v467 = vsel %vm463, 0.0, %v460
      %s468 = scalar_lea.vmem %s1, 4
      %v469 = vld [vmem:[%s468] sm:$0x3]
      %v471 = vlaneseq
      %v472 = vshrl.u32 %v471, 7
      %v473 = vsub.s32 0, %v472
      %v474 = vrot.slane %v469, %v473
      %v475 = vlaneseq
      %v476 = vshrl.u32 %v475, 7
      %v477 = vsub.s32 1, %v476
      %v478 = vrot.slane %v469, %v477
      %v481 = vmul.f32 %v467, %v474
      %v482 = vmul.f32 %v464, %v478
      %s483 = scalar_lea.vmem %s2, 64
      %v484 = vld [vmem:[%s483] sm:$0xff]
      %v485 = vld [vmem:[%s483 + $0x8] sm:$0xff]
      %v486 = vld [vmem:[%s483 + $0x10] sm:$0xff]
      %v487 = vld [vmem:[%s483 + $0x18] sm:$0xff]
      %489 = vset.pattern.permute.xlu0 0
      %490 = vperm.xlu0 %489, %v484
      %v491 = vpop.permute.xlu0 %490
      %494 = vset.pattern.permute.xlu0 0
      %495 = vperm.xlu0 %494, %v485
      %v496 = vpop.permute.xlu0 %495
      %499 = vset.pattern.permute.xlu0 0
      %500 = vperm.xlu0 %499, %v486
      %v501 = vpop.permute.xlu0 %500
      %504 = vset.pattern.permute.xlu0 0
      %505 = vperm.xlu0 %504, %v487
      %v506 = vpop.permute.xlu0 %505
      %v508 = vlaneseq
      %v509 = vshrl.u32 %v508, 7
      %v510 = vsub.s32 0, %v509
      %v511 = vrot.slane %v481, %v510
      %v512 = vlaneseq
      %v513 = vshrl.u32 %v512, 7
      %v514 = vsub.s32 0, %v513
      %v515 = vrot.slane %v482, %v514
      %v516 = vmul.f32 %v491, %v511
      %v517 = vmul.f32 %v491, %v515
      %v518 = vmul.f32 %v496, %v511
      %v519 = vmul.f32 %v496, %v515
      %v520 = vmul.f32 %v501, %v511
      %v521 = vmul.f32 %v501, %v515
      %v522 = vmul.f32 %v506, %v511
      %v523 = vmul.f32 %v506, %v515
      %v524 = vadd.f32 %v451, %v516
      %v525 = vadd.f32 %v452, %v517
      %v526 = vadd.f32 %v453, %v518
      %v527 = vadd.f32 %v454, %v519
      %v528 = vadd.f32 %v455, %v520
      %v529 = vadd.f32 %v456, %v521
      %v530 = vadd.f32 %v457, %v522
      %v531 = vadd.f32 %v458, %v523
      %532 = vset.pattern.permute.xlu0 1
      %533 = vperm.xlu0 %532, %v484
      %v534 = vpop.permute.xlu0 %533
      %536 = vset.pattern.permute.xlu0 1
      %537 = vperm.xlu0 %536, %v485
      %v538 = vpop.permute.xlu0 %537
      %540 = vset.pattern.permute.xlu0 1
      %541 = vperm.xlu0 %540, %v486
      %v542 = vpop.permute.xlu0 %541
      %544 = vset.pattern.permute.xlu0 1
      %545 = vperm.xlu0 %544, %v487
      %v546 = vpop.permute.xlu0 %545
      %v548 = vlaneseq
      %v549 = vshrl.u32 %v548, 7
      %v550 = vsub.s32 1, %v549
      %v551 = vrot.slane %v481, %v550
      %v552 = vlaneseq
      %v553 = vshrl.u32 %v552, 7
      %v554 = vsub.s32 1, %v553
      %v555 = vrot.slane %v482, %v554
      %v556 = vmul.f32 %v534, %v551
      %v557 = vmul.f32 %v534, %v555
      %v558 = vmul.f32 %v538, %v551
      %v559 = vmul.f32 %v538, %v555
      %v560 = vmul.f32 %v542, %v551
      %v561 = vmul.f32 %v542, %v555
      %v562 = vmul.f32 %v546, %v551
      %v563 = vmul.f32 %v546, %v555
      %v564 = vadd.f32 %v524, %v556
      %v565 = vadd.f32 %v525, %v557
      %v566 = vadd.f32 %v526, %v558
      %v567 = vadd.f32 %v527, %v559
      %v568 = vadd.f32 %v528, %v560
      %v569 = vadd.f32 %v529, %v561
      %v570 = vadd.f32 %v530, %v562
      %v571 = vadd.f32 %v531, %v563
      %572 = vrot.lane.b32.xlu0 %v233, 1
      %v573 = vpop.permute.xlu0 %572
      %574 = vrot.lane.b32.xlu0 %v234, 1
      %v575 = vpop.permute.xlu0 %574
      %vm576 = vcmask 7168
      %v577 = vsel %vm576, %v573, %v575
      %v580 = vsel %vm576, 0.0, %v573
      %s581 = scalar_lea.vmem %s1, 6
      %v582 = vld [vmem:[%s581] sm:$0x3]
      %v584 = vlaneseq
      %v585 = vshrl.u32 %v584, 7
      %v586 = vsub.s32 0, %v585
      %v587 = vrot.slane %v582, %v586
      %v588 = vlaneseq
      %v589 = vshrl.u32 %v588, 7
      %v590 = vsub.s32 1, %v589
      %v591 = vrot.slane %v582, %v590
      %v594 = vmul.f32 %v580, %v587
      %v595 = vmul.f32 %v577, %v591
      %s596 = scalar_lea.vmem %s2, 96
      %v597 = vld [vmem:[%s596] sm:$0xff]
      %v598 = vld [vmem:[%s596 + $0x8] sm:$0xff]
      %v599 = vld [vmem:[%s596 + $0x10] sm:$0xff]
      %v600 = vld [vmem:[%s596 + $0x18] sm:$0xff]
      %602 = vset.pattern.permute.xlu0 0
      %603 = vperm.xlu0 %602, %v597
      %v604 = vpop.permute.xlu0 %603
      %607 = vset.pattern.permute.xlu0 0
      %608 = vperm.xlu0 %607, %v598
      %v609 = vpop.permute.xlu0 %608
      %612 = vset.pattern.permute.xlu0 0
      %613 = vperm.xlu0 %612, %v599
      %v614 = vpop.permute.xlu0 %613
      %617 = vset.pattern.permute.xlu0 0
      %618 = vperm.xlu0 %617, %v600
      %v619 = vpop.permute.xlu0 %618
      %v621 = vlaneseq
      %v622 = vshrl.u32 %v621, 7
      %v623 = vsub.s32 0, %v622
      %v624 = vrot.slane %v594, %v623
      %v625 = vlaneseq
      %v626 = vshrl.u32 %v625, 7
      %v627 = vsub.s32 0, %v626
      %v628 = vrot.slane %v595, %v627
      %v629 = vmul.f32 %v604, %v624
      %v630 = vmul.f32 %v604, %v628
      %v631 = vmul.f32 %v609, %v624
      %v632 = vmul.f32 %v609, %v628
      %v633 = vmul.f32 %v614, %v624
      %v634 = vmul.f32 %v614, %v628
      %v635 = vmul.f32 %v619, %v624
      %v636 = vmul.f32 %v619, %v628
      %v637 = vadd.f32 %v564, %v629
      %v638 = vadd.f32 %v565, %v630
      %v639 = vadd.f32 %v566, %v631
      %v640 = vadd.f32 %v567, %v632
      %v641 = vadd.f32 %v568, %v633
      %v642 = vadd.f32 %v569, %v634
      %v643 = vadd.f32 %v570, %v635
      %v644 = vadd.f32 %v571, %v636
      %645 = vset.pattern.permute.xlu0 1
      %646 = vperm.xlu0 %645, %v597
      %v647 = vpop.permute.xlu0 %646
      %649 = vset.pattern.permute.xlu0 1
      %650 = vperm.xlu0 %649, %v598
      %v651 = vpop.permute.xlu0 %650
      %653 = vset.pattern.permute.xlu0 1
      %654 = vperm.xlu0 %653, %v599
      %v655 = vpop.permute.xlu0 %654
      %657 = vset.pattern.permute.xlu0 1
      %658 = vperm.xlu0 %657, %v600
      %v659 = vpop.permute.xlu0 %658
      %v661 = vlaneseq
      %v662 = vshrl.u32 %v661, 7
      %v663 = vsub.s32 1, %v662
      %v664 = vrot.slane %v594, %v663
      %v665 = vlaneseq
      %v666 = vshrl.u32 %v665, 7
      %v667 = vsub.s32 1, %v666
      %v668 = vrot.slane %v595, %v667
      %v669 = vmul.f32 %v647, %v664
      %v670 = vmul.f32 %v647, %v668
      %v671 = vmul.f32 %v651, %v664
      %v672 = vmul.f32 %v651, %v668
      %v673 = vmul.f32 %v655, %v664
      %v674 = vmul.f32 %v655, %v668
      %v675 = vmul.f32 %v659, %v664
      %v676 = vmul.f32 %v659, %v668
      %v677 = vadd.f32 %v637, %v669
      %v678 = vadd.f32 %v638, %v670
      %v679 = vadd.f32 %v639, %v671
      %v680 = vadd.f32 %v640, %v672
      %v681 = vadd.f32 %v641, %v673
      %v682 = vadd.f32 %v642, %v674
      %v683 = vadd.f32 %v643, %v675
      %v684 = vadd.f32 %v644, %v676
      %s685 = scalar_lea.vmem %s2, 128
      %v686 = vld [vmem:[%s685] sm:$0xff]
      %v687 = vld [vmem:[%s685 + $0x8] sm:$0xff]
      %v688 = vld [vmem:[%s685 + $0x10] sm:$0xff]
      %v689 = vld [vmem:[%s685 + $0x18] sm:$0xff]
      %691 = vset.pattern.permute.xlu0 0
      %692 = vperm.xlu0 %691, %v686
      %v693 = vpop.permute.xlu0 %692
      %696 = vset.pattern.permute.xlu0 0
      %697 = vperm.xlu0 %696, %v687
      %v698 = vpop.permute.xlu0 %697
      %701 = vset.pattern.permute.xlu0 0
      %702 = vperm.xlu0 %701, %v688
      %v703 = vpop.permute.xlu0 %702
      %706 = vset.pattern.permute.xlu0 0
      %707 = vperm.xlu0 %706, %v689
      %v708 = vpop.permute.xlu0 %707
      %v710 = vlaneseq
      %v711 = vshrl.u32 %v710, 7
      %v712 = vsub.s32 0, %v711
      %v713 = vrot.slane %v225, %v712
      %v714 = vlaneseq
      %v715 = vshrl.u32 %v714, 7
      %v716 = vsub.s32 2, %v715
      %v717 = vrot.slane %v225, %v716
      %v720 = vlaneseq
      %v721 = vshrl.u32 %v720, 7
      %v722 = vsub.s32 0, %v721
      %v723 = vrot.slane %v713, %v722
      %v724 = vlaneseq
      %v725 = vshrl.u32 %v724, 7
      %v726 = vsub.s32 0, %v725
      %v727 = vrot.slane %v717, %v726
      %v728 = vmul.f32 %v693, %v723
      %v729 = vmul.f32 %v693, %v727
      %v730 = vmul.f32 %v698, %v723
      %v731 = vmul.f32 %v698, %v727
      %v732 = vmul.f32 %v703, %v723
      %v733 = vmul.f32 %v703, %v727
      %v734 = vmul.f32 %v708, %v723
      %v735 = vmul.f32 %v708, %v727
      %v736 = vadd.f32 %v677, %v728
      %v737 = vadd.f32 %v678, %v729
      %v738 = vadd.f32 %v679, %v730
      %v739 = vadd.f32 %v680, %v731
      %v740 = vadd.f32 %v681, %v732
      %v741 = vadd.f32 %v682, %v733
      %v742 = vadd.f32 %v683, %v734
      %v743 = vadd.f32 %v684, %v735
      %744 = vset.pattern.permute.xlu0 1
      %745 = vperm.xlu0 %744, %v686
      %v746 = vpop.permute.xlu0 %745
      %748 = vset.pattern.permute.xlu0 1
      %749 = vperm.xlu0 %748, %v687
      %v750 = vpop.permute.xlu0 %749
      %752 = vset.pattern.permute.xlu0 1
      %753 = vperm.xlu0 %752, %v688
      %v754 = vpop.permute.xlu0 %753
      %756 = vset.pattern.permute.xlu0 1
      %757 = vperm.xlu0 %756, %v689
      %v758 = vpop.permute.xlu0 %757
      %v760 = vlaneseq
      %v761 = vshrl.u32 %v760, 7
      %v762 = vsub.s32 1, %v761
      %v763 = vrot.slane %v225, %v762
      %v764 = vlaneseq
      %v765 = vshrl.u32 %v764, 7
      %v766 = vsub.s32 3, %v765
      %v767 = vrot.slane %v225, %v766
      %v770 = vlaneseq
      %v771 = vshrl.u32 %v770, 7
      %v772 = vsub.s32 1, %v771
      %v773 = vrot.slane %v763, %v772
      %v774 = vlaneseq
      %v775 = vshrl.u32 %v774, 7
      %v776 = vsub.s32 1, %v775
      %v777 = vrot.slane %v767, %v776
      %v778 = vmul.f32 %v746, %v773
      %v779 = vmul.f32 %v746, %v777
      %v780 = vmul.f32 %v750, %v773
      %v781 = vmul.f32 %v750, %v777
      %v782 = vmul.f32 %v754, %v773
      %v783 = vmul.f32 %v754, %v777
      %v784 = vmul.f32 %v758, %v773
      %v785 = vmul.f32 %v758, %v777
      %v786 = vadd.f32 %v736, %v778
      %v787 = vadd.f32 %v737, %v779
      %v788 = vadd.f32 %v738, %v780
      %v789 = vadd.f32 %v739, %v781
      %v790 = vadd.f32 %v740, %v782
      %v791 = vadd.f32 %v741, %v783
      %v792 = vadd.f32 %v742, %v784
      %v793 = vadd.f32 %v743, %v785
      %794 = vrot.lane.b32.xlu0 %v233, 127
      %v795 = vpop.permute.xlu0 %794
      %796 = vrot.lane.b32.xlu0 %v234, 127
      %v797 = vpop.permute.xlu0 %796
      %vm798 = vcmask 1039360
      %v799 = vsel %vm798, %v795, %v797
      %v802 = vsel %vm798, %v797, 0.0
      %s803 = scalar_lea.vmem %s1, 10
      %v804 = vld [vmem:[%s803] sm:$0x3]
      %v806 = vlaneseq
      %v807 = vshrl.u32 %v806, 7
      %v808 = vsub.s32 0, %v807
      %v809 = vrot.slane %v804, %v808
      %v810 = vlaneseq
      %v811 = vshrl.u32 %v810, 7
      %v812 = vsub.s32 1, %v811
      %v813 = vrot.slane %v804, %v812
      %v816 = vmul.f32 %v799, %v809
      %v817 = vmul.f32 %v802, %v813
      %s818 = scalar_lea.vmem %s2, 160
      %v819 = vld [vmem:[%s818] sm:$0xff]
      %v820 = vld [vmem:[%s818 + $0x8] sm:$0xff]
      %v821 = vld [vmem:[%s818 + $0x10] sm:$0xff]
      %v822 = vld [vmem:[%s818 + $0x18] sm:$0xff]
      %824 = vset.pattern.permute.xlu0 0
      %825 = vperm.xlu0 %824, %v819
      %v826 = vpop.permute.xlu0 %825
      %829 = vset.pattern.permute.xlu0 0
      %830 = vperm.xlu0 %829, %v820
      %v831 = vpop.permute.xlu0 %830
      %834 = vset.pattern.permute.xlu0 0
      %835 = vperm.xlu0 %834, %v821
      %v836 = vpop.permute.xlu0 %835
      %839 = vset.pattern.permute.xlu0 0
      %840 = vperm.xlu0 %839, %v822
      %v841 = vpop.permute.xlu0 %840
      %v843 = vlaneseq
      %v844 = vshrl.u32 %v843, 7
      %v845 = vsub.s32 0, %v844
      %v846 = vrot.slane %v816, %v845
      %v847 = vlaneseq
      %v848 = vshrl.u32 %v847, 7
      %v849 = vsub.s32 0, %v848
      %v850 = vrot.slane %v817, %v849
      %v851 = vmul.f32 %v826, %v846
      %v852 = vmul.f32 %v826, %v850
      %v853 = vmul.f32 %v831, %v846
      %v854 = vmul.f32 %v831, %v850
      %v855 = vmul.f32 %v836, %v846
      %v856 = vmul.f32 %v836, %v850
      %v857 = vmul.f32 %v841, %v846
      %v858 = vmul.f32 %v841, %v850
      %v859 = vadd.f32 %v786, %v851
      %v860 = vadd.f32 %v787, %v852
      %v861 = vadd.f32 %v788, %v853
      %v862 = vadd.f32 %v789, %v854
      %v863 = vadd.f32 %v790, %v855
      %v864 = vadd.f32 %v791, %v856
      %v865 = vadd.f32 %v792, %v857
      %v866 = vadd.f32 %v793, %v858
      %867 = vset.pattern.permute.xlu0 1
      %868 = vperm.xlu0 %867, %v819
      %v869 = vpop.permute.xlu0 %868
      %871 = vset.pattern.permute.xlu0 1
      %872 = vperm.xlu0 %871, %v820
      %v873 = vpop.permute.xlu0 %872
      %875 = vset.pattern.permute.xlu0 1
      %876 = vperm.xlu0 %875, %v821
      %v877 = vpop.permute.xlu0 %876
      %879 = vset.pattern.permute.xlu0 1
      %880 = vperm.xlu0 %879, %v822
      %v881 = vpop.permute.xlu0 %880
      %v883 = vlaneseq
      %v884 = vshrl.u32 %v883, 7
      %v885 = vsub.s32 1, %v884
      %v886 = vrot.slane %v816, %v885
      %v887 = vlaneseq
      %v888 = vshrl.u32 %v887, 7
      %v889 = vsub.s32 1, %v888
      %v890 = vrot.slane %v817, %v889
      %v891 = vmul.f32 %v869, %v886
      %v892 = vmul.f32 %v869, %v890
      %v893 = vmul.f32 %v873, %v886
      %v894 = vmul.f32 %v873, %v890
      %v895 = vmul.f32 %v877, %v886
      %v896 = vmul.f32 %v877, %v890
      %v897 = vmul.f32 %v881, %v886
      %v898 = vmul.f32 %v881, %v890
      %v899 = vadd.f32 %v859, %v891
      %v900 = vadd.f32 %v860, %v892
      %v901 = vadd.f32 %v861, %v893
      %v902 = vadd.f32 %v862, %v894
      %v903 = vadd.f32 %v863, %v895
      %v904 = vadd.f32 %v864, %v896
      %v905 = vadd.f32 %v865, %v897
      %v906 = vadd.f32 %v866, %v898
      %907 = vrot.lane.b32.xlu0 %v233, 113
      %v908 = vpop.permute.xlu0 %907
      %909 = vrot.lane.b32.xlu0 %v234, 113
      %v910 = vpop.permute.xlu0 %909
      %vm911 = vcmask 924672
      %v912 = vsel %vm911, %v908, %v910
      %v915 = vsel %vm911, %v910, 0.0
      %s916 = scalar_lea.vmem %s1, 12
      %v917 = vld [vmem:[%s916] sm:$0x3]
      %v919 = vlaneseq
      %v920 = vshrl.u32 %v919, 7
      %v921 = vsub.s32 0, %v920
      %v922 = vrot.slane %v917, %v921
      %v923 = vlaneseq
      %v924 = vshrl.u32 %v923, 7
      %v925 = vsub.s32 1, %v924
      %v926 = vrot.slane %v917, %v925
      %v929 = vmul.f32 %v912, %v922
      %v930 = vmul.f32 %v915, %v926
      %s931 = scalar_lea.vmem %s2, 192
      %v932 = vld [vmem:[%s931] sm:$0xff]
      %v933 = vld [vmem:[%s931 + $0x8] sm:$0xff]
      %v934 = vld [vmem:[%s931 + $0x10] sm:$0xff]
      %v935 = vld [vmem:[%s931 + $0x18] sm:$0xff]
      %937 = vset.pattern.permute.xlu0 0
      %938 = vperm.xlu0 %937, %v932
      %v939 = vpop.permute.xlu0 %938
      %942 = vset.pattern.permute.xlu0 0
      %943 = vperm.xlu0 %942, %v933
      %v944 = vpop.permute.xlu0 %943
      %947 = vset.pattern.permute.xlu0 0
      %948 = vperm.xlu0 %947, %v934
      %v949 = vpop.permute.xlu0 %948
      %952 = vset.pattern.permute.xlu0 0
      %953 = vperm.xlu0 %952, %v935
      %v954 = vpop.permute.xlu0 %953
      %v956 = vlaneseq
      %v957 = vshrl.u32 %v956, 7
      %v958 = vsub.s32 0, %v957
      %v959 = vrot.slane %v929, %v958
      %v960 = vlaneseq
      %v961 = vshrl.u32 %v960, 7
      %v962 = vsub.s32 0, %v961
      %v963 = vrot.slane %v930, %v962
      %v964 = vmul.f32 %v939, %v959
      %v965 = vmul.f32 %v939, %v963
      %v966 = vmul.f32 %v944, %v959
      %v967 = vmul.f32 %v944, %v963
      %v968 = vmul.f32 %v949, %v959
      %v969 = vmul.f32 %v949, %v963
      %v970 = vmul.f32 %v954, %v959
      %v971 = vmul.f32 %v954, %v963
      %v972 = vadd.f32 %v899, %v964
      %v973 = vadd.f32 %v900, %v965
      %v974 = vadd.f32 %v901, %v966
      %v975 = vadd.f32 %v902, %v967
      %v976 = vadd.f32 %v903, %v968
      %v977 = vadd.f32 %v904, %v969
      %v978 = vadd.f32 %v905, %v970
      %v979 = vadd.f32 %v906, %v971
      %980 = vset.pattern.permute.xlu0 1
      %981 = vperm.xlu0 %980, %v932
      %v982 = vpop.permute.xlu0 %981
      %984 = vset.pattern.permute.xlu0 1
      %985 = vperm.xlu0 %984, %v933
      %v986 = vpop.permute.xlu0 %985
      %988 = vset.pattern.permute.xlu0 1
      %989 = vperm.xlu0 %988, %v934
      %v990 = vpop.permute.xlu0 %989
      %992 = vset.pattern.permute.xlu0 1
      %993 = vperm.xlu0 %992, %v935
      %v994 = vpop.permute.xlu0 %993
      %v996 = vlaneseq
      %v997 = vshrl.u32 %v996, 7
      %v998 = vsub.s32 1, %v997
      %v999 = vrot.slane %v929, %v998
      %v1000 = vlaneseq
      %v1001 = vshrl.u32 %v1000, 7
      %v1002 = vsub.s32 1, %v1001
      %v1003 = vrot.slane %v930, %v1002
      %v1004 = vmul.f32 %v982, %v999
      %v1005 = vmul.f32 %v982, %v1003
      %v1006 = vmul.f32 %v986, %v999
      %v1007 = vmul.f32 %v986, %v1003
      %v1008 = vmul.f32 %v990, %v999
      %v1009 = vmul.f32 %v990, %v1003
      %v1010 = vmul.f32 %v994, %v999
      %v1011 = vmul.f32 %v994, %v1003
      %v1012 = vadd.f32 %v972, %v1004
      %v1013 = vadd.f32 %v973, %v1005
      %v1014 = vadd.f32 %v974, %v1006
      %v1015 = vadd.f32 %v975, %v1007
      %v1016 = vadd.f32 %v976, %v1008
      %v1017 = vadd.f32 %v977, %v1009
      %v1018 = vadd.f32 %v978, %v1010
      %v1019 = vadd.f32 %v979, %v1011
      %1020 = vrot.lane.b32.xlu0 %v233, 112
      %v1021 = vpop.permute.xlu0 %1020
      %1022 = vrot.lane.b32.xlu0 %v234, 112
      %v1023 = vpop.permute.xlu0 %1022
      %vm1024 = vcmask 916480
      %v1025 = vsel %vm1024, %v1021, %v1023
      %v1028 = vsel %vm1024, %v1023, 0.0
      %s1029 = scalar_lea.vmem %s1, 14
      %v1030 = vld [vmem:[%s1029] sm:$0x3]
      %v1032 = vlaneseq
      %v1033 = vshrl.u32 %v1032, 7
      %v1034 = vsub.s32 0, %v1033
      %v1035 = vrot.slane %v1030, %v1034
      %v1036 = vlaneseq
      %v1037 = vshrl.u32 %v1036, 7
      %v1038 = vsub.s32 1, %v1037
      %v1039 = vrot.slane %v1030, %v1038
      %v1042 = vmul.f32 %v1025, %v1035
      %v1043 = vmul.f32 %v1028, %v1039
      %s1044 = scalar_lea.vmem %s2, 224
      %v1045 = vld [vmem:[%s1044] sm:$0xff]
      %v1046 = vld [vmem:[%s1044 + $0x8] sm:$0xff]
      %v1047 = vld [vmem:[%s1044 + $0x10] sm:$0xff]
      %v1048 = vld [vmem:[%s1044 + $0x18] sm:$0xff]
      %1050 = vset.pattern.permute.xlu0 0
      %1051 = vperm.xlu0 %1050, %v1045
      %v1052 = vpop.permute.xlu0 %1051
      %1055 = vset.pattern.permute.xlu0 0
      %1056 = vperm.xlu0 %1055, %v1046
      %v1057 = vpop.permute.xlu0 %1056
      %1060 = vset.pattern.permute.xlu0 0
      %1061 = vperm.xlu0 %1060, %v1047
      %v1062 = vpop.permute.xlu0 %1061
      %1065 = vset.pattern.permute.xlu0 0
      %1066 = vperm.xlu0 %1065, %v1048
      %v1067 = vpop.permute.xlu0 %1066
      %v1069 = vlaneseq
      %v1070 = vshrl.u32 %v1069, 7
      %v1071 = vsub.s32 0, %v1070
      %v1072 = vrot.slane %v1042, %v1071
      %v1073 = vlaneseq
      %v1074 = vshrl.u32 %v1073, 7
      %v1075 = vsub.s32 0, %v1074
      %v1076 = vrot.slane %v1043, %v1075
      %v1077 = vmul.f32 %v1052, %v1072
      %v1078 = vmul.f32 %v1052, %v1076
      %v1079 = vmul.f32 %v1057, %v1072
      %v1080 = vmul.f32 %v1057, %v1076
      %v1081 = vmul.f32 %v1062, %v1072
      %v1082 = vmul.f32 %v1062, %v1076
      %v1083 = vmul.f32 %v1067, %v1072
      %v1084 = vmul.f32 %v1067, %v1076
      %v1085 = vadd.f32 %v1012, %v1077
      %v1086 = vadd.f32 %v1013, %v1078
      %v1087 = vadd.f32 %v1014, %v1079
      %v1088 = vadd.f32 %v1015, %v1080
      %v1089 = vadd.f32 %v1016, %v1081
      %v1090 = vadd.f32 %v1017, %v1082
      %v1091 = vadd.f32 %v1018, %v1083
      %v1092 = vadd.f32 %v1019, %v1084
      %1093 = vset.pattern.permute.xlu0 1
      %1094 = vperm.xlu0 %1093, %v1045
      %v1095 = vpop.permute.xlu0 %1094
      %1097 = vset.pattern.permute.xlu0 1
      %1098 = vperm.xlu0 %1097, %v1046
      %v1099 = vpop.permute.xlu0 %1098
      %1101 = vset.pattern.permute.xlu0 1
      %1102 = vperm.xlu0 %1101, %v1047
      %v1103 = vpop.permute.xlu0 %1102
      %1105 = vset.pattern.permute.xlu0 1
      %1106 = vperm.xlu0 %1105, %v1048
      %v1107 = vpop.permute.xlu0 %1106
      %v1109 = vlaneseq
      %v1110 = vshrl.u32 %v1109, 7
      %v1111 = vsub.s32 1, %v1110
      %v1112 = vrot.slane %v1042, %v1111
      %v1113 = vlaneseq
      %v1114 = vshrl.u32 %v1113, 7
      %v1115 = vsub.s32 1, %v1114
      %v1116 = vrot.slane %v1043, %v1115
      %v1117 = vmul.f32 %v1095, %v1112
      %v1118 = vmul.f32 %v1095, %v1116
      %v1119 = vmul.f32 %v1099, %v1112
      %v1120 = vmul.f32 %v1099, %v1116
      %v1121 = vmul.f32 %v1103, %v1112
      %v1122 = vmul.f32 %v1103, %v1116
      %v1123 = vmul.f32 %v1107, %v1112
      %v1124 = vmul.f32 %v1107, %v1116
      %v1125 = vadd.f32 %v1085, %v1117
      %v1126 = vadd.f32 %v1086, %v1118
      %v1127 = vadd.f32 %v1087, %v1119
      %v1128 = vadd.f32 %v1088, %v1120
      %v1129 = vadd.f32 %v1089, %v1121
      %v1130 = vadd.f32 %v1090, %v1122
      %v1131 = vadd.f32 %v1091, %v1123
      %v1132 = vadd.f32 %v1092, %v1124
      %1133 = vrot.lane.b32.xlu0 %v233, 111
      %v1134 = vpop.permute.xlu0 %1133
      %1135 = vrot.lane.b32.xlu0 %v234, 111
      %v1136 = vpop.permute.xlu0 %1135
      %vm1137 = vcmask 908288
      %v1138 = vsel %vm1137, %v1134, %v1136
      %v1141 = vsel %vm1137, %v1136, 0.0
      %s1142 = scalar_lea.vmem %s1, 16
      %v1143 = vld [vmem:[%s1142] sm:$0x3]
      %v1145 = vlaneseq
      %v1146 = vshrl.u32 %v1145, 7
      %v1147 = vsub.s32 0, %v1146
      %v1148 = vrot.slane %v1143, %v1147
      %v1149 = vlaneseq
      %v1150 = vshrl.u32 %v1149, 7
      %v1151 = vsub.s32 1, %v1150
      %v1152 = vrot.slane %v1143, %v1151
      %v1155 = vmul.f32 %v1138, %v1148
      %v1156 = vmul.f32 %v1141, %v1152
      %s1157 = scalar_lea.vmem %s2, 256
      %v1158 = vld [vmem:[%s1157] sm:$0xff]
      %v1159 = vld [vmem:[%s1157 + $0x8] sm:$0xff]
      %v1160 = vld [vmem:[%s1157 + $0x10] sm:$0xff]
      %v1161 = vld [vmem:[%s1157 + $0x18] sm:$0xff]
      %1163 = vset.pattern.permute.xlu0 0
      %1164 = vperm.xlu0 %1163, %v1158
      %v1165 = vpop.permute.xlu0 %1164
      %1168 = vset.pattern.permute.xlu0 0
      %1169 = vperm.xlu0 %1168, %v1159
      %v1170 = vpop.permute.xlu0 %1169
      %1173 = vset.pattern.permute.xlu0 0
      %1174 = vperm.xlu0 %1173, %v1160
      %v1175 = vpop.permute.xlu0 %1174
      %1178 = vset.pattern.permute.xlu0 0
      %1179 = vperm.xlu0 %1178, %v1161
      %v1180 = vpop.permute.xlu0 %1179
      %v1182 = vlaneseq
      %v1183 = vshrl.u32 %v1182, 7
      %v1184 = vsub.s32 0, %v1183
      %v1185 = vrot.slane %v1155, %v1184
      %v1186 = vlaneseq
      %v1187 = vshrl.u32 %v1186, 7
      %v1188 = vsub.s32 0, %v1187
      %v1189 = vrot.slane %v1156, %v1188
      %v1190 = vmul.f32 %v1165, %v1185
      %v1191 = vmul.f32 %v1165, %v1189
      %v1192 = vmul.f32 %v1170, %v1185
      %v1193 = vmul.f32 %v1170, %v1189
      %v1194 = vmul.f32 %v1175, %v1185
      %v1195 = vmul.f32 %v1175, %v1189
      %v1196 = vmul.f32 %v1180, %v1185
      %v1197 = vmul.f32 %v1180, %v1189
      %v1198 = vadd.f32 %v1125, %v1190
      %v1199 = vadd.f32 %v1126, %v1191
      %v1200 = vadd.f32 %v1127, %v1192
      %v1201 = vadd.f32 %v1128, %v1193
      %v1202 = vadd.f32 %v1129, %v1194
      %v1203 = vadd.f32 %v1130, %v1195
      %v1204 = vadd.f32 %v1131, %v1196
      %v1205 = vadd.f32 %v1132, %v1197
      %1206 = vset.pattern.permute.xlu0 1
      %1207 = vperm.xlu0 %1206, %v1158
      %v1208 = vpop.permute.xlu0 %1207
      %1210 = vset.pattern.permute.xlu0 1
      %1211 = vperm.xlu0 %1210, %v1159
      %v1212 = vpop.permute.xlu0 %1211
      %1214 = vset.pattern.permute.xlu0 1
      %1215 = vperm.xlu0 %1214, %v1160
      %v1216 = vpop.permute.xlu0 %1215
      %1218 = vset.pattern.permute.xlu0 1
      %1219 = vperm.xlu0 %1218, %v1161
      %v1220 = vpop.permute.xlu0 %1219
      %v1222 = vlaneseq
      %v1223 = vshrl.u32 %v1222, 7
      %v1224 = vsub.s32 1, %v1223
      %v1225 = vrot.slane %v1155, %v1224
      %v1226 = vlaneseq
      %v1227 = vshrl.u32 %v1226, 7
      %v1228 = vsub.s32 1, %v1227
      %v1229 = vrot.slane %v1156, %v1228
      %v1230 = vmul.f32 %v1208, %v1225
      %v1231 = vmul.f32 %v1208, %v1229
      %v1232 = vmul.f32 %v1212, %v1225
      %v1233 = vmul.f32 %v1212, %v1229
      %v1234 = vmul.f32 %v1216, %v1225
      %v1235 = vmul.f32 %v1216, %v1229
      %v1236 = vmul.f32 %v1220, %v1225
      %v1237 = vmul.f32 %v1220, %v1229
      %v1238 = vadd.f32 %v1198, %v1230
      %v1239 = vadd.f32 %v1199, %v1231
      %v1240 = vadd.f32 %v1200, %v1232
      %v1241 = vadd.f32 %v1201, %v1233
      %v1242 = vadd.f32 %v1202, %v1234
      %v1243 = vadd.f32 %v1203, %v1235
      %v1244 = vadd.f32 %v1204, %v1236
      %v1245 = vadd.f32 %v1205, %v1237
      %vm1246 = vcmp.ge.f32.partialorder %v1238, 0.0
      %vm1247 = vcmp.ge.f32.partialorder %v1239, 0.0
      %vm1248 = vcmp.ge.f32.partialorder %v1240, 0.0
      %vm1249 = vcmp.ge.f32.partialorder %v1241, 0.0
      %vm1250 = vcmp.ge.f32.partialorder %v1242, 0.0
      %vm1251 = vcmp.ge.f32.partialorder %v1243, 0.0
      %vm1252 = vcmp.ge.f32.partialorder %v1244, 0.0
      %vm1253 = vcmp.ge.f32.partialorder %v1245, 0.0
      %v1254 = vmul.f32 %v1238, 0.01
      %v1255 = vmul.f32 %v1239, 0.01
      %v1256 = vmul.f32 %v1240, 0.01
      %v1257 = vmul.f32 %v1241, 0.01
      %v1258 = vmul.f32 %v1242, 0.01
      %v1259 = vmul.f32 %v1243, 0.01
      %v1260 = vmul.f32 %v1244, 0.01
      %v1261 = vmul.f32 %v1245, 0.01
      %v1262 = vsel %vm1246, %v1238, %v1254
      %v1263 = vsel %vm1247, %v1239, %v1255
      %v1264 = vsel %vm1248, %v1240, %v1256
      %v1265 = vsel %vm1249, %v1241, %v1257
      %v1266 = vsel %vm1250, %v1242, %v1258
      %v1267 = vsel %vm1251, %v1243, %v1259
      %v1268 = vsel %vm1252, %v1244, %v1260
      %v1269 = vsel %vm1253, %v1245, %v1261
      %1278 = vrot.lane.b32.xlu0 %v1262, 17
      %v1279 = vpop.permute.xlu0 %1278
      %1280 = vrot.lane.b32.xlu0 %v1263, 17
      %v1281 = vpop.permute.xlu0 %1280
      %1282 = vrot.lane.b32.xlu0 %v1264, 17
      %v1283 = vpop.permute.xlu0 %1282
      %1284 = vrot.lane.b32.xlu0 %v1265, 17
      %v1285 = vpop.permute.xlu0 %1284
      %1286 = vrot.lane.b32.xlu0 %v1266, 17
      %v1287 = vpop.permute.xlu0 %1286
      %1288 = vrot.lane.b32.xlu0 %v1267, 17
      %v1289 = vpop.permute.xlu0 %1288
      %1290 = vrot.lane.b32.xlu0 %v1268, 17
      %v1291 = vpop.permute.xlu0 %1290
      %1292 = vrot.lane.b32.xlu0 %v1269, 17
      %v1293 = vpop.permute.xlu0 %1292
      %v1294 = vsel %vm239, %v1279, %v1281
      %v1295 = vsel %vm239, %v1283, %v1285
      %v1296 = vsel %vm239, %v1287, %v1289
      %v1297 = vsel %vm239, %v1291, %v1293
      %v1306 = vsel %vm239, 0.0, %v1279
      %v1307 = vsel %vm239, 0.0, %v1283
      %v1308 = vsel %vm239, 0.0, %v1287
      %v1309 = vsel %vm239, 0.0, %v1291
      %v1310 = vmul.f32 %v1306, %v249
      %v1311 = vmul.f32 %v1294, %v253
      %v1312 = vmul.f32 %v1307, %v249
      %v1313 = vmul.f32 %v1295, %v253
      %v1314 = vmul.f32 %v1308, %v249
      %v1315 = vmul.f32 %v1296, %v253
      %v1316 = vmul.f32 %v1309, %v249
      %v1317 = vmul.f32 %v1297, %v253
      %v1318 = vld [vmem:[%s3] sm:$0xff]
      %v1319 = vld [vmem:[%s3 + $0x8] sm:$0xff]
      %v1320 = vld [vmem:[%s3 + $0x10] sm:$0xff]
      %v1321 = vld [vmem:[%s3 + $0x18] sm:$0xff]
      %1322 = vrot.lane.b32.xlu0 %v1262, 16
      %v1323 = vpop.permute.xlu0 %1322
      %1324 = vrot.lane.b32.xlu0 %v1263, 16
      %v1325 = vpop.permute.xlu0 %1324
      %1326 = vrot.lane.b32.xlu0 %v1264, 16
      %v1327 = vpop.permute.xlu0 %1326
      %1328 = vrot.lane.b32.xlu0 %v1265, 16
      %v1329 = vpop.permute.xlu0 %1328
      %1330 = vrot.lane.b32.xlu0 %v1266, 16
      %v1331 = vpop.permute.xlu0 %1330
      %1332 = vrot.lane.b32.xlu0 %v1267, 16
      %v1333 = vpop.permute.xlu0 %1332
      %1334 = vrot.lane.b32.xlu0 %v1268, 16
      %v1335 = vpop.permute.xlu0 %1334
      %1336 = vrot.lane.b32.xlu0 %v1269, 16
      %v1337 = vpop.permute.xlu0 %1336
      %v1338 = vsel %vm350, %v1323, %v1325
      %v1339 = vsel %vm350, %v1327, %v1329
      %v1340 = vsel %vm350, %v1331, %v1333
      %v1341 = vsel %vm350, %v1335, %v1337
      %v1350 = vsel %vm350, 0.0, %v1323
      %v1351 = vsel %vm350, 0.0, %v1327
      %v1352 = vsel %vm350, 0.0, %v1331
      %v1353 = vsel %vm350, 0.0, %v1335
      %v1354 = vmul.f32 %v1350, %v361
      %v1355 = vmul.f32 %v1338, %v365
      %v1356 = vmul.f32 %v1351, %v361
      %v1357 = vmul.f32 %v1339, %v365
      %v1358 = vmul.f32 %v1352, %v361
      %v1359 = vmul.f32 %v1340, %v365
      %v1360 = vmul.f32 %v1353, %v361
      %v1361 = vmul.f32 %v1341, %v365
      %s1362 = scalar_lea.vmem %s3, 32
      %v1363 = vld [vmem:[%s1362] sm:$0xff]
      %v1364 = vld [vmem:[%s1362 + $0x8] sm:$0xff]
      %v1365 = vld [vmem:[%s1362 + $0x10] sm:$0xff]
      %v1366 = vld [vmem:[%s1362 + $0x18] sm:$0xff]
      %vm1367 = vcmask 261120
      %v1369 = vsel %vm1367, %v1363, 0
      %v1372 = vsel %vm1367, %v1364, 0
      %v1375 = vsel %vm1367, %v1365, 0
      %v1378 = vsel %vm1367, %v1366, 0
      %1380 = vmatprep.subr.mxu0 %v1355
      %1381 = vmatpush1.msra.mxu0 %v1354
      %1382 = vmatprep.subr.mxu0 %v1357
      %1383 = vmatpush1.msra.mxu0 %v1356
      %1384 = vmatprep.subr.mxu0 %v1359
      %1385 = vmatpush1.msra.mxu0 %v1358
      %1386 = vmatprep.subr.mxu0 %v1361
      %1387 = vmatpush1.msra.mxu0 %v1360
      %1388 = vmatprep.subr.mxu0 0.0
      %1389 = vmatpush1.msra.mxu0 0.0
      %1390 = vmatprep.subr.mxu0 0.0
      %1391 = vmatpush1.msra.mxu0 0.0
      %1392 = vmatprep.subr.mxu0 0.0
      %1393 = vmatpush1.msra.mxu0 0.0
      %1394 = vmatprep.subr.mxu0 0.0
      %1395 = vmatpush1.msra.mxu0 0.0
      %1396 = vmatprep.subr.mxu0 0.0
      %1397 = vmatpush1.msra.mxu0 0.0
      %1398 = vmatprep.subr.mxu0 0.0
      %1399 = vmatpush1.msra.mxu0 0.0
      %1400 = vmatprep.subr.mxu0 0.0
      %1401 = vmatpush1.msra.mxu0 0.0
      %1402 = vmatprep.subr.mxu0 0.0
      %1403 = vmatpush1.msra.mxu0 0.0
      %1404 = vmatprep.subr.mxu0 0.0
      %1405 = vmatpush1.msra.mxu0 0.0
      %1406 = vmatprep.subr.mxu0 0.0
      %1407 = vmatpush1.msra.mxu0 0.0
      %1408 = vmatprep.subr.mxu0 0.0
      %1409 = vmatpush1.msra.mxu0 0.0
      %1410 = vmatprep.subr.mxu0 0.0
      %1411 = vmatpush1.msra.mxu0 0.0
      %1412 = vmatprep.subr.mxu0 0.0
      %1413 = vmatpush1.msra.mxu0 0.0
      %1414 = vmatprep.subr.mxu0 0.0
      %1415 = vmatpush1.msra.mxu0 0.0
      %1416 = vmatprep.subr.mxu0 0.0
      %1417 = vmatpush1.msra.mxu0 0.0
      %1418 = vmatprep.subr.mxu0 0.0
      %1419 = vmatpush1.msra.mxu0 0.0
      %1420 = vmatprep.subr.mxu0 0.0
      %1421 = vmatpush1.msra.mxu0 0.0
      %1422 = vmatprep.subr.mxu0 0.0
      %1423 = vmatpush1.msra.mxu0 0.0
      %1424 = vmatprep.subr.mxu0 0.0
      %1425 = vmatpush1.msra.mxu0 0.0
      %1426 = vmatprep.subr.mxu0 0.0
      %1427 = vmatpush1.msra.mxu0 0.0
      %1428 = vmatprep.subr.mxu0 0.0
      %1429 = vmatpush1.msra.mxu0 0.0
      %1430 = vmatprep.subr.mxu0 0.0
      %1431 = vmatpush1.msra.mxu0 0.0
      %1432 = vmatprep.subr.mxu0 0.0
      %1433 = vmatpush1.msra.mxu0 0.0
      %1434 = vmatprep.subr.mxu0 0.0
      %1435 = vmatpush1.msra.mxu0 0.0
      %1436 = vmatprep.subr.mxu0 0.0
      %1437 = vmatpush1.msra.mxu0 0.0
      %1438 = vmatprep.subr.mxu0 0.0
      %1439 = vmatpush1.msra.mxu0 0.0
      %1440 = vmatprep.subr.mxu0 0.0
      %1441 = vmatpush1.msra.mxu0 0.0
      %1442 = vmatprep.subr.mxu0 0.0
      %1443 = vmatpush1.msra.mxu0 0.0
      %1444 = vmatprep.mubr.f32.mxu0 0.0
      %1445 = vmatmul.mubr.f32.gmra.mrb[0].mxu0 %v1369
      %v1446 = vpop.f32.mrb[0].mxu0
      %v1447 = vadd.f32 0.0, %v1446
      %v1448 = vpop.f32.mrb[0].mxu0
      %v1449 = vadd.f32 0.0, %v1448
      %1450 = vmatprep.mubr.f32.mxu0 0.0
      %1451 = vmatmul.mubr.f32.gmra.mrb[0].mxu0 %v1372
      %v1452 = vpop.f32.mrb[0].mxu0
      %v1453 = vadd.f32 0.0, %v1452
      %v1454 = vpop.f32.mrb[0].mxu0
      %v1455 = vadd.f32 0.0, %v1454
      %1456 = vmatprep.mubr.f32.mxu0 0.0
      %1457 = vmatmul.mubr.f32.gmra.mrb[0].mxu0 %v1375
      %v1458 = vpop.f32.mrb[0].mxu0
      %v1459 = vadd.f32 0.0, %v1458
      %v1460 = vpop.f32.mrb[0].mxu0
      %v1461 = vadd.f32 0.0, %v1460
      %1462 = vmatprep.mubr.f32.mxu0 0.0
      %1463 = vmatmul.mubr.f32.gmra.mrb[0].mxu0 %v1378
      %v1464 = vpop.f32.mrb[0].mxu0
      %v1465 = vadd.f32 0.0, %v1464
      %v1466 = vpop.f32.mrb[0].mxu0
      %v1467 = vadd.f32 0.0, %v1466
      %1468 = vdwg.mxu0
      %v1470 = vsel %vm1367, %v1318, 0
      %v1473 = vsel %vm1367, %v1319, 0
      %v1476 = vsel %vm1367, %v1320, 0
      %v1479 = vsel %vm1367, %v1321, 0
      %1481 = vmatprep.subr.mxu0 %v1311
      %1482 = vmatpush1.msra.mxu0 %v1310
      %1483 = vmatprep.subr.mxu0 %v1313
      %1484 = vmatpush1.msra.mxu0 %v1312
      %1485 = vmatprep.subr.mxu0 %v1315
      %1486 = vmatpush1.msra.mxu0 %v1314
      %1487 = vmatprep.subr.mxu0 %v1317
      %1488 = vmatpush1.msra.mxu0 %v1316
      %1489 = vmatprep.subr.mxu0 0.0
      %1490 = vmatpush1.msra.mxu0 0.0
      %1491 = vmatprep.subr.mxu0 0.0
      %1492 = vmatpush1.msra.mxu0 0.0
      %1493 = vmatprep.subr.mxu0 0.0
      %1494 = vmatpush1.msra.mxu0 0.0
      %1495 = vmatprep.subr.mxu0 0.0
      %1496 = vmatpush1.msra.mxu0 0.0
      %1497 = vmatprep.subr.mxu0 0.0
      %1498 = vmatpush1.msra.mxu0 0.0
      %1499 = vmatprep.subr.mxu0 0.0
      %1500 = vmatpush1.msra.mxu0 0.0
      %1501 = vmatprep.subr.mxu0 0.0
      %1502 = vmatpush1.msra.mxu0 0.0
      %1503 = vmatprep.subr.mxu0 0.0
      %1504 = vmatpush1.msra.mxu0 0.0
      %1505 = vmatprep.subr.mxu0 0.0
      %1506 = vmatpush1.msra.mxu0 0.0
      %1507 = vmatprep.subr.mxu0 0.0
      %1508 = vmatpush1.msra.mxu0 0.0
      %1509 = vmatprep.subr.mxu0 0.0
      %1510 = vmatpush1.msra.mxu0 0.0
      %1511 = vmatprep.subr.mxu0 0.0
      %1512 = vmatpush1.msra.mxu0 0.0
      %1513 = vmatprep.subr.mxu0 0.0
      %1514 = vmatpush1.msra.mxu0 0.0
      %1515 = vmatprep.subr.mxu0 0.0
      %1516 = vmatpush1.msra.mxu0 0.0
      %1517 = vmatprep.subr.mxu0 0.0
      %1518 = vmatpush1.msra.mxu0 0.0
      %1519 = vmatprep.subr.mxu0 0.0
      %1520 = vmatpush1.msra.mxu0 0.0
      %1521 = vmatprep.subr.mxu0 0.0
      %1522 = vmatpush1.msra.mxu0 0.0
      %1523 = vmatprep.subr.mxu0 0.0
      %1524 = vmatpush1.msra.mxu0 0.0
      %1525 = vmatprep.subr.mxu0 0.0
      %1526 = vmatpush1.msra.mxu0 0.0
      %1527 = vmatprep.subr.mxu0 0.0
      %1528 = vmatpush1.msra.mxu0 0.0
      %1529 = vmatprep.subr.mxu0 0.0
      %1530 = vmatpush1.msra.mxu0 0.0
      %1531 = vmatprep.subr.mxu0 0.0
      %1532 = vmatpush1.msra.mxu0 0.0
      %1533 = vmatprep.subr.mxu0 0.0
      %1534 = vmatpush1.msra.mxu0 0.0
      %1535 = vmatprep.subr.mxu0 0.0
      %1536 = vmatpush1.msra.mxu0 0.0
      %1537 = vmatprep.subr.mxu0 0.0
      %1538 = vmatpush1.msra.mxu0 0.0
      %1539 = vmatprep.subr.mxu0 0.0
      %1540 = vmatpush1.msra.mxu0 0.0
      %1541 = vmatprep.subr.mxu0 0.0
      %1542 = vmatpush1.msra.mxu0 0.0
      %1543 = vmatprep.subr.mxu0 0.0
      %1544 = vmatpush1.msra.mxu0 0.0
      %1545 = vmatprep.mubr.f32.mxu0 0.0
      %1546 = vmatmul.mubr.f32.gmra.mrb[0].mxu0 %v1470
      %v1547 = vpop.f32.mrb[0].mxu0
      %v1548 = vadd.f32 %v1447, %v1547
      %v1549 = vpop.f32.mrb[0].mxu0
      %v1550 = vadd.f32 %v1449, %v1549
      %1551 = vmatprep.mubr.f32.mxu0 0.0
      %1552 = vmatmul.mubr.f32.gmra.mrb[0].mxu0 %v1473
      %v1553 = vpop.f32.mrb[0].mxu0
      %v1554 = vadd.f32 %v1453, %v1553
      %v1555 = vpop.f32.mrb[0].mxu0
      %v1556 = vadd.f32 %v1455, %v1555
      %1557 = vmatprep.mubr.f32.mxu0 0.0
      %1558 = vmatmul.mubr.f32.gmra.mrb[0].mxu0 %v1476
      %v1559 = vpop.f32.mrb[0].mxu0
      %v1560 = vadd.f32 %v1459, %v1559
      %v1561 = vpop.f32.mrb[0].mxu0
      %v1562 = vadd.f32 %v1461, %v1561
      %1563 = vmatprep.mubr.f32.mxu0 0.0
      %1564 = vmatmul.mubr.f32.gmra.mrb[0].mxu0 %v1479
      %v1565 = vpop.f32.mrb[0].mxu0
      %v1566 = vadd.f32 %v1465, %v1565
      %v1567 = vpop.f32.mrb[0].mxu0
      %v1568 = vadd.f32 %v1467, %v1567
      %1569 = vdwg.mxu0
      %1570 = vrot.lane.b32.xlu0 %v1262, 15
      %v1571 = vpop.permute.xlu0 %1570
      %1572 = vrot.lane.b32.xlu0 %v1263, 15
      %v1573 = vpop.permute.xlu0 %1572
      %1574 = vrot.lane.b32.xlu0 %v1264, 15
      %v1575 = vpop.permute.xlu0 %1574
      %1576 = vrot.lane.b32.xlu0 %v1265, 15
      %v1577 = vpop.permute.xlu0 %1576
      %1578 = vrot.lane.b32.xlu0 %v1266, 15
      %v1579 = vpop.permute.xlu0 %1578
      %1580 = vrot.lane.b32.xlu0 %v1267, 15
      %v1581 = vpop.permute.xlu0 %1580
      %1582 = vrot.lane.b32.xlu0 %v1268, 15
      %v1583 = vpop.permute.xlu0 %1582
      %1584 = vrot.lane.b32.xlu0 %v1269, 15
      %v1585 = vpop.permute.xlu0 %1584
      %v1586 = vsel %vm463, %v1571, %v1573
      %v1587 = vsel %vm463, %v1575, %v1577
      %v1588 = vsel %vm463, %v1579, %v1581
      %v1589 = vsel %vm463, %v1583, %v1585
      %v1598 = vsel %vm463, 0.0, %v1571
      %v1599 = vsel %vm463, 0.0, %v1575
      %v1600 = vsel %vm463, 0.0, %v1579
      %v1601 = vsel %vm463, 0.0, %v1583
      %v1602 = vmul.f32 %v1598, %v474
      %v1603 = vmul.f32 %v1586, %v478
      %v1604 = vmul.f32 %v1599, %v474
      %v1605 = vmul.f32 %v1587, %v478
      %v1606 = vmul.f32 %v1600, %v474
      %v1607 = vmul.f32 %v1588, %v478
      %v1608 = vmul.f32 %v1601, %v474
      %v1609 = vmul.f32 %v1589, %v478
      %s1610 = scalar_lea.vmem %s3, 64
      %v1611 = vld [vmem:[%s1610] sm:$0xff]
      %v1612 = vld [vmem:[%s1610 + $0x8] sm:$0xff]
      %v1613 = vld [vmem:[%s1610 + $0x10] sm:$0xff]
      %v1614 = vld [vmem:[%s1610 + $0x18] sm:$0xff]
      %v1616 = vsel %vm1367, %v1611, 0
      %v1619 = vsel %vm1367, %v1612, 0
      %v1622 = vsel %vm1367, %v1613, 0
      %v1625 = vsel %vm1367, %v1614, 0
      %1627 = vmatprep.subr.mxu0 %v1603
      %1628 = vmatpush1.msra.mxu0 %v1602
      %1629 = vmatprep.subr.mxu0 %v1605
      %1630 = vmatpush1.msra.mxu0 %v1604
      %1631 = vmatprep.subr.mxu0 %v1607
      %1632 = vmatpush1.msra.mxu0 %v1606
      %1633 = vmatprep.subr.mxu0 %v1609
      %1634 = vmatpush1.msra.mxu0 %v1608
      %1635 = vmatprep.subr.mxu0 0.0
      %1636 = vmatpush1.msra.mxu0 0.0
      %1637 = vmatprep.subr.mxu0 0.0
      %1638 = vmatpush1.msra.mxu0 0.0
      %1639 = vmatprep.subr.mxu0 0.0
      %1640 = vmatpush1.msra.mxu0 0.0
      %1641 = vmatprep.subr.mxu0 0.0
      %1642 = vmatpush1.msra.mxu0 0.0
      %1643 = vmatprep.subr.mxu0 0.0
      %1644 = vmatpush1.msra.mxu0 0.0
      %1645 = vmatprep.subr.mxu0 0.0
      %1646 = vmatpush1.msra.mxu0 0.0
      %1647 = vmatprep.subr.mxu0 0.0
      %1648 = vmatpush1.msra.mxu0 0.0
      %1649 = vmatprep.subr.mxu0 0.0
      %1650 = vmatpush1.msra.mxu0 0.0
      %1651 = vmatprep.subr.mxu0 0.0
      %1652 = vmatpush1.msra.mxu0 0.0
      %1653 = vmatprep.subr.mxu0 0.0
      %1654 = vmatpush1.msra.mxu0 0.0
      %1655 = vmatprep.subr.mxu0 0.0
      %1656 = vmatpush1.msra.mxu0 0.0
      %1657 = vmatprep.subr.mxu0 0.0
      %1658 = vmatpush1.msra.mxu0 0.0
      %1659 = vmatprep.subr.mxu0 0.0
      %1660 = vmatpush1.msra.mxu0 0.0
      %1661 = vmatprep.subr.mxu0 0.0
      %1662 = vmatpush1.msra.mxu0 0.0
      %1663 = vmatprep.subr.mxu0 0.0
      %1664 = vmatpush1.msra.mxu0 0.0
      %1665 = vmatprep.subr.mxu0 0.0
      %1666 = vmatpush1.msra.mxu0 0.0
      %1667 = vmatprep.subr.mxu0 0.0
      %1668 = vmatpush1.msra.mxu0 0.0
      %1669 = vmatprep.subr.mxu0 0.0
      %1670 = vmatpush1.msra.mxu0 0.0
      %1671 = vmatprep.subr.mxu0 0.0
      %1672 = vmatpush1.msra.mxu0 0.0
      %1673 = vmatprep.subr.mxu0 0.0
      %1674 = vmatpush1.msra.mxu0 0.0
      %1675 = vmatprep.subr.mxu0 0.0
      %1676 = vmatpush1.msra.mxu0 0.0
      %1677 = vmatprep.subr.mxu0 0.0
      %1678 = vmatpush1.msra.mxu0 0.0
      %1679 = vmatprep.subr.mxu0 0.0
      %1680 = vmatpush1.msra.mxu0 0.0
      %1681 = vmatprep.subr.mxu0 0.0
      %1682 = vmatpush1.msra.mxu0 0.0
      %1683 = vmatprep.subr.mxu0 0.0
      %1684 = vmatpush1.msra.mxu0 0.0
      %1685 = vmatprep.subr.mxu0 0.0
      %1686 = vmatpush1.msra.mxu0 0.0
      %1687 = vmatprep.subr.mxu0 0.0
      %1688 = vmatpush1.msra.mxu0 0.0
      %1689 = vmatprep.subr.mxu0 0.0
      %1690 = vmatpush1.msra.mxu0 0.0
      %1691 = vmatprep.mubr.f32.mxu0 0.0
      %1692 = vmatmul.mubr.f32.gmra.mrb[0].mxu0 %v1616
      %v1693 = vpop.f32.mrb[0].mxu0
      %v1694 = vadd.f32 0.0, %v1693
      %v1695 = vpop.f32.mrb[0].mxu0
      %v1696 = vadd.f32 0.0, %v1695
      %1697 = vmatprep.mubr.f32.mxu0 0.0
      %1698 = vmatmul.mubr.f32.gmra.mrb[0].mxu0 %v1619
      %v1699 = vpop.f32.mrb[0].mxu0
      %v1700 = vadd.f32 0.0, %v1699
      %v1701 = vpop.f32.mrb[0].mxu0
      %v1702 = vadd.f32 0.0, %v1701
      %1703 = vmatprep.mubr.f32.mxu0 0.0
      %1704 = vmatmul.mubr.f32.gmra.mrb[0].mxu0 %v1622
      %v1705 = vpop.f32.mrb[0].mxu0
      %v1706 = vadd.f32 0.0, %v1705
      %v1707 = vpop.f32.mrb[0].mxu0
      %v1708 = vadd.f32 0.0, %v1707
      %1709 = vmatprep.mubr.f32.mxu0 0.0
      %1710 = vmatmul.mubr.f32.gmra.mrb[0].mxu0 %v1625
      %v1711 = vpop.f32.mrb[0].mxu0
      %v1712 = vadd.f32 0.0, %v1711
      %v1713 = vpop.f32.mrb[0].mxu0
      %v1714 = vadd.f32 0.0, %v1713
      %1715 = vdwg.mxu0
      %v1716 = vadd.f32 %v1548, %v1694
      %v1717 = vadd.f32 %v1550, %v1696
      %v1718 = vadd.f32 %v1554, %v1700
      %v1719 = vadd.f32 %v1556, %v1702
      %v1720 = vadd.f32 %v1560, %v1706
      %v1721 = vadd.f32 %v1562, %v1708
      %v1722 = vadd.f32 %v1566, %v1712
      %v1723 = vadd.f32 %v1568, %v1714
      %1724 = vrot.lane.b32.xlu0 %v1262, 1
      %v1725 = vpop.permute.xlu0 %1724
      %1726 = vrot.lane.b32.xlu0 %v1263, 1
      %v1727 = vpop.permute.xlu0 %1726
      %1728 = vrot.lane.b32.xlu0 %v1264, 1
      %v1729 = vpop.permute.xlu0 %1728
      %1730 = vrot.lane.b32.xlu0 %v1265, 1
      %v1731 = vpop.permute.xlu0 %1730
      %1732 = vrot.lane.b32.xlu0 %v1266, 1
      %v1733 = vpop.permute.xlu0 %1732
      %1734 = vrot.lane.b32.xlu0 %v1267, 1
      %v1735 = vpop.permute.xlu0 %1734
      %1736 = vrot.lane.b32.xlu0 %v1268, 1
      %v1737 = vpop.permute.xlu0 %1736
      %1738 = vrot.lane.b32.xlu0 %v1269, 1
      %v1739 = vpop.permute.xlu0 %1738
      %v1740 = vsel %vm576, %v1725, %v1727
      %v1741 = vsel %vm576, %v1729, %v1731
      %v1742 = vsel %vm576, %v1733, %v1735
      %v1743 = vsel %vm576, %v1737, %v1739
      %v1752 = vsel %vm576, 0.0, %v1725
      %v1753 = vsel %vm576, 0.0, %v1729
      %v1754 = vsel %vm576, 0.0, %v1733
      %v1755 = vsel %vm576, 0.0, %v1737
      %v1756 = vmul.f32 %v1752, %v587
      %v1757 = vmul.f32 %v1740, %v591
      %v1758 = vmul.f32 %v1753, %v587
      %v1759 = vmul.f32 %v1741, %v591
      %v1760 = vmul.f32 %v1754, %v587
      %v1761 = vmul.f32 %v1742, %v591
      %v1762 = vmul.f32 %v1755, %v587
      %v1763 = vmul.f32 %v1743, %v591
      %s1764 = scalar_lea.vmem %s3, 96
      %v1765 = vld [vmem:[%s1764] sm:$0xff]
      %v1766 = vld [vmem:[%s1764 + $0x8] sm:$0xff]
      %v1767 = vld [vmem:[%s1764 + $0x10] sm:$0xff]
      %v1768 = vld [vmem:[%s1764 + $0x18] sm:$0xff]
      %v1770 = vsel %vm1367, %v1765, 0
      %v1773 = vsel %vm1367, %v1766, 0
      %v1776 = vsel %vm1367, %v1767, 0
      %v1779 = vsel %vm1367, %v1768, 0
      %1781 = vmatprep.subr.mxu0 %v1757
      %1782 = vmatpush1.msra.mxu0 %v1756
      %1783 = vmatprep.subr.mxu0 %v1759
      %1784 = vmatpush1.msra.mxu0 %v1758
      %1785 = vmatprep.subr.mxu0 %v1761
      %1786 = vmatpush1.msra.mxu0 %v1760
      %1787 = vmatprep.subr.mxu0 %v1763
      %1788 = vmatpush1.msra.mxu0 %v1762
      %1789 = vmatprep.subr.mxu0 0.0
      %1790 = vmatpush1.msra.mxu0 0.0
      %1791 = vmatprep.subr.mxu0 0.0
      %1792 = vmatpush1.msra.mxu0 0.0
      %1793 = vmatprep.subr.mxu0 0.0
      %1794 = vmatpush1.msra.mxu0 0.0
      %1795 = vmatprep.subr.mxu0 0.0
      %1796 = vmatpush1.msra.mxu0 0.0
      %1797 = vmatprep.subr.mxu0 0.0
      %1798 = vmatpush1.msra.mxu0 0.0
      %1799 = vmatprep.subr.mxu0 0.0
      %1800 = vmatpush1.msra.mxu0 0.0
      %1801 = vmatprep.subr.mxu0 0.0
      %1802 = vmatpush1.msra.mxu0 0.0
      %1803 = vmatprep.subr.mxu0 0.0
      %1804 = vmatpush1.msra.mxu0 0.0
      %1805 = vmatprep.subr.mxu0 0.0
      %1806 = vmatpush1.msra.mxu0 0.0
      %1807 = vmatprep.subr.mxu0 0.0
      %1808 = vmatpush1.msra.mxu0 0.0
      %1809 = vmatprep.subr.mxu0 0.0
      %1810 = vmatpush1.msra.mxu0 0.0
      %1811 = vmatprep.subr.mxu0 0.0
      %1812 = vmatpush1.msra.mxu0 0.0
      %1813 = vmatprep.subr.mxu0 0.0
      %1814 = vmatpush1.msra.mxu0 0.0
      %1815 = vmatprep.subr.mxu0 0.0
      %1816 = vmatpush1.msra.mxu0 0.0
      %1817 = vmatprep.subr.mxu0 0.0
      %1818 = vmatpush1.msra.mxu0 0.0
      %1819 = vmatprep.subr.mxu0 0.0
      %1820 = vmatpush1.msra.mxu0 0.0
      %1821 = vmatprep.subr.mxu0 0.0
      %1822 = vmatpush1.msra.mxu0 0.0
      %1823 = vmatprep.subr.mxu0 0.0
      %1824 = vmatpush1.msra.mxu0 0.0
      %1825 = vmatprep.subr.mxu0 0.0
      %1826 = vmatpush1.msra.mxu0 0.0
      %1827 = vmatprep.subr.mxu0 0.0
      %1828 = vmatpush1.msra.mxu0 0.0
      %1829 = vmatprep.subr.mxu0 0.0
      %1830 = vmatpush1.msra.mxu0 0.0
      %1831 = vmatprep.subr.mxu0 0.0
      %1832 = vmatpush1.msra.mxu0 0.0
      %1833 = vmatprep.subr.mxu0 0.0
      %1834 = vmatpush1.msra.mxu0 0.0
      %1835 = vmatprep.subr.mxu0 0.0
      %1836 = vmatpush1.msra.mxu0 0.0
      %1837 = vmatprep.subr.mxu0 0.0
      %1838 = vmatpush1.msra.mxu0 0.0
      %1839 = vmatprep.subr.mxu0 0.0
      %1840 = vmatpush1.msra.mxu0 0.0
      %1841 = vmatprep.subr.mxu0 0.0
      %1842 = vmatpush1.msra.mxu0 0.0
      %1843 = vmatprep.subr.mxu0 0.0
      %1844 = vmatpush1.msra.mxu0 0.0
      %1845 = vmatprep.mubr.f32.mxu0 0.0
      %1846 = vmatmul.mubr.f32.gmra.mrb[0].mxu0 %v1770
      %v1847 = vpop.f32.mrb[0].mxu0
      %v1848 = vadd.f32 0.0, %v1847
      %v1849 = vpop.f32.mrb[0].mxu0
      %v1850 = vadd.f32 0.0, %v1849
      %1851 = vmatprep.mubr.f32.mxu0 0.0
      %1852 = vmatmul.mubr.f32.gmra.mrb[0].mxu0 %v1773
      %v1853 = vpop.f32.mrb[0].mxu0
      %v1854 = vadd.f32 0.0, %v1853
      %v1855 = vpop.f32.mrb[0].mxu0
      %v1856 = vadd.f32 0.0, %v1855
      %1857 = vmatprep.mubr.f32.mxu0 0.0
      %1858 = vmatmul.mubr.f32.gmra.mrb[0].mxu0 %v1776
      %v1859 = vpop.f32.mrb[0].mxu0
      %v1860 = vadd.f32 0.0, %v1859
      %v1861 = vpop.f32.mrb[0].mxu0
      %v1862 = vadd.f32 0.0, %v1861
      %1863 = vmatprep.mubr.f32.mxu0 0.0
      %1864 = vmatmul.mubr.f32.gmra.mrb[0].mxu0 %v1779
      %v1865 = vpop.f32.mrb[0].mxu0
      %v1866 = vadd.f32 0.0, %v1865
      %v1867 = vpop.f32.mrb[0].mxu0
      %v1868 = vadd.f32 0.0, %v1867
      %1869 = vdwg.mxu0
      %v1870 = vadd.f32 %v1716, %v1848
      %v1871 = vadd.f32 %v1717, %v1850
      %v1872 = vadd.f32 %v1718, %v1854
      %v1873 = vadd.f32 %v1719, %v1856
      %v1874 = vadd.f32 %v1720, %v1860
      %v1875 = vadd.f32 %v1721, %v1862
      %v1876 = vadd.f32 %v1722, %v1866
      %v1877 = vadd.f32 %v1723, %v1868
      %s1878 = scalar_lea.vmem %s3, 128
      %v1879 = vld [vmem:[%s1878] sm:$0xff]
      %v1880 = vld [vmem:[%s1878 + $0x8] sm:$0xff]
      %v1881 = vld [vmem:[%s1878 + $0x10] sm:$0xff]
      %v1882 = vld [vmem:[%s1878 + $0x18] sm:$0xff]
      %v1884 = vsel %vm1367, %v1879, 0
      %v1887 = vsel %vm1367, %v1880, 0
      %v1890 = vsel %vm1367, %v1881, 0
      %v1893 = vsel %vm1367, %v1882, 0
      %1895 = vmatprep.subr.mxu0 %v1263
      %1896 = vmatpush1.msra.mxu0 %v1262
      %1897 = vmatprep.subr.mxu0 %v1265
      %1898 = vmatpush1.msra.mxu0 %v1264
      %1899 = vmatprep.subr.mxu0 %v1267
      %1900 = vmatpush1.msra.mxu0 %v1266
      %1901 = vmatprep.subr.mxu0 %v1269
      %1902 = vmatpush1.msra.mxu0 %v1268
      %1903 = vmatprep.subr.mxu0 0.0
      %1904 = vmatpush1.msra.mxu0 0.0
      %1905 = vmatprep.subr.mxu0 0.0
      %1906 = vmatpush1.msra.mxu0 0.0
      %1907 = vmatprep.subr.mxu0 0.0
      %1908 = vmatpush1.msra.mxu0 0.0
      %1909 = vmatprep.subr.mxu0 0.0
      %1910 = vmatpush1.msra.mxu0 0.0
      %1911 = vmatprep.subr.mxu0 0.0
      %1912 = vmatpush1.msra.mxu0 0.0
      %1913 = vmatprep.subr.mxu0 0.0
      %1914 = vmatpush1.msra.mxu0 0.0
      %1915 = vmatprep.subr.mxu0 0.0
      %1916 = vmatpush1.msra.mxu0 0.0
      %1917 = vmatprep.subr.mxu0 0.0
      %1918 = vmatpush1.msra.mxu0 0.0
      %1919 = vmatprep.subr.mxu0 0.0
      %1920 = vmatpush1.msra.mxu0 0.0
      %1921 = vmatprep.subr.mxu0 0.0
      %1922 = vmatpush1.msra.mxu0 0.0
      %1923 = vmatprep.subr.mxu0 0.0
      %1924 = vmatpush1.msra.mxu0 0.0
      %1925 = vmatprep.subr.mxu0 0.0
      %1926 = vmatpush1.msra.mxu0 0.0
      %1927 = vmatprep.subr.mxu0 0.0
      %1928 = vmatpush1.msra.mxu0 0.0
      %1929 = vmatprep.subr.mxu0 0.0
      %1930 = vmatpush1.msra.mxu0 0.0
      %1931 = vmatprep.subr.mxu0 0.0
      %1932 = vmatpush1.msra.mxu0 0.0
      %1933 = vmatprep.subr.mxu0 0.0
      %1934 = vmatpush1.msra.mxu0 0.0
      %1935 = vmatprep.subr.mxu0 0.0
      %1936 = vmatpush1.msra.mxu0 0.0
      %1937 = vmatprep.subr.mxu0 0.0
      %1938 = vmatpush1.msra.mxu0 0.0
      %1939 = vmatprep.subr.mxu0 0.0
      %1940 = vmatpush1.msra.mxu0 0.0
      %1941 = vmatprep.subr.mxu0 0.0
      %1942 = vmatpush1.msra.mxu0 0.0
      %1943 = vmatprep.subr.mxu0 0.0
      %1944 = vmatpush1.msra.mxu0 0.0
      %1945 = vmatprep.subr.mxu0 0.0
      %1946 = vmatpush1.msra.mxu0 0.0
      %1947 = vmatprep.subr.mxu0 0.0
      %1948 = vmatpush1.msra.mxu0 0.0
      %1949 = vmatprep.subr.mxu0 0.0
      %1950 = vmatpush1.msra.mxu0 0.0
      %1951 = vmatprep.subr.mxu0 0.0
      %1952 = vmatpush1.msra.mxu0 0.0
      %1953 = vmatprep.subr.mxu0 0.0
      %1954 = vmatpush1.msra.mxu0 0.0
      %1955 = vmatprep.subr.mxu0 0.0
      %1956 = vmatpush1.msra.mxu0 0.0
      %1957 = vmatprep.subr.mxu0 0.0
      %1958 = vmatpush1.msra.mxu0 0.0
      %1959 = vmatprep.mubr.f32.mxu0 0.0
      %1960 = vmatmul.mubr.f32.gmra.mrb[0].mxu0 %v1884
      %v1961 = vpop.f32.mrb[0].mxu0
      %v1962 = vadd.f32 0.0, %v1961
      %v1963 = vpop.f32.mrb[0].mxu0
      %v1964 = vadd.f32 0.0, %v1963
      %1965 = vmatprep.mubr.f32.mxu0 0.0
      %1966 = vmatmul.mubr.f32.gmra.mrb[0].mxu0 %v1887
      %v1967 = vpop.f32.mrb[0].mxu0
      %v1968 = vadd.f32 0.0, %v1967
      %v1969 = vpop.f32.mrb[0].mxu0
      %v1970 = vadd.f32 0.0, %v1969
      %1971 = vmatprep.mubr.f32.mxu0 0.0
      %1972 = vmatmul.mubr.f32.gmra.mrb[0].mxu0 %v1890
      %v1973 = vpop.f32.mrb[0].mxu0
      %v1974 = vadd.f32 0.0, %v1973
      %v1975 = vpop.f32.mrb[0].mxu0
      %v1976 = vadd.f32 0.0, %v1975
      %1977 = vmatprep.mubr.f32.mxu0 0.0
      %1978 = vmatmul.mubr.f32.gmra.mrb[0].mxu0 %v1893
      %v1979 = vpop.f32.mrb[0].mxu0
      %v1980 = vadd.f32 0.0, %v1979
      %v1981 = vpop.f32.mrb[0].mxu0
      %v1982 = vadd.f32 0.0, %v1981
      %1983 = vdwg.mxu0
      %v1984 = vadd.f32 %v1870, %v1962
      %v1985 = vadd.f32 %v1871, %v1964
      %v1986 = vadd.f32 %v1872, %v1968
      %v1987 = vadd.f32 %v1873, %v1970
      %v1988 = vadd.f32 %v1874, %v1974
      %v1989 = vadd.f32 %v1875, %v1976
      %v1990 = vadd.f32 %v1876, %v1980
      %v1991 = vadd.f32 %v1877, %v1982
      %1992 = vrot.lane.b32.xlu0 %v1262, 127
      %v1993 = vpop.permute.xlu0 %1992
      %1994 = vrot.lane.b32.xlu0 %v1263, 127
      %v1995 = vpop.permute.xlu0 %1994
      %1996 = vrot.lane.b32.xlu0 %v1264, 127
      %v1997 = vpop.permute.xlu0 %1996
      %1998 = vrot.lane.b32.xlu0 %v1265, 127
      %v1999 = vpop.permute.xlu0 %1998
      %2000 = vrot.lane.b32.xlu0 %v1266, 127
      %v2001 = vpop.permute.xlu0 %2000
      %2002 = vrot.lane.b32.xlu0 %v1267, 127
      %v2003 = vpop.permute.xlu0 %2002
      %2004 = vrot.lane.b32.xlu0 %v1268, 127
      %v2005 = vpop.permute.xlu0 %2004
      %2006 = vrot.lane.b32.xlu0 %v1269, 127
      %v2007 = vpop.permute.xlu0 %2006
      %v2008 = vsel %vm798, %v1993, %v1995
      %v2009 = vsel %vm798, %v1997, %v1999
      %v2010 = vsel %vm798, %v2001, %v2003
      %v2011 = vsel %vm798, %v2005, %v2007
      %v2020 = vsel %vm798, %v1995, 0.0
      %v2021 = vsel %vm798, %v1999, 0.0
      %v2022 = vsel %vm798, %v2003, 0.0
      %v2023 = vsel %vm798, %v2007, 0.0
      %v2024 = vmul.f32 %v2008, %v809
      %v2025 = vmul.f32 %v2020, %v813
      %v2026 = vmul.f32 %v2009, %v809
      %v2027 = vmul.f32 %v2021, %v813
      %v2028 = vmul.f32 %v2010, %v809
      %v2029 = vmul.f32 %v2022, %v813
      %v2030 = vmul.f32 %v2011, %v809
      %v2031 = vmul.f32 %v2023, %v813
      %s2032 = scalar_lea.vmem %s3, 160
      %v2033 = vld [vmem:[%s2032] sm:$0xff]
      %v2034 = vld [vmem:[%s2032 + $0x8] sm:$0xff]
      %v2035 = vld [vmem:[%s2032 + $0x10] sm:$0xff]
      %v2036 = vld [vmem:[%s2032 + $0x18] sm:$0xff]
      %v2038 = vsel %vm1367, %v2033, 0
      %v2041 = vsel %vm1367, %v2034, 0
      %v2044 = vsel %vm1367, %v2035, 0
      %v2047 = vsel %vm1367, %v2036, 0
      %2049 = vmatprep.subr.mxu0 %v2025
      %2050 = vmatpush1.msra.mxu0 %v2024
      %2051 = vmatprep.subr.mxu0 %v2027
      %2052 = vmatpush1.msra.mxu0 %v2026
      %2053 = vmatprep.subr.mxu0 %v2029
      %2054 = vmatpush1.msra.mxu0 %v2028
      %2055 = vmatprep.subr.mxu0 %v2031
      %2056 = vmatpush1.msra.mxu0 %v2030
      %2057 = vmatprep.subr.mxu0 0.0
      %2058 = vmatpush1.msra.mxu0 0.0
      %2059 = vmatprep.subr.mxu0 0.0
      %2060 = vmatpush1.msra.mxu0 0.0
      %2061 = vmatprep.subr.mxu0 0.0
      %2062 = vmatpush1.msra.mxu0 0.0
      %2063 = vmatprep.subr.mxu0 0.0
      %2064 = vmatpush1.msra.mxu0 0.0
      %2065 = vmatprep.subr.mxu0 0.0
      %2066 = vmatpush1.msra.mxu0 0.0
      %2067 = vmatprep.subr.mxu0 0.0
      %2068 = vmatpush1.msra.mxu0 0.0
      %2069 = vmatprep.subr.mxu0 0.0
      %2070 = vmatpush1.msra.mxu0 0.0
      %2071 = vmatprep.subr.mxu0 0.0
      %2072 = vmatpush1.msra.mxu0 0.0
      %2073 = vmatprep.subr.mxu0 0.0
      %2074 = vmatpush1.msra.mxu0 0.0
      %2075 = vmatprep.subr.mxu0 0.0
      %2076 = vmatpush1.msra.mxu0 0.0
      %2077 = vmatprep.subr.mxu0 0.0
      %2078 = vmatpush1.msra.mxu0 0.0
      %2079 = vmatprep.subr.mxu0 0.0
      %2080 = vmatpush1.msra.mxu0 0.0
      %2081 = vmatprep.subr.mxu0 0.0
      %2082 = vmatpush1.msra.mxu0 0.0
      %2083 = vmatprep.subr.mxu0 0.0
      %2084 = vmatpush1.msra.mxu0 0.0
      %2085 = vmatprep.subr.mxu0 0.0
      %2086 = vmatpush1.msra.mxu0 0.0
      %2087 = vmatprep.subr.mxu0 0.0
      %2088 = vmatpush1.msra.mxu0 0.0
      %2089 = vmatprep.subr.mxu0 0.0
      %2090 = vmatpush1.msra.mxu0 0.0
      %2091 = vmatprep.subr.mxu0 0.0
      %2092 = vmatpush1.msra.mxu0 0.0
      %2093 = vmatprep.subr.mxu0 0.0
      %2094 = vmatpush1.msra.mxu0 0.0
      %2095 = vmatprep.subr.mxu0 0.0
      %2096 = vmatpush1.msra.mxu0 0.0
      %2097 = vmatprep.subr.mxu0 0.0
      %2098 = vmatpush1.msra.mxu0 0.0
      %2099 = vmatprep.subr.mxu0 0.0
      %2100 = vmatpush1.msra.mxu0 0.0
      %2101 = vmatprep.subr.mxu0 0.0
      %2102 = vmatpush1.msra.mxu0 0.0
      %2103 = vmatprep.subr.mxu0 0.0
      %2104 = vmatpush1.msra.mxu0 0.0
      %2105 = vmatprep.subr.mxu0 0.0
      %2106 = vmatpush1.msra.mxu0 0.0
      %2107 = vmatprep.subr.mxu0 0.0
      %2108 = vmatpush1.msra.mxu0 0.0
      %2109 = vmatprep.subr.mxu0 0.0
      %2110 = vmatpush1.msra.mxu0 0.0
      %2111 = vmatprep.subr.mxu0 0.0
      %2112 = vmatpush1.msra.mxu0 0.0
      %2113 = vmatprep.mubr.f32.mxu0 0.0
      %2114 = vmatmul.mubr.f32.gmra.mrb[0].mxu0 %v2038
      %v2115 = vpop.f32.mrb[0].mxu0
      %v2116 = vadd.f32 0.0, %v2115
      %v2117 = vpop.f32.mrb[0].mxu0
      %v2118 = vadd.f32 0.0, %v2117
      %2119 = vmatprep.mubr.f32.mxu0 0.0
      %2120 = vmatmul.mubr.f32.gmra.mrb[0].mxu0 %v2041
      %v2121 = vpop.f32.mrb[0].mxu0
      %v2122 = vadd.f32 0.0, %v2121
      %v2123 = vpop.f32.mrb[0].mxu0
      %v2124 = vadd.f32 0.0, %v2123
      %2125 = vmatprep.mubr.f32.mxu0 0.0
      %2126 = vmatmul.mubr.f32.gmra.mrb[0].mxu0 %v2044
      %v2127 = vpop.f32.mrb[0].mxu0
      %v2128 = vadd.f32 0.0, %v2127
      %v2129 = vpop.f32.mrb[0].mxu0
      %v2130 = vadd.f32 0.0, %v2129
      %2131 = vmatprep.mubr.f32.mxu0 0.0
      %2132 = vmatmul.mubr.f32.gmra.mrb[0].mxu0 %v2047
      %v2133 = vpop.f32.mrb[0].mxu0
      %v2134 = vadd.f32 0.0, %v2133
      %v2135 = vpop.f32.mrb[0].mxu0
      %v2136 = vadd.f32 0.0, %v2135
      %2137 = vdwg.mxu0
      %v2138 = vadd.f32 %v1984, %v2116
      %v2139 = vadd.f32 %v1985, %v2118
      %v2140 = vadd.f32 %v1986, %v2122
      %v2141 = vadd.f32 %v1987, %v2124
      %v2142 = vadd.f32 %v1988, %v2128
      %v2143 = vadd.f32 %v1989, %v2130
      %v2144 = vadd.f32 %v1990, %v2134
      %v2145 = vadd.f32 %v1991, %v2136
      %2146 = vrot.lane.b32.xlu0 %v1262, 113
      %v2147 = vpop.permute.xlu0 %2146
      %2148 = vrot.lane.b32.xlu0 %v1263, 113
      %v2149 = vpop.permute.xlu0 %2148
      %2150 = vrot.lane.b32.xlu0 %v1264, 113
      %v2151 = vpop.permute.xlu0 %2150
      %2152 = vrot.lane.b32.xlu0 %v1265, 113
      %v2153 = vpop.permute.xlu0 %2152
      %2154 = vrot.lane.b32.xlu0 %v1266, 113
      %v2155 = vpop.permute.xlu0 %2154
      %2156 = vrot.lane.b32.xlu0 %v1267, 113
      %v2157 = vpop.permute.xlu0 %2156
      %2158 = vrot.lane.b32.xlu0 %v1268, 113
      %v2159 = vpop.permute.xlu0 %2158
      %2160 = vrot.lane.b32.xlu0 %v1269, 113
      %v2161 = vpop.permute.xlu0 %2160
      %v2162 = vsel %vm911, %v2147, %v2149
      %v2163 = vsel %vm911, %v2151, %v2153
      %v2164 = vsel %vm911, %v2155, %v2157
      %v2165 = vsel %vm911, %v2159, %v2161
      %v2174 = vsel %vm911, %v2149, 0.0
      %v2175 = vsel %vm911, %v2153, 0.0
      %v2176 = vsel %vm911, %v2157, 0.0
      %v2177 = vsel %vm911, %v2161, 0.0
      %v2178 = vmul.f32 %v2162, %v922
      %v2179 = vmul.f32 %v2174, %v926
      %v2180 = vmul.f32 %v2163, %v922
      %v2181 = vmul.f32 %v2175, %v926
      %v2182 = vmul.f32 %v2164, %v922
      %v2183 = vmul.f32 %v2176, %v926
      %v2184 = vmul.f32 %v2165, %v922
      %v2185 = vmul.f32 %v2177, %v926
      %s2186 = scalar_lea.vmem %s3, 192
      %v2187 = vld [vmem:[%s2186] sm:$0xff]
      %v2188 = vld [vmem:[%s2186 + $0x8] sm:$0xff]
      %v2189 = vld [vmem:[%s2186 + $0x10] sm:$0xff]
      %v2190 = vld [vmem:[%s2186 + $0x18] sm:$0xff]
      %v2192 = vsel %vm1367, %v2187, 0
      %v2195 = vsel %vm1367, %v2188, 0
      %v2198 = vsel %vm1367, %v2189, 0
      %v2201 = vsel %vm1367, %v2190, 0
      %2203 = vmatprep.subr.mxu0 %v2179
      %2204 = vmatpush1.msra.mxu0 %v2178
      %2205 = vmatprep.subr.mxu0 %v2181
      %2206 = vmatpush1.msra.mxu0 %v2180
      %2207 = vmatprep.subr.mxu0 %v2183
      %2208 = vmatpush1.msra.mxu0 %v2182
      %2209 = vmatprep.subr.mxu0 %v2185
      %2210 = vmatpush1.msra.mxu0 %v2184
      %2211 = vmatprep.subr.mxu0 0.0
      %2212 = vmatpush1.msra.mxu0 0.0
      %2213 = vmatprep.subr.mxu0 0.0
      %2214 = vmatpush1.msra.mxu0 0.0
      %2215 = vmatprep.subr.mxu0 0.0
      %2216 = vmatpush1.msra.mxu0 0.0
      %2217 = vmatprep.subr.mxu0 0.0
      %2218 = vmatpush1.msra.mxu0 0.0
      %2219 = vmatprep.subr.mxu0 0.0
      %2220 = vmatpush1.msra.mxu0 0.0
      %2221 = vmatprep.subr.mxu0 0.0
      %2222 = vmatpush1.msra.mxu0 0.0
      %2223 = vmatprep.subr.mxu0 0.0
      %2224 = vmatpush1.msra.mxu0 0.0
      %2225 = vmatprep.subr.mxu0 0.0
      %2226 = vmatpush1.msra.mxu0 0.0
      %2227 = vmatprep.subr.mxu0 0.0
      %2228 = vmatpush1.msra.mxu0 0.0
      %2229 = vmatprep.subr.mxu0 0.0
      %2230 = vmatpush1.msra.mxu0 0.0
      %2231 = vmatprep.subr.mxu0 0.0
      %2232 = vmatpush1.msra.mxu0 0.0
      %2233 = vmatprep.subr.mxu0 0.0
      %2234 = vmatpush1.msra.mxu0 0.0
      %2235 = vmatprep.subr.mxu0 0.0
      %2236 = vmatpush1.msra.mxu0 0.0
      %2237 = vmatprep.subr.mxu0 0.0
      %2238 = vmatpush1.msra.mxu0 0.0
      %2239 = vmatprep.subr.mxu0 0.0
      %2240 = vmatpush1.msra.mxu0 0.0
      %2241 = vmatprep.subr.mxu0 0.0
      %2242 = vmatpush1.msra.mxu0 0.0
      %2243 = vmatprep.subr.mxu0 0.0
      %2244 = vmatpush1.msra.mxu0 0.0
      %2245 = vmatprep.subr.mxu0 0.0
      %2246 = vmatpush1.msra.mxu0 0.0
      %2247 = vmatprep.subr.mxu0 0.0
      %2248 = vmatpush1.msra.mxu0 0.0
      %2249 = vmatprep.subr.mxu0 0.0
      %2250 = vmatpush1.msra.mxu0 0.0
      %2251 = vmatprep.subr.mxu0 0.0
      %2252 = vmatpush1.msra.mxu0 0.0
      %2253 = vmatprep.subr.mxu0 0.0
      %2254 = vmatpush1.msra.mxu0 0.0
      %2255 = vmatprep.subr.mxu0 0.0
      %2256 = vmatpush1.msra.mxu0 0.0
      %2257 = vmatprep.subr.mxu0 0.0
      %2258 = vmatpush1.msra.mxu0 0.0
      %2259 = vmatprep.subr.mxu0 0.0
      %2260 = vmatpush1.msra.mxu0 0.0
      %2261 = vmatprep.subr.mxu0 0.0
      %2262 = vmatpush1.msra.mxu0 0.0
      %2263 = vmatprep.subr.mxu0 0.0
      %2264 = vmatpush1.msra.mxu0 0.0
      %2265 = vmatprep.subr.mxu0 0.0
      %2266 = vmatpush1.msra.mxu0 0.0
      %2267 = vmatprep.mubr.f32.mxu0 0.0
      %2268 = vmatmul.mubr.f32.gmra.mrb[0].mxu0 %v2192
      %v2269 = vpop.f32.mrb[0].mxu0
      %v2270 = vadd.f32 0.0, %v2269
      %v2271 = vpop.f32.mrb[0].mxu0
      %v2272 = vadd.f32 0.0, %v2271
      %2273 = vmatprep.mubr.f32.mxu0 0.0
      %2274 = vmatmul.mubr.f32.gmra.mrb[0].mxu0 %v2195
      %v2275 = vpop.f32.mrb[0].mxu0
      %v2276 = vadd.f32 0.0, %v2275
      %v2277 = vpop.f32.mrb[0].mxu0
      %v2278 = vadd.f32 0.0, %v2277
      %2279 = vmatprep.mubr.f32.mxu0 0.0
      %2280 = vmatmul.mubr.f32.gmra.mrb[0].mxu0 %v2198
      %v2281 = vpop.f32.mrb[0].mxu0
      %v2282 = vadd.f32 0.0, %v2281
      %v2283 = vpop.f32.mrb[0].mxu0
      %v2284 = vadd.f32 0.0, %v2283
      %2285 = vmatprep.mubr.f32.mxu0 0.0
      %2286 = vmatmul.mubr.f32.gmra.mrb[0].mxu0 %v2201
      %v2287 = vpop.f32.mrb[0].mxu0
      %v2288 = vadd.f32 0.0, %v2287
      %v2289 = vpop.f32.mrb[0].mxu0
      %v2290 = vadd.f32 0.0, %v2289
      %2291 = vdwg.mxu0
      %v2292 = vadd.f32 %v2138, %v2270
      %v2293 = vadd.f32 %v2139, %v2272
      %v2294 = vadd.f32 %v2140, %v2276
      %v2295 = vadd.f32 %v2141, %v2278
      %v2296 = vadd.f32 %v2142, %v2282
      %v2297 = vadd.f32 %v2143, %v2284
      %v2298 = vadd.f32 %v2144, %v2288
      %v2299 = vadd.f32 %v2145, %v2290
      %2300 = vrot.lane.b32.xlu0 %v1262, 112
      %v2301 = vpop.permute.xlu0 %2300
      %2302 = vrot.lane.b32.xlu0 %v1263, 112
      %v2303 = vpop.permute.xlu0 %2302
      %2304 = vrot.lane.b32.xlu0 %v1264, 112
      %v2305 = vpop.permute.xlu0 %2304
      %2306 = vrot.lane.b32.xlu0 %v1265, 112
      %v2307 = vpop.permute.xlu0 %2306
      %2308 = vrot.lane.b32.xlu0 %v1266, 112
      %v2309 = vpop.permute.xlu0 %2308
      %2310 = vrot.lane.b32.xlu0 %v1267, 112
      %v2311 = vpop.permute.xlu0 %2310
      %2312 = vrot.lane.b32.xlu0 %v1268, 112
      %v2313 = vpop.permute.xlu0 %2312
      %2314 = vrot.lane.b32.xlu0 %v1269, 112
      %v2315 = vpop.permute.xlu0 %2314
      %v2316 = vsel %vm1024, %v2301, %v2303
      %v2317 = vsel %vm1024, %v2305, %v2307
      %v2318 = vsel %vm1024, %v2309, %v2311
      %v2319 = vsel %vm1024, %v2313, %v2315
      %v2328 = vsel %vm1024, %v2303, 0.0
      %v2329 = vsel %vm1024, %v2307, 0.0
      %v2330 = vsel %vm1024, %v2311, 0.0
      %v2331 = vsel %vm1024, %v2315, 0.0
      %v2332 = vmul.f32 %v2316, %v1035
      %v2333 = vmul.f32 %v2328, %v1039
      %v2334 = vmul.f32 %v2317, %v1035
      %v2335 = vmul.f32 %v2329, %v1039
      %v2336 = vmul.f32 %v2318, %v1035
      %v2337 = vmul.f32 %v2330, %v1039
      %v2338 = vmul.f32 %v2319, %v1035
      %v2339 = vmul.f32 %v2331, %v1039
      %s2340 = scalar_lea.vmem %s3, 224
      %v2341 = vld [vmem:[%s2340] sm:$0xff]
      %v2342 = vld [vmem:[%s2340 + $0x8] sm:$0xff]
      %v2343 = vld [vmem:[%s2340 + $0x10] sm:$0xff]
      %v2344 = vld [vmem:[%s2340 + $0x18] sm:$0xff]
      %v2346 = vsel %vm1367, %v2341, 0
      %v2349 = vsel %vm1367, %v2342, 0
      %v2352 = vsel %vm1367, %v2343, 0
      %v2355 = vsel %vm1367, %v2344, 0
      %2357 = vmatprep.subr.mxu0 %v2333
      %2358 = vmatpush1.msra.mxu0 %v2332
      %2359 = vmatprep.subr.mxu0 %v2335
      %2360 = vmatpush1.msra.mxu0 %v2334
      %2361 = vmatprep.subr.mxu0 %v2337
      %2362 = vmatpush1.msra.mxu0 %v2336
      %2363 = vmatprep.subr.mxu0 %v2339
      %2364 = vmatpush1.msra.mxu0 %v2338
      %2365 = vmatprep.subr.mxu0 0.0
      %2366 = vmatpush1.msra.mxu0 0.0
      %2367 = vmatprep.subr.mxu0 0.0
      %2368 = vmatpush1.msra.mxu0 0.0
      %2369 = vmatprep.subr.mxu0 0.0
      %2370 = vmatpush1.msra.mxu0 0.0
      %2371 = vmatprep.subr.mxu0 0.0
      %2372 = vmatpush1.msra.mxu0 0.0
      %2373 = vmatprep.subr.mxu0 0.0
      %2374 = vmatpush1.msra.mxu0 0.0
      %2375 = vmatprep.subr.mxu0 0.0
      %2376 = vmatpush1.msra.mxu0 0.0
      %2377 = vmatprep.subr.mxu0 0.0
      %2378 = vmatpush1.msra.mxu0 0.0
      %2379 = vmatprep.subr.mxu0 0.0
      %2380 = vmatpush1.msra.mxu0 0.0
      %2381 = vmatprep.subr.mxu0 0.0
      %2382 = vmatpush1.msra.mxu0 0.0
      %2383 = vmatprep.subr.mxu0 0.0
      %2384 = vmatpush1.msra.mxu0 0.0
      %2385 = vmatprep.subr.mxu0 0.0
      %2386 = vmatpush1.msra.mxu0 0.0
      %2387 = vmatprep.subr.mxu0 0.0
      %2388 = vmatpush1.msra.mxu0 0.0
      %2389 = vmatprep.subr.mxu0 0.0
      %2390 = vmatpush1.msra.mxu0 0.0
      %2391 = vmatprep.subr.mxu0 0.0
      %2392 = vmatpush1.msra.mxu0 0.0
      %2393 = vmatprep.subr.mxu0 0.0
      %2394 = vmatpush1.msra.mxu0 0.0
      %2395 = vmatprep.subr.mxu0 0.0
      %2396 = vmatpush1.msra.mxu0 0.0
      %2397 = vmatprep.subr.mxu0 0.0
      %2398 = vmatpush1.msra.mxu0 0.0
      %2399 = vmatprep.subr.mxu0 0.0
      %2400 = vmatpush1.msra.mxu0 0.0
      %2401 = vmatprep.subr.mxu0 0.0
      %2402 = vmatpush1.msra.mxu0 0.0
      %2403 = vmatprep.subr.mxu0 0.0
      %2404 = vmatpush1.msra.mxu0 0.0
      %2405 = vmatprep.subr.mxu0 0.0
      %2406 = vmatpush1.msra.mxu0 0.0
      %2407 = vmatprep.subr.mxu0 0.0
      %2408 = vmatpush1.msra.mxu0 0.0
      %2409 = vmatprep.subr.mxu0 0.0
      %2410 = vmatpush1.msra.mxu0 0.0
      %2411 = vmatprep.subr.mxu0 0.0
      %2412 = vmatpush1.msra.mxu0 0.0
      %2413 = vmatprep.subr.mxu0 0.0
      %2414 = vmatpush1.msra.mxu0 0.0
      %2415 = vmatprep.subr.mxu0 0.0
      %2416 = vmatpush1.msra.mxu0 0.0
      %2417 = vmatprep.subr.mxu0 0.0
      %2418 = vmatpush1.msra.mxu0 0.0
      %2419 = vmatprep.subr.mxu0 0.0
      %2420 = vmatpush1.msra.mxu0 0.0
      %2421 = vmatprep.mubr.f32.mxu0 0.0
      %2422 = vmatmul.mubr.f32.gmra.mrb[0].mxu0 %v2346
      %v2423 = vpop.f32.mrb[0].mxu0
      %v2424 = vadd.f32 0.0, %v2423
      %v2425 = vpop.f32.mrb[0].mxu0
      %v2426 = vadd.f32 0.0, %v2425
      %2427 = vmatprep.mubr.f32.mxu0 0.0
      %2428 = vmatmul.mubr.f32.gmra.mrb[0].mxu0 %v2349
      %v2429 = vpop.f32.mrb[0].mxu0
      %v2430 = vadd.f32 0.0, %v2429
      %v2431 = vpop.f32.mrb[0].mxu0
      %v2432 = vadd.f32 0.0, %v2431
      %2433 = vmatprep.mubr.f32.mxu0 0.0
      %2434 = vmatmul.mubr.f32.gmra.mrb[0].mxu0 %v2352
      %v2435 = vpop.f32.mrb[0].mxu0
      %v2436 = vadd.f32 0.0, %v2435
      %v2437 = vpop.f32.mrb[0].mxu0
      %v2438 = vadd.f32 0.0, %v2437
      %2439 = vmatprep.mubr.f32.mxu0 0.0
      %2440 = vmatmul.mubr.f32.gmra.mrb[0].mxu0 %v2355
      %v2441 = vpop.f32.mrb[0].mxu0
      %v2442 = vadd.f32 0.0, %v2441
      %v2443 = vpop.f32.mrb[0].mxu0
      %v2444 = vadd.f32 0.0, %v2443
      %2445 = vdwg.mxu0
      %v2446 = vadd.f32 %v2292, %v2424
      %v2447 = vadd.f32 %v2293, %v2426
      %v2448 = vadd.f32 %v2294, %v2430
      %v2449 = vadd.f32 %v2295, %v2432
      %v2450 = vadd.f32 %v2296, %v2436
      %v2451 = vadd.f32 %v2297, %v2438
      %v2452 = vadd.f32 %v2298, %v2442
      %v2453 = vadd.f32 %v2299, %v2444
      %2454 = vrot.lane.b32.xlu0 %v1262, 111
      %v2455 = vpop.permute.xlu0 %2454
      %2456 = vrot.lane.b32.xlu0 %v1263, 111
      %v2457 = vpop.permute.xlu0 %2456
      %2458 = vrot.lane.b32.xlu0 %v1264, 111
      %v2459 = vpop.permute.xlu0 %2458
      %2460 = vrot.lane.b32.xlu0 %v1265, 111
      %v2461 = vpop.permute.xlu0 %2460
      %2462 = vrot.lane.b32.xlu0 %v1266, 111
      %v2463 = vpop.permute.xlu0 %2462
      %2464 = vrot.lane.b32.xlu0 %v1267, 111
      %v2465 = vpop.permute.xlu0 %2464
      %2466 = vrot.lane.b32.xlu0 %v1268, 111
      %v2467 = vpop.permute.xlu0 %2466
      %2468 = vrot.lane.b32.xlu0 %v1269, 111
      %v2469 = vpop.permute.xlu0 %2468
      %v2470 = vsel %vm1137, %v2455, %v2457
      %v2471 = vsel %vm1137, %v2459, %v2461
      %v2472 = vsel %vm1137, %v2463, %v2465
      %v2473 = vsel %vm1137, %v2467, %v2469
      %v2482 = vsel %vm1137, %v2457, 0.0
      %v2483 = vsel %vm1137, %v2461, 0.0
      %v2484 = vsel %vm1137, %v2465, 0.0
      %v2485 = vsel %vm1137, %v2469, 0.0
      %v2486 = vmul.f32 %v2470, %v1148
      %v2487 = vmul.f32 %v2482, %v1152
      %v2488 = vmul.f32 %v2471, %v1148
      %v2489 = vmul.f32 %v2483, %v1152
      %v2490 = vmul.f32 %v2472, %v1148
      %v2491 = vmul.f32 %v2484, %v1152
      %v2492 = vmul.f32 %v2473, %v1148
      %v2493 = vmul.f32 %v2485, %v1152
      %s2494 = scalar_lea.vmem %s3, 256
      %v2495 = vld [vmem:[%s2494] sm:$0xff]
      %v2496 = vld [vmem:[%s2494 + $0x8] sm:$0xff]
      %v2497 = vld [vmem:[%s2494 + $0x10] sm:$0xff]
      %v2498 = vld [vmem:[%s2494 + $0x18] sm:$0xff]
      %v2500 = vsel %vm1367, %v2495, 0
      %v2503 = vsel %vm1367, %v2496, 0
      %v2506 = vsel %vm1367, %v2497, 0
      %v2509 = vsel %vm1367, %v2498, 0
      %2511 = vmatprep.subr.mxu0 %v2487
      %2512 = vmatpush1.msra.mxu0 %v2486
      %2513 = vmatprep.subr.mxu0 %v2489
      %2514 = vmatpush1.msra.mxu0 %v2488
      %2515 = vmatprep.subr.mxu0 %v2491
      %2516 = vmatpush1.msra.mxu0 %v2490
      %2517 = vmatprep.subr.mxu0 %v2493
      %2518 = vmatpush1.msra.mxu0 %v2492
      %2519 = vmatprep.subr.mxu0 0.0
      %2520 = vmatpush1.msra.mxu0 0.0
      %2521 = vmatprep.subr.mxu0 0.0
      %2522 = vmatpush1.msra.mxu0 0.0
      %2523 = vmatprep.subr.mxu0 0.0
      %2524 = vmatpush1.msra.mxu0 0.0
      %2525 = vmatprep.subr.mxu0 0.0
      %2526 = vmatpush1.msra.mxu0 0.0
      %2527 = vmatprep.subr.mxu0 0.0
      %2528 = vmatpush1.msra.mxu0 0.0
      %2529 = vmatprep.subr.mxu0 0.0
      %2530 = vmatpush1.msra.mxu0 0.0
      %2531 = vmatprep.subr.mxu0 0.0
      %2532 = vmatpush1.msra.mxu0 0.0
      %2533 = vmatprep.subr.mxu0 0.0
      %2534 = vmatpush1.msra.mxu0 0.0
      %2535 = vmatprep.subr.mxu0 0.0
      %2536 = vmatpush1.msra.mxu0 0.0
      %2537 = vmatprep.subr.mxu0 0.0
      %2538 = vmatpush1.msra.mxu0 0.0
      %2539 = vmatprep.subr.mxu0 0.0
      %2540 = vmatpush1.msra.mxu0 0.0
      %2541 = vmatprep.subr.mxu0 0.0
      %2542 = vmatpush1.msra.mxu0 0.0
      %2543 = vmatprep.subr.mxu0 0.0
      %2544 = vmatpush1.msra.mxu0 0.0
      %2545 = vmatprep.subr.mxu0 0.0
      %2546 = vmatpush1.msra.mxu0 0.0
      %2547 = vmatprep.subr.mxu0 0.0
      %2548 = vmatpush1.msra.mxu0 0.0
      %2549 = vmatprep.subr.mxu0 0.0
      %2550 = vmatpush1.msra.mxu0 0.0
      %2551 = vmatprep.subr.mxu0 0.0
      %2552 = vmatpush1.msra.mxu0 0.0
      %2553 = vmatprep.subr.mxu0 0.0
      %2554 = vmatpush1.msra.mxu0 0.0
      %2555 = vmatprep.subr.mxu0 0.0
      %2556 = vmatpush1.msra.mxu0 0.0
      %2557 = vmatprep.subr.mxu0 0.0
      %2558 = vmatpush1.msra.mxu0 0.0
      %2559 = vmatprep.subr.mxu0 0.0
      %2560 = vmatpush1.msra.mxu0 0.0
      %2561 = vmatprep.subr.mxu0 0.0
      %2562 = vmatpush1.msra.mxu0 0.0
      %2563 = vmatprep.subr.mxu0 0.0
      %2564 = vmatpush1.msra.mxu0 0.0
      %2565 = vmatprep.subr.mxu0 0.0
      %2566 = vmatpush1.msra.mxu0 0.0
      %2567 = vmatprep.subr.mxu0 0.0
      %2568 = vmatpush1.msra.mxu0 0.0
      %2569 = vmatprep.subr.mxu0 0.0
      %2570 = vmatpush1.msra.mxu0 0.0
      %2571 = vmatprep.subr.mxu0 0.0
      %2572 = vmatpush1.msra.mxu0 0.0
      %2573 = vmatprep.subr.mxu0 0.0
      %2574 = vmatpush1.msra.mxu0 0.0
      %2575 = vmatprep.mubr.f32.mxu0 0.0
      %2576 = vmatmul.mubr.f32.gmra.mrb[0].mxu0 %v2500
      %v2577 = vpop.f32.mrb[0].mxu0
      %v2578 = vadd.f32 0.0, %v2577
      %v2579 = vpop.f32.mrb[0].mxu0
      %v2580 = vadd.f32 0.0, %v2579
      %2581 = vmatprep.mubr.f32.mxu0 0.0
      %2582 = vmatmul.mubr.f32.gmra.mrb[0].mxu0 %v2503
      %v2583 = vpop.f32.mrb[0].mxu0
      %v2584 = vadd.f32 0.0, %v2583
      %v2585 = vpop.f32.mrb[0].mxu0
      %v2586 = vadd.f32 0.0, %v2585
      %2587 = vmatprep.mubr.f32.mxu0 0.0
      %2588 = vmatmul.mubr.f32.gmra.mrb[0].mxu0 %v2506
      %v2589 = vpop.f32.mrb[0].mxu0
      %v2590 = vadd.f32 0.0, %v2589
      %v2591 = vpop.f32.mrb[0].mxu0
      %v2592 = vadd.f32 0.0, %v2591
      %2593 = vmatprep.mubr.f32.mxu0 0.0
      %2594 = vmatmul.mubr.f32.gmra.mrb[0].mxu0 %v2509
      %v2595 = vpop.f32.mrb[0].mxu0
      %v2596 = vadd.f32 0.0, %v2595
      %v2597 = vpop.f32.mrb[0].mxu0
      %v2598 = vadd.f32 0.0, %v2597
      %2599 = vdwg.mxu0
      %v2600 = vadd.f32 %v2446, %v2578
      %v2601 = vadd.f32 %v2447, %v2580
      %v2602 = vadd.f32 %v2448, %v2584
      %v2603 = vadd.f32 %v2449, %v2586
      %v2604 = vadd.f32 %v2450, %v2590
      %v2605 = vadd.f32 %v2451, %v2592
      %v2606 = vadd.f32 %v2452, %v2596
      %v2607 = vadd.f32 %v2453, %v2598
      %vm2608 = vcmp.ge.f32.partialorder %v2600, 0.0
      %vm2609 = vcmp.ge.f32.partialorder %v2601, 0.0
      %vm2610 = vcmp.ge.f32.partialorder %v2602, 0.0
      %vm2611 = vcmp.ge.f32.partialorder %v2603, 0.0
      %vm2612 = vcmp.ge.f32.partialorder %v2604, 0.0
      %vm2613 = vcmp.ge.f32.partialorder %v2605, 0.0
      %vm2614 = vcmp.ge.f32.partialorder %v2606, 0.0
      %vm2615 = vcmp.ge.f32.partialorder %v2607, 0.0
      %v2616 = vmul.f32 %v2600, 0.01
      %v2617 = vmul.f32 %v2601, 0.01
      %v2618 = vmul.f32 %v2602, 0.01
      %v2619 = vmul.f32 %v2603, 0.01
      %v2620 = vmul.f32 %v2604, 0.01
      %v2621 = vmul.f32 %v2605, 0.01
      %v2622 = vmul.f32 %v2606, 0.01
      %v2623 = vmul.f32 %v2607, 0.01
      %v2624 = vsel %vm2608, %v2600, %v2616
      %v2625 = vsel %vm2609, %v2601, %v2617
      %v2626 = vsel %vm2610, %v2602, %v2618
      %v2627 = vsel %vm2611, %v2603, %v2619
      %v2628 = vsel %vm2612, %v2604, %v2620
      %v2629 = vsel %vm2613, %v2605, %v2621
      %v2630 = vsel %vm2614, %v2606, %v2622
      %v2631 = vsel %vm2615, %v2607, %v2623
      %2640 = vrot.lane.b32.xlu0 %v2624, 17
      %v2641 = vpop.permute.xlu0 %2640
      %2642 = vrot.lane.b32.xlu0 %v2625, 17
      %v2643 = vpop.permute.xlu0 %2642
      %2644 = vrot.lane.b32.xlu0 %v2626, 17
      %v2645 = vpop.permute.xlu0 %2644
      %2646 = vrot.lane.b32.xlu0 %v2627, 17
      %v2647 = vpop.permute.xlu0 %2646
      %2648 = vrot.lane.b32.xlu0 %v2628, 17
      %v2649 = vpop.permute.xlu0 %2648
      %2650 = vrot.lane.b32.xlu0 %v2629, 17
      %v2651 = vpop.permute.xlu0 %2650
      %2652 = vrot.lane.b32.xlu0 %v2630, 17
      %v2653 = vpop.permute.xlu0 %2652
      %2654 = vrot.lane.b32.xlu0 %v2631, 17
      %v2655 = vpop.permute.xlu0 %2654
      %v2656 = vsel %vm239, %v2641, %v2643
      %v2657 = vsel %vm239, %v2645, %v2647
      %v2658 = vsel %vm239, %v2649, %v2651
      %v2659 = vsel %vm239, %v2653, %v2655
      %v2668 = vsel %vm239, 0.0, %v2641
      %v2669 = vsel %vm239, 0.0, %v2645
      %v2670 = vsel %vm239, 0.0, %v2649
      %v2671 = vsel %vm239, 0.0, %v2653
      %v2672 = vmul.f32 %v2668, %v249
      %v2673 = vmul.f32 %v2656, %v253
      %v2674 = vmul.f32 %v2669, %v249
      %v2675 = vmul.f32 %v2657, %v253
      %v2676 = vmul.f32 %v2670, %v249
      %v2677 = vmul.f32 %v2658, %v253
      %v2678 = vmul.f32 %v2671, %v249
      %v2679 = vmul.f32 %v2659, %v253
      %v2680 = vld [vmem:[%s4] sm:$0x3]
      %2681 = vrot.lane.b32.xlu0 %v2624, 16
      %v2682 = vpop.permute.xlu0 %2681
      %2683 = vrot.lane.b32.xlu0 %v2625, 16
      %v2684 = vpop.permute.xlu0 %2683
      %2685 = vrot.lane.b32.xlu0 %v2626, 16
      %v2686 = vpop.permute.xlu0 %2685
      %2687 = vrot.lane.b32.xlu0 %v2627, 16
      %v2688 = vpop.permute.xlu0 %2687
      %2689 = vrot.lane.b32.xlu0 %v2628, 16
      %v2690 = vpop.permute.xlu0 %2689
      %2691 = vrot.lane.b32.xlu0 %v2629, 16
      %v2692 = vpop.permute.xlu0 %2691
      %2693 = vrot.lane.b32.xlu0 %v2630, 16
      %v2694 = vpop.permute.xlu0 %2693
      %2695 = vrot.lane.b32.xlu0 %v2631, 16
      %v2696 = vpop.permute.xlu0 %2695
      %v2697 = vsel %vm350, %v2682, %v2684
      %v2698 = vsel %vm350, %v2686, %v2688
      %v2699 = vsel %vm350, %v2690, %v2692
      %v2700 = vsel %vm350, %v2694, %v2696
      %v2709 = vsel %vm350, 0.0, %v2682
      %v2710 = vsel %vm350, 0.0, %v2686
      %v2711 = vsel %vm350, 0.0, %v2690
      %v2712 = vsel %vm350, 0.0, %v2694
      %v2713 = vmul.f32 %v2709, %v361
      %v2714 = vmul.f32 %v2697, %v365
      %v2715 = vmul.f32 %v2710, %v361
      %v2716 = vmul.f32 %v2698, %v365
      %v2717 = vmul.f32 %v2711, %v361
      %v2718 = vmul.f32 %v2699, %v365
      %v2719 = vmul.f32 %v2712, %v361
      %v2720 = vmul.f32 %v2700, %v365
      %s2721 = scalar_lea.vmem %s4, 2
      %v2722 = vld [vmem:[%s2721] sm:$0x3]
      %v2724 = vsel %vm1367, %v2722, 0
      %2726 = vmatprep.subr.mxu0 %v2714
      %2727 = vmatpush1.msra.mxu0 %v2713
      %2728 = vmatprep.subr.mxu0 %v2716
      %2729 = vmatpush1.msra.mxu0 %v2715
      %2730 = vmatprep.subr.mxu0 %v2718
      %2731 = vmatpush1.msra.mxu0 %v2717
      %2732 = vmatprep.subr.mxu0 %v2720
      %2733 = vmatpush1.msra.mxu0 %v2719
      %2734 = vmatprep.subr.mxu0 0.0
      %2735 = vmatpush1.msra.mxu0 0.0
      %2736 = vmatprep.subr.mxu0 0.0
      %2737 = vmatpush1.msra.mxu0 0.0
      %2738 = vmatprep.subr.mxu0 0.0
      %2739 = vmatpush1.msra.mxu0 0.0
      %2740 = vmatprep.subr.mxu0 0.0
      %2741 = vmatpush1.msra.mxu0 0.0
      %2742 = vmatprep.subr.mxu0 0.0
      %2743 = vmatpush1.msra.mxu0 0.0
      %2744 = vmatprep.subr.mxu0 0.0
      %2745 = vmatpush1.msra.mxu0 0.0
      %2746 = vmatprep.subr.mxu0 0.0
      %2747 = vmatpush1.msra.mxu0 0.0
      %2748 = vmatprep.subr.mxu0 0.0
      %2749 = vmatpush1.msra.mxu0 0.0
      %2750 = vmatprep.subr.mxu0 0.0
      %2751 = vmatpush1.msra.mxu0 0.0
      %2752 = vmatprep.subr.mxu0 0.0
      %2753 = vmatpush1.msra.mxu0 0.0
      %2754 = vmatprep.subr.mxu0 0.0
      %2755 = vmatpush1.msra.mxu0 0.0
      %2756 = vmatprep.subr.mxu0 0.0
      %2757 = vmatpush1.msra.mxu0 0.0
      %2758 = vmatprep.subr.mxu0 0.0
      %2759 = vmatpush1.msra.mxu0 0.0
      %2760 = vmatprep.subr.mxu0 0.0
      %2761 = vmatpush1.msra.mxu0 0.0
      %2762 = vmatprep.subr.mxu0 0.0
      %2763 = vmatpush1.msra.mxu0 0.0
      %2764 = vmatprep.subr.mxu0 0.0
      %2765 = vmatpush1.msra.mxu0 0.0
      %2766 = vmatprep.subr.mxu0 0.0
      %2767 = vmatpush1.msra.mxu0 0.0
      %2768 = vmatprep.subr.mxu0 0.0
      %2769 = vmatpush1.msra.mxu0 0.0
      %2770 = vmatprep.subr.mxu0 0.0
      %2771 = vmatpush1.msra.mxu0 0.0
      %2772 = vmatprep.subr.mxu0 0.0
      %2773 = vmatpush1.msra.mxu0 0.0
      %2774 = vmatprep.subr.mxu0 0.0
      %2775 = vmatpush1.msra.mxu0 0.0
      %2776 = vmatprep.subr.mxu0 0.0
      %2777 = vmatpush1.msra.mxu0 0.0
      %2778 = vmatprep.subr.mxu0 0.0
      %2779 = vmatpush1.msra.mxu0 0.0
      %2780 = vmatprep.subr.mxu0 0.0
      %2781 = vmatpush1.msra.mxu0 0.0
      %2782 = vmatprep.subr.mxu0 0.0
      %2783 = vmatpush1.msra.mxu0 0.0
      %2784 = vmatprep.subr.mxu0 0.0
      %2785 = vmatpush1.msra.mxu0 0.0
      %2786 = vmatprep.subr.mxu0 0.0
      %2787 = vmatpush1.msra.mxu0 0.0
      %2788 = vmatprep.subr.mxu0 0.0
      %2789 = vmatpush1.msra.mxu0 0.0
      %2790 = vmatprep.mubr.f32.mxu0 0.0
      %2791 = vmatmul.mubr.f32.gmra.mrb[0].mxu0 %v2724
      %v2792 = vpop.f32.mrb[0].mxu0
      %v2793 = vadd.f32 0.0, %v2792
      %v2794 = vpop.f32.mrb[0].mxu0
      %v2795 = vadd.f32 0.0, %v2794
      %2796 = vdwg.mxu0
      %v2798 = vsel %vm1367, %v2680, 0
      %2800 = vmatprep.subr.mxu0 %v2673
      %2801 = vmatpush1.msra.mxu0 %v2672
      %2802 = vmatprep.subr.mxu0 %v2675
      %2803 = vmatpush1.msra.mxu0 %v2674
      %2804 = vmatprep.subr.mxu0 %v2677
      %2805 = vmatpush1.msra.mxu0 %v2676
      %2806 = vmatprep.subr.mxu0 %v2679
      %2807 = vmatpush1.msra.mxu0 %v2678
      %2808 = vmatprep.subr.mxu0 0.0
      %2809 = vmatpush1.msra.mxu0 0.0
      %2810 = vmatprep.subr.mxu0 0.0
      %2811 = vmatpush1.msra.mxu0 0.0
      %2812 = vmatprep.subr.mxu0 0.0
      %2813 = vmatpush1.msra.mxu0 0.0
      %2814 = vmatprep.subr.mxu0 0.0
      %2815 = vmatpush1.msra.mxu0 0.0
      %2816 = vmatprep.subr.mxu0 0.0
      %2817 = vmatpush1.msra.mxu0 0.0
      %2818 = vmatprep.subr.mxu0 0.0
      %2819 = vmatpush1.msra.mxu0 0.0
      %2820 = vmatprep.subr.mxu0 0.0
      %2821 = vmatpush1.msra.mxu0 0.0
      %2822 = vmatprep.subr.mxu0 0.0
      %2823 = vmatpush1.msra.mxu0 0.0
      %2824 = vmatprep.subr.mxu0 0.0
      %2825 = vmatpush1.msra.mxu0 0.0
      %2826 = vmatprep.subr.mxu0 0.0
      %2827 = vmatpush1.msra.mxu0 0.0
      %2828 = vmatprep.subr.mxu0 0.0
      %2829 = vmatpush1.msra.mxu0 0.0
      %2830 = vmatprep.subr.mxu0 0.0
      %2831 = vmatpush1.msra.mxu0 0.0
      %2832 = vmatprep.subr.mxu0 0.0
      %2833 = vmatpush1.msra.mxu0 0.0
      %2834 = vmatprep.subr.mxu0 0.0
      %2835 = vmatpush1.msra.mxu0 0.0
      %2836 = vmatprep.subr.mxu0 0.0
      %2837 = vmatpush1.msra.mxu0 0.0
      %2838 = vmatprep.subr.mxu0 0.0
      %2839 = vmatpush1.msra.mxu0 0.0
      %2840 = vmatprep.subr.mxu0 0.0
      %2841 = vmatpush1.msra.mxu0 0.0
      %2842 = vmatprep.subr.mxu0 0.0
      %2843 = vmatpush1.msra.mxu0 0.0
      %2844 = vmatprep.subr.mxu0 0.0
      %2845 = vmatpush1.msra.mxu0 0.0
      %2846 = vmatprep.subr.mxu0 0.0
      %2847 = vmatpush1.msra.mxu0 0.0
      %2848 = vmatprep.subr.mxu0 0.0
      %2849 = vmatpush1.msra.mxu0 0.0
      %2850 = vmatprep.subr.mxu0 0.0
      %2851 = vmatpush1.msra.mxu0 0.0
      %2852 = vmatprep.subr.mxu0 0.0
      %2853 = vmatpush1.msra.mxu0 0.0
      %2854 = vmatprep.subr.mxu0 0.0
      %2855 = vmatpush1.msra.mxu0 0.0
      %2856 = vmatprep.subr.mxu0 0.0
      %2857 = vmatpush1.msra.mxu0 0.0
      %2858 = vmatprep.subr.mxu0 0.0
      %2859 = vmatpush1.msra.mxu0 0.0
      %2860 = vmatprep.subr.mxu0 0.0
      %2861 = vmatpush1.msra.mxu0 0.0
      %2862 = vmatprep.subr.mxu0 0.0
      %2863 = vmatpush1.msra.mxu0 0.0
      %2864 = vmatprep.mubr.f32.mxu0 0.0
      %2865 = vmatmul.mubr.f32.gmra.mrb[0].mxu0 %v2798
      %v2866 = vpop.f32.mrb[0].mxu0
      %v2867 = vadd.f32 %v2793, %v2866
      %v2868 = vpop.f32.mrb[0].mxu0
      %v2869 = vadd.f32 %v2795, %v2868
      %2870 = vdwg.mxu0
      %2871 = vrot.lane.b32.xlu0 %v2624, 15
      %v2872 = vpop.permute.xlu0 %2871
      %2873 = vrot.lane.b32.xlu0 %v2625, 15
      %v2874 = vpop.permute.xlu0 %2873
      %2875 = vrot.lane.b32.xlu0 %v2626, 15
      %v2876 = vpop.permute.xlu0 %2875
      %2877 = vrot.lane.b32.xlu0 %v2627, 15
      %v2878 = vpop.permute.xlu0 %2877
      %2879 = vrot.lane.b32.xlu0 %v2628, 15
      %v2880 = vpop.permute.xlu0 %2879
      %2881 = vrot.lane.b32.xlu0 %v2629, 15
      %v2882 = vpop.permute.xlu0 %2881
      %2883 = vrot.lane.b32.xlu0 %v2630, 15
      %v2884 = vpop.permute.xlu0 %2883
      %2885 = vrot.lane.b32.xlu0 %v2631, 15
      %v2886 = vpop.permute.xlu0 %2885
      %v2887 = vsel %vm463, %v2872, %v2874
      %v2888 = vsel %vm463, %v2876, %v2878
      %v2889 = vsel %vm463, %v2880, %v2882
      %v2890 = vsel %vm463, %v2884, %v2886
      %v2899 = vsel %vm463, 0.0, %v2872
      %v2900 = vsel %vm463, 0.0, %v2876
      %v2901 = vsel %vm463, 0.0, %v2880
      %v2902 = vsel %vm463, 0.0, %v2884
      %v2903 = vmul.f32 %v2899, %v474
      %v2904 = vmul.f32 %v2887, %v478
      %v2905 = vmul.f32 %v2900, %v474
      %v2906 = vmul.f32 %v2888, %v478
      %v2907 = vmul.f32 %v2901, %v474
      %v2908 = vmul.f32 %v2889, %v478
      %v2909 = vmul.f32 %v2902, %v474
      %v2910 = vmul.f32 %v2890, %v478
      %s2911 = scalar_lea.vmem %s4, 4
      %v2912 = vld [vmem:[%s2911] sm:$0x3]
      %v2914 = vsel %vm1367, %v2912, 0
      %2916 = vmatprep.subr.mxu0 %v2904
      %2917 = vmatpush1.msra.mxu0 %v2903
      %2918 = vmatprep.subr.mxu0 %v2906
      %2919 = vmatpush1.msra.mxu0 %v2905
      %2920 = vmatprep.subr.mxu0 %v2908
      %2921 = vmatpush1.msra.mxu0 %v2907
      %2922 = vmatprep.subr.mxu0 %v2910
      %2923 = vmatpush1.msra.mxu0 %v2909
      %2924 = vmatprep.subr.mxu0 0.0
      %2925 = vmatpush1.msra.mxu0 0.0
      %2926 = vmatprep.subr.mxu0 0.0
      %2927 = vmatpush1.msra.mxu0 0.0
      %2928 = vmatprep.subr.mxu0 0.0
      %2929 = vmatpush1.msra.mxu0 0.0
      %2930 = vmatprep.subr.mxu0 0.0
      %2931 = vmatpush1.msra.mxu0 0.0
      %2932 = vmatprep.subr.mxu0 0.0
      %2933 = vmatpush1.msra.mxu0 0.0
      %2934 = vmatprep.subr.mxu0 0.0
      %2935 = vmatpush1.msra.mxu0 0.0
      %2936 = vmatprep.subr.mxu0 0.0
      %2937 = vmatpush1.msra.mxu0 0.0
      %2938 = vmatprep.subr.mxu0 0.0
      %2939 = vmatpush1.msra.mxu0 0.0
      %2940 = vmatprep.subr.mxu0 0.0
      %2941 = vmatpush1.msra.mxu0 0.0
      %2942 = vmatprep.subr.mxu0 0.0
      %2943 = vmatpush1.msra.mxu0 0.0
      %2944 = vmatprep.subr.mxu0 0.0
      %2945 = vmatpush1.msra.mxu0 0.0
      %2946 = vmatprep.subr.mxu0 0.0
      %2947 = vmatpush1.msra.mxu0 0.0
      %2948 = vmatprep.subr.mxu0 0.0
      %2949 = vmatpush1.msra.mxu0 0.0
      %2950 = vmatprep.subr.mxu0 0.0
      %2951 = vmatpush1.msra.mxu0 0.0
      %2952 = vmatprep.subr.mxu0 0.0
      %2953 = vmatpush1.msra.mxu0 0.0
      %2954 = vmatprep.subr.mxu0 0.0
      %2955 = vmatpush1.msra.mxu0 0.0
      %2956 = vmatprep.subr.mxu0 0.0
      %2957 = vmatpush1.msra.mxu0 0.0
      %2958 = vmatprep.subr.mxu0 0.0
      %2959 = vmatpush1.msra.mxu0 0.0
      %2960 = vmatprep.subr.mxu0 0.0
      %2961 = vmatpush1.msra.mxu0 0.0
      %2962 = vmatprep.subr.mxu0 0.0
      %2963 = vmatpush1.msra.mxu0 0.0
      %2964 = vmatprep.subr.mxu0 0.0
      %2965 = vmatpush1.msra.mxu0 0.0
      %2966 = vmatprep.subr.mxu0 0.0
      %2967 = vmatpush1.msra.mxu0 0.0
      %2968 = vmatprep.subr.mxu0 0.0
      %2969 = vmatpush1.msra.mxu0 0.0
      %2970 = vmatprep.subr.mxu0 0.0
      %2971 = vmatpush1.msra.mxu0 0.0
      %2972 = vmatprep.subr.mxu0 0.0
      %2973 = vmatpush1.msra.mxu0 0.0
      %2974 = vmatprep.subr.mxu0 0.0
      %2975 = vmatpush1.msra.mxu0 0.0
      %2976 = vmatprep.subr.mxu0 0.0
      %2977 = vmatpush1.msra.mxu0 0.0
      %2978 = vmatprep.subr.mxu0 0.0
      %2979 = vmatpush1.msra.mxu0 0.0
      %2980 = vmatprep.mubr.f32.mxu0 0.0
      %2981 = vmatmul.mubr.f32.gmra.mrb[0].mxu0 %v2914
      %v2982 = vpop.f32.mrb[0].mxu0
      %v2983 = vadd.f32 0.0, %v2982
      %v2984 = vpop.f32.mrb[0].mxu0
      %v2985 = vadd.f32 0.0, %v2984
      %2986 = vdwg.mxu0
      %v2987 = vadd.f32 %v2867, %v2983
      %v2988 = vadd.f32 %v2869, %v2985
      %2989 = vrot.lane.b32.xlu0 %v2624, 1
      %v2990 = vpop.permute.xlu0 %2989
      %2991 = vrot.lane.b32.xlu0 %v2625, 1
      %v2992 = vpop.permute.xlu0 %2991
      %2993 = vrot.lane.b32.xlu0 %v2626, 1
      %v2994 = vpop.permute.xlu0 %2993
      %2995 = vrot.lane.b32.xlu0 %v2627, 1
      %v2996 = vpop.permute.xlu0 %2995
      %2997 = vrot.lane.b32.xlu0 %v2628, 1
      %v2998 = vpop.permute.xlu0 %2997
      %2999 = vrot.lane.b32.xlu0 %v2629, 1
      %v3000 = vpop.permute.xlu0 %2999
      %3001 = vrot.lane.b32.xlu0 %v2630, 1
      %v3002 = vpop.permute.xlu0 %3001
      %3003 = vrot.lane.b32.xlu0 %v2631, 1
      %v3004 = vpop.permute.xlu0 %3003
      %v3005 = vsel %vm576, %v2990, %v2992
      %v3006 = vsel %vm576, %v2994, %v2996
      %v3007 = vsel %vm576, %v2998, %v3000
      %v3008 = vsel %vm576, %v3002, %v3004
      %v3017 = vsel %vm576, 0.0, %v2990
      %v3018 = vsel %vm576, 0.0, %v2994
      %v3019 = vsel %vm576, 0.0, %v2998
      %v3020 = vsel %vm576, 0.0, %v3002
      %v3021 = vmul.f32 %v3017, %v587
      %v3022 = vmul.f32 %v3005, %v591
      %v3023 = vmul.f32 %v3018, %v587
      %v3024 = vmul.f32 %v3006, %v591
      %v3025 = vmul.f32 %v3019, %v587
      %v3026 = vmul.f32 %v3007, %v591
      %v3027 = vmul.f32 %v3020, %v587
      %v3028 = vmul.f32 %v3008, %v591
      %s3029 = scalar_lea.vmem %s4, 6
      %v3030 = vld [vmem:[%s3029] sm:$0x3]
      %v3032 = vsel %vm1367, %v3030, 0
      %3034 = vmatprep.subr.mxu0 %v3022
      %3035 = vmatpush1.msra.mxu0 %v3021
      %3036 = vmatprep.subr.mxu0 %v3024
      %3037 = vmatpush1.msra.mxu0 %v3023
      %3038 = vmatprep.subr.mxu0 %v3026
      %3039 = vmatpush1.msra.mxu0 %v3025
      %3040 = vmatprep.subr.mxu0 %v3028
      %3041 = vmatpush1.msra.mxu0 %v3027
      %3042 = vmatprep.subr.mxu0 0.0
      %3043 = vmatpush1.msra.mxu0 0.0
      %3044 = vmatprep.subr.mxu0 0.0
      %3045 = vmatpush1.msra.mxu0 0.0
      %3046 = vmatprep.subr.mxu0 0.0
      %3047 = vmatpush1.msra.mxu0 0.0
      %3048 = vmatprep.subr.mxu0 0.0
      %3049 = vmatpush1.msra.mxu0 0.0
      %3050 = vmatprep.subr.mxu0 0.0
      %3051 = vmatpush1.msra.mxu0 0.0
      %3052 = vmatprep.subr.mxu0 0.0
      %3053 = vmatpush1.msra.mxu0 0.0
      %3054 = vmatprep.subr.mxu0 0.0
      %3055 = vmatpush1.msra.mxu0 0.0
      %3056 = vmatprep.subr.mxu0 0.0
      %3057 = vmatpush1.msra.mxu0 0.0
      %3058 = vmatprep.subr.mxu0 0.0
      %3059 = vmatpush1.msra.mxu0 0.0
      %3060 = vmatprep.subr.mxu0 0.0
      %3061 = vmatpush1.msra.mxu0 0.0
      %3062 = vmatprep.subr.mxu0 0.0
      %3063 = vmatpush1.msra.mxu0 0.0
      %3064 = vmatprep.subr.mxu0 0.0
      %3065 = vmatpush1.msra.mxu0 0.0
      %3066 = vmatprep.subr.mxu0 0.0
      %3067 = vmatpush1.msra.mxu0 0.0
      %3068 = vmatprep.subr.mxu0 0.0
      %3069 = vmatpush1.msra.mxu0 0.0
      %3070 = vmatprep.subr.mxu0 0.0
      %3071 = vmatpush1.msra.mxu0 0.0
      %3072 = vmatprep.subr.mxu0 0.0
      %3073 = vmatpush1.msra.mxu0 0.0
      %3074 = vmatprep.subr.mxu0 0.0
      %3075 = vmatpush1.msra.mxu0 0.0
      %3076 = vmatprep.subr.mxu0 0.0
      %3077 = vmatpush1.msra.mxu0 0.0
      %3078 = vmatprep.subr.mxu0 0.0
      %3079 = vmatpush1.msra.mxu0 0.0
      %3080 = vmatprep.subr.mxu0 0.0
      %3081 = vmatpush1.msra.mxu0 0.0
      %3082 = vmatprep.subr.mxu0 0.0
      %3083 = vmatpush1.msra.mxu0 0.0
      %3084 = vmatprep.subr.mxu0 0.0
      %3085 = vmatpush1.msra.mxu0 0.0
      %3086 = vmatprep.subr.mxu0 0.0
      %3087 = vmatpush1.msra.mxu0 0.0
      %3088 = vmatprep.subr.mxu0 0.0
      %3089 = vmatpush1.msra.mxu0 0.0
      %3090 = vmatprep.subr.mxu0 0.0
      %3091 = vmatpush1.msra.mxu0 0.0
      %3092 = vmatprep.subr.mxu0 0.0
      %3093 = vmatpush1.msra.mxu0 0.0
      %3094 = vmatprep.subr.mxu0 0.0
      %3095 = vmatpush1.msra.mxu0 0.0
      %3096 = vmatprep.subr.mxu0 0.0
      %3097 = vmatpush1.msra.mxu0 0.0
      %3098 = vmatprep.mubr.f32.mxu0 0.0
      %3099 = vmatmul.mubr.f32.gmra.mrb[0].mxu0 %v3032
      %v3100 = vpop.f32.mrb[0].mxu0
      %v3101 = vadd.f32 0.0, %v3100
      %v3102 = vpop.f32.mrb[0].mxu0
      %v3103 = vadd.f32 0.0, %v3102
      %3104 = vdwg.mxu0
      %v3105 = vadd.f32 %v2987, %v3101
      %v3106 = vadd.f32 %v2988, %v3103
      %s3107 = scalar_lea.vmem %s4, 8
      %v3108 = vld [vmem:[%s3107] sm:$0x3]
      %v3110 = vsel %vm1367, %v3108, 0
      %3112 = vmatprep.subr.mxu0 %v2625
      %3113 = vmatpush1.msra.mxu0 %v2624
      %3114 = vmatprep.subr.mxu0 %v2627
      %3115 = vmatpush1.msra.mxu0 %v2626
      %3116 = vmatprep.subr.mxu0 %v2629
      %3117 = vmatpush1.msra.mxu0 %v2628
      %3118 = vmatprep.subr.mxu0 %v2631
      %3119 = vmatpush1.msra.mxu0 %v2630
      %3120 = vmatprep.subr.mxu0 0.0
      %3121 = vmatpush1.msra.mxu0 0.0
      %3122 = vmatprep.subr.mxu0 0.0
      %3123 = vmatpush1.msra.mxu0 0.0
      %3124 = vmatprep.subr.mxu0 0.0
      %3125 = vmatpush1.msra.mxu0 0.0
      %3126 = vmatprep.subr.mxu0 0.0
      %3127 = vmatpush1.msra.mxu0 0.0
      %3128 = vmatprep.subr.mxu0 0.0
      %3129 = vmatpush1.msra.mxu0 0.0
      %3130 = vmatprep.subr.mxu0 0.0
      %3131 = vmatpush1.msra.mxu0 0.0
      %3132 = vmatprep.subr.mxu0 0.0
      %3133 = vmatpush1.msra.mxu0 0.0
      %3134 = vmatprep.subr.mxu0 0.0
      %3135 = vmatpush1.msra.mxu0 0.0
      %3136 = vmatprep.subr.mxu0 0.0
      %3137 = vmatpush1.msra.mxu0 0.0
      %3138 = vmatprep.subr.mxu0 0.0
      %3139 = vmatpush1.msra.mxu0 0.0
      %3140 = vmatprep.subr.mxu0 0.0
      %3141 = vmatpush1.msra.mxu0 0.0
      %3142 = vmatprep.subr.mxu0 0.0
      %3143 = vmatpush1.msra.mxu0 0.0
      %3144 = vmatprep.subr.mxu0 0.0
      %3145 = vmatpush1.msra.mxu0 0.0
      %3146 = vmatprep.subr.mxu0 0.0
      %3147 = vmatpush1.msra.mxu0 0.0
      %3148 = vmatprep.subr.mxu0 0.0
      %3149 = vmatpush1.msra.mxu0 0.0
      %3150 = vmatprep.subr.mxu0 0.0
      %3151 = vmatpush1.msra.mxu0 0.0
      %3152 = vmatprep.subr.mxu0 0.0
      %3153 = vmatpush1.msra.mxu0 0.0
      %3154 = vmatprep.subr.mxu0 0.0
      %3155 = vmatpush1.msra.mxu0 0.0
      %3156 = vmatprep.subr.mxu0 0.0
      %3157 = vmatpush1.msra.mxu0 0.0
      %3158 = vmatprep.subr.mxu0 0.0
      %3159 = vmatpush1.msra.mxu0 0.0
      %3160 = vmatprep.subr.mxu0 0.0
      %3161 = vmatpush1.msra.mxu0 0.0
      %3162 = vmatprep.subr.mxu0 0.0
      %3163 = vmatpush1.msra.mxu0 0.0
      %3164 = vmatprep.subr.mxu0 0.0
      %3165 = vmatpush1.msra.mxu0 0.0
      %3166 = vmatprep.subr.mxu0 0.0
      %3167 = vmatpush1.msra.mxu0 0.0
      %3168 = vmatprep.subr.mxu0 0.0
      %3169 = vmatpush1.msra.mxu0 0.0
      %3170 = vmatprep.subr.mxu0 0.0
      %3171 = vmatpush1.msra.mxu0 0.0
      %3172 = vmatprep.subr.mxu0 0.0
      %3173 = vmatpush1.msra.mxu0 0.0
      %3174 = vmatprep.subr.mxu0 0.0
      %3175 = vmatpush1.msra.mxu0 0.0
      %3176 = vmatprep.mubr.f32.mxu0 0.0
      %3177 = vmatmul.mubr.f32.gmra.mrb[0].mxu0 %v3110
      %v3178 = vpop.f32.mrb[0].mxu0
      %v3179 = vadd.f32 0.0, %v3178
      %v3180 = vpop.f32.mrb[0].mxu0
      %v3181 = vadd.f32 0.0, %v3180
      %3182 = vdwg.mxu0
      %v3183 = vadd.f32 %v3105, %v3179
      %v3184 = vadd.f32 %v3106, %v3181
      %3185 = vrot.lane.b32.xlu0 %v2624, 127
      %v3186 = vpop.permute.xlu0 %3185
      %3187 = vrot.lane.b32.xlu0 %v2625, 127
      %v3188 = vpop.permute.xlu0 %3187
      %3189 = vrot.lane.b32.xlu0 %v2626, 127
      %v3190 = vpop.permute.xlu0 %3189
      %3191 = vrot.lane.b32.xlu0 %v2627, 127
      %v3192 = vpop.permute.xlu0 %3191
      %3193 = vrot.lane.b32.xlu0 %v2628, 127
      %v3194 = vpop.permute.xlu0 %3193
      %3195 = vrot.lane.b32.xlu0 %v2629, 127
      %v3196 = vpop.permute.xlu0 %3195
      %3197 = vrot.lane.b32.xlu0 %v2630, 127
      %v3198 = vpop.permute.xlu0 %3197
      %3199 = vrot.lane.b32.xlu0 %v2631, 127
      %v3200 = vpop.permute.xlu0 %3199
      %v3201 = vsel %vm798, %v3186, %v3188
      %v3202 = vsel %vm798, %v3190, %v3192
      %v3203 = vsel %vm798, %v3194, %v3196
      %v3204 = vsel %vm798, %v3198, %v3200
      %v3213 = vsel %vm798, %v3188, 0.0
      %v3214 = vsel %vm798, %v3192, 0.0
      %v3215 = vsel %vm798, %v3196, 0.0
      %v3216 = vsel %vm798, %v3200, 0.0
      %v3217 = vmul.f32 %v3201, %v809
      %v3218 = vmul.f32 %v3213, %v813
      %v3219 = vmul.f32 %v3202, %v809
      %v3220 = vmul.f32 %v3214, %v813
      %v3221 = vmul.f32 %v3203, %v809
      %v3222 = vmul.f32 %v3215, %v813
      %v3223 = vmul.f32 %v3204, %v809
      %v3224 = vmul.f32 %v3216, %v813
      %s3225 = scalar_lea.vmem %s4, 10
      %v3226 = vld [vmem:[%s3225] sm:$0x3]
      %v3228 = vsel %vm1367, %v3226, 0
      %3230 = vmatprep.subr.mxu0 %v3218
      %3231 = vmatpush1.msra.mxu0 %v3217
      %3232 = vmatprep.subr.mxu0 %v3220
      %3233 = vmatpush1.msra.mxu0 %v3219
      %3234 = vmatprep.subr.mxu0 %v3222
      %3235 = vmatpush1.msra.mxu0 %v3221
      %3236 = vmatprep.subr.mxu0 %v3224
      %3237 = vmatpush1.msra.mxu0 %v3223
      %3238 = vmatprep.subr.mxu0 0.0
      %3239 = vmatpush1.msra.mxu0 0.0
      %3240 = vmatprep.subr.mxu0 0.0
      %3241 = vmatpush1.msra.mxu0 0.0
      %3242 = vmatprep.subr.mxu0 0.0
      %3243 = vmatpush1.msra.mxu0 0.0
      %3244 = vmatprep.subr.mxu0 0.0
      %3245 = vmatpush1.msra.mxu0 0.0
      %3246 = vmatprep.subr.mxu0 0.0
      %3247 = vmatpush1.msra.mxu0 0.0
      %3248 = vmatprep.subr.mxu0 0.0
      %3249 = vmatpush1.msra.mxu0 0.0
      %3250 = vmatprep.subr.mxu0 0.0
      %3251 = vmatpush1.msra.mxu0 0.0
      %3252 = vmatprep.subr.mxu0 0.0
      %3253 = vmatpush1.msra.mxu0 0.0
      %3254 = vmatprep.subr.mxu0 0.0
      %3255 = vmatpush1.msra.mxu0 0.0
      %3256 = vmatprep.subr.mxu0 0.0
      %3257 = vmatpush1.msra.mxu0 0.0
      %3258 = vmatprep.subr.mxu0 0.0
      %3259 = vmatpush1.msra.mxu0 0.0
      %3260 = vmatprep.subr.mxu0 0.0
      %3261 = vmatpush1.msra.mxu0 0.0
      %3262 = vmatprep.subr.mxu0 0.0
      %3263 = vmatpush1.msra.mxu0 0.0
      %3264 = vmatprep.subr.mxu0 0.0
      %3265 = vmatpush1.msra.mxu0 0.0
      %3266 = vmatprep.subr.mxu0 0.0
      %3267 = vmatpush1.msra.mxu0 0.0
      %3268 = vmatprep.subr.mxu0 0.0
      %3269 = vmatpush1.msra.mxu0 0.0
      %3270 = vmatprep.subr.mxu0 0.0
      %3271 = vmatpush1.msra.mxu0 0.0
      %3272 = vmatprep.subr.mxu0 0.0
      %3273 = vmatpush1.msra.mxu0 0.0
      %3274 = vmatprep.subr.mxu0 0.0
      %3275 = vmatpush1.msra.mxu0 0.0
      %3276 = vmatprep.subr.mxu0 0.0
      %3277 = vmatpush1.msra.mxu0 0.0
      %3278 = vmatprep.subr.mxu0 0.0
      %3279 = vmatpush1.msra.mxu0 0.0
      %3280 = vmatprep.subr.mxu0 0.0
      %3281 = vmatpush1.msra.mxu0 0.0
      %3282 = vmatprep.subr.mxu0 0.0
      %3283 = vmatpush1.msra.mxu0 0.0
      %3284 = vmatprep.subr.mxu0 0.0
      %3285 = vmatpush1.msra.mxu0 0.0
      %3286 = vmatprep.subr.mxu0 0.0
      %3287 = vmatpush1.msra.mxu0 0.0
      %3288 = vmatprep.subr.mxu0 0.0
      %3289 = vmatpush1.msra.mxu0 0.0
      %3290 = vmatprep.subr.mxu0 0.0
      %3291 = vmatpush1.msra.mxu0 0.0
      %3292 = vmatprep.subr.mxu0 0.0
      %3293 = vmatpush1.msra.mxu0 0.0
      %3294 = vmatprep.mubr.f32.mxu0 0.0
      %3295 = vmatmul.mubr.f32.gmra.mrb[0].mxu0 %v3228
      %v3296 = vpop.f32.mrb[0].mxu0
      %v3297 = vadd.f32 0.0, %v3296
      %v3298 = vpop.f32.mrb[0].mxu0
      %v3299 = vadd.f32 0.0, %v3298
      %3300 = vdwg.mxu0
      %v3301 = vadd.f32 %v3183, %v3297
      %v3302 = vadd.f32 %v3184, %v3299
      %3303 = vrot.lane.b32.xlu0 %v2624, 113
      %v3304 = vpop.permute.xlu0 %3303
      %3305 = vrot.lane.b32.xlu0 %v2625, 113
      %v3306 = vpop.permute.xlu0 %3305
      %3307 = vrot.lane.b32.xlu0 %v2626, 113
      %v3308 = vpop.permute.xlu0 %3307
      %3309 = vrot.lane.b32.xlu0 %v2627, 113
      %v3310 = vpop.permute.xlu0 %3309
      %3311 = vrot.lane.b32.xlu0 %v2628, 113
      %v3312 = vpop.permute.xlu0 %3311
      %3313 = vrot.lane.b32.xlu0 %v2629, 113
      %v3314 = vpop.permute.xlu0 %3313
      %3315 = vrot.lane.b32.xlu0 %v2630, 113
      %v3316 = vpop.permute.xlu0 %3315
      %3317 = vrot.lane.b32.xlu0 %v2631, 113
      %v3318 = vpop.permute.xlu0 %3317
      %v3319 = vsel %vm911, %v3304, %v3306
      %v3320 = vsel %vm911, %v3308, %v3310
      %v3321 = vsel %vm911, %v3312, %v3314
      %v3322 = vsel %vm911, %v3316, %v3318
      %v3331 = vsel %vm911, %v3306, 0.0
      %v3332 = vsel %vm911, %v3310, 0.0
      %v3333 = vsel %vm911, %v3314, 0.0
      %v3334 = vsel %vm911, %v3318, 0.0
      %v3335 = vmul.f32 %v3319, %v922
      %v3336 = vmul.f32 %v3331, %v926
      %v3337 = vmul.f32 %v3320, %v922
      %v3338 = vmul.f32 %v3332, %v926
      %v3339 = vmul.f32 %v3321, %v922
      %v3340 = vmul.f32 %v3333, %v926
      %v3341 = vmul.f32 %v3322, %v922
      %v3342 = vmul.f32 %v3334, %v926
      %s3343 = scalar_lea.vmem %s4, 12
      %v3344 = vld [vmem:[%s3343] sm:$0x3]
      %v3346 = vsel %vm1367, %v3344, 0
      %3348 = vmatprep.subr.mxu0 %v3336
      %3349 = vmatpush1.msra.mxu0 %v3335
      %3350 = vmatprep.subr.mxu0 %v3338
      %3351 = vmatpush1.msra.mxu0 %v3337
      %3352 = vmatprep.subr.mxu0 %v3340
      %3353 = vmatpush1.msra.mxu0 %v3339
      %3354 = vmatprep.subr.mxu0 %v3342
      %3355 = vmatpush1.msra.mxu0 %v3341
      %3356 = vmatprep.subr.mxu0 0.0
      %3357 = vmatpush1.msra.mxu0 0.0
      %3358 = vmatprep.subr.mxu0 0.0
      %3359 = vmatpush1.msra.mxu0 0.0
      %3360 = vmatprep.subr.mxu0 0.0
      %3361 = vmatpush1.msra.mxu0 0.0
      %3362 = vmatprep.subr.mxu0 0.0
      %3363 = vmatpush1.msra.mxu0 0.0
      %3364 = vmatprep.subr.mxu0 0.0
      %3365 = vmatpush1.msra.mxu0 0.0
      %3366 = vmatprep.subr.mxu0 0.0
      %3367 = vmatpush1.msra.mxu0 0.0
      %3368 = vmatprep.subr.mxu0 0.0
      %3369 = vmatpush1.msra.mxu0 0.0
      %3370 = vmatprep.subr.mxu0 0.0
      %3371 = vmatpush1.msra.mxu0 0.0
      %3372 = vmatprep.subr.mxu0 0.0
      %3373 = vmatpush1.msra.mxu0 0.0
      %3374 = vmatprep.subr.mxu0 0.0
      %3375 = vmatpush1.msra.mxu0 0.0
      %3376 = vmatprep.subr.mxu0 0.0
      %3377 = vmatpush1.msra.mxu0 0.0
      %3378 = vmatprep.subr.mxu0 0.0
      %3379 = vmatpush1.msra.mxu0 0.0
      %3380 = vmatprep.subr.mxu0 0.0
      %3381 = vmatpush1.msra.mxu0 0.0
      %3382 = vmatprep.subr.mxu0 0.0
      %3383 = vmatpush1.msra.mxu0 0.0
      %3384 = vmatprep.subr.mxu0 0.0
      %3385 = vmatpush1.msra.mxu0 0.0
      %3386 = vmatprep.subr.mxu0 0.0
      %3387 = vmatpush1.msra.mxu0 0.0
      %3388 = vmatprep.subr.mxu0 0.0
      %3389 = vmatpush1.msra.mxu0 0.0
      %3390 = vmatprep.subr.mxu0 0.0
      %3391 = vmatpush1.msra.mxu0 0.0
      %3392 = vmatprep.subr.mxu0 0.0
      %3393 = vmatpush1.msra.mxu0 0.0
      %3394 = vmatprep.subr.mxu0 0.0
      %3395 = vmatpush1.msra.mxu0 0.0
      %3396 = vmatprep.subr.mxu0 0.0
      %3397 = vmatpush1.msra.mxu0 0.0
      %3398 = vmatprep.subr.mxu0 0.0
      %3399 = vmatpush1.msra.mxu0 0.0
      %3400 = vmatprep.subr.mxu0 0.0
      %3401 = vmatpush1.msra.mxu0 0.0
      %3402 = vmatprep.subr.mxu0 0.0
      %3403 = vmatpush1.msra.mxu0 0.0
      %3404 = vmatprep.subr.mxu0 0.0
      %3405 = vmatpush1.msra.mxu0 0.0
      %3406 = vmatprep.subr.mxu0 0.0
      %3407 = vmatpush1.msra.mxu0 0.0
      %3408 = vmatprep.subr.mxu0 0.0
      %3409 = vmatpush1.msra.mxu0 0.0
      %3410 = vmatprep.subr.mxu0 0.0
      %3411 = vmatpush1.msra.mxu0 0.0
      %3412 = vmatprep.mubr.f32.mxu0 0.0
      %3413 = vmatmul.mubr.f32.gmra.mrb[0].mxu0 %v3346
      %v3414 = vpop.f32.mrb[0].mxu0
      %v3415 = vadd.f32 0.0, %v3414
      %v3416 = vpop.f32.mrb[0].mxu0
      %v3417 = vadd.f32 0.0, %v3416
      %3418 = vdwg.mxu0
      %v3419 = vadd.f32 %v3301, %v3415
      %v3420 = vadd.f32 %v3302, %v3417
      %3421 = vrot.lane.b32.xlu0 %v2624, 112
      %v3422 = vpop.permute.xlu0 %3421
      %3423 = vrot.lane.b32.xlu0 %v2625, 112
      %v3424 = vpop.permute.xlu0 %3423
      %3425 = vrot.lane.b32.xlu0 %v2626, 112
      %v3426 = vpop.permute.xlu0 %3425
      %3427 = vrot.lane.b32.xlu0 %v2627, 112
      %v3428 = vpop.permute.xlu0 %3427
      %3429 = vrot.lane.b32.xlu0 %v2628, 112
      %v3430 = vpop.permute.xlu0 %3429
      %3431 = vrot.lane.b32.xlu0 %v2629, 112
      %v3432 = vpop.permute.xlu0 %3431
      %3433 = vrot.lane.b32.xlu0 %v2630, 112
      %v3434 = vpop.permute.xlu0 %3433
      %3435 = vrot.lane.b32.xlu0 %v2631, 112
      %v3436 = vpop.permute.xlu0 %3435
      %v3437 = vsel %vm1024, %v3422, %v3424
      %v3438 = vsel %vm1024, %v3426, %v3428
      %v3439 = vsel %vm1024, %v3430, %v3432
      %v3440 = vsel %vm1024, %v3434, %v3436
      %v3449 = vsel %vm1024, %v3424, 0.0
      %v3450 = vsel %vm1024, %v3428, 0.0
      %v3451 = vsel %vm1024, %v3432, 0.0
      %v3452 = vsel %vm1024, %v3436, 0.0
      %v3453 = vmul.f32 %v3437, %v1035
      %v3454 = vmul.f32 %v3449, %v1039
      %v3455 = vmul.f32 %v3438, %v1035
      %v3456 = vmul.f32 %v3450, %v1039
      %v3457 = vmul.f32 %v3439, %v1035
      %v3458 = vmul.f32 %v3451, %v1039
      %v3459 = vmul.f32 %v3440, %v1035
      %v3460 = vmul.f32 %v3452, %v1039
      %s3461 = scalar_lea.vmem %s4, 14
      %v3462 = vld [vmem:[%s3461] sm:$0x3]
      %v3464 = vsel %vm1367, %v3462, 0
      %3466 = vmatprep.subr.mxu0 %v3454
      %3467 = vmatpush1.msra.mxu0 %v3453
      %3468 = vmatprep.subr.mxu0 %v3456
      %3469 = vmatpush1.msra.mxu0 %v3455
      %3470 = vmatprep.subr.mxu0 %v3458
      %3471 = vmatpush1.msra.mxu0 %v3457
      %3472 = vmatprep.subr.mxu0 %v3460
      %3473 = vmatpush1.msra.mxu0 %v3459
      %3474 = vmatprep.subr.mxu0 0.0
      %3475 = vmatpush1.msra.mxu0 0.0
      %3476 = vmatprep.subr.mxu0 0.0
      %3477 = vmatpush1.msra.mxu0 0.0
      %3478 = vmatprep.subr.mxu0 0.0
      %3479 = vmatpush1.msra.mxu0 0.0
      %3480 = vmatprep.subr.mxu0 0.0
      %3481 = vmatpush1.msra.mxu0 0.0
      %3482 = vmatprep.subr.mxu0 0.0
      %3483 = vmatpush1.msra.mxu0 0.0
      %3484 = vmatprep.subr.mxu0 0.0
      %3485 = vmatpush1.msra.mxu0 0.0
      %3486 = vmatprep.subr.mxu0 0.0
      %3487 = vmatpush1.msra.mxu0 0.0
      %3488 = vmatprep.subr.mxu0 0.0
      %3489 = vmatpush1.msra.mxu0 0.0
      %3490 = vmatprep.subr.mxu0 0.0
      %3491 = vmatpush1.msra.mxu0 0.0
      %3492 = vmatprep.subr.mxu0 0.0
      %3493 = vmatpush1.msra.mxu0 0.0
      %3494 = vmatprep.subr.mxu0 0.0
      %3495 = vmatpush1.msra.mxu0 0.0
      %3496 = vmatprep.subr.mxu0 0.0
      %3497 = vmatpush1.msra.mxu0 0.0
      %3498 = vmatprep.subr.mxu0 0.0
      %3499 = vmatpush1.msra.mxu0 0.0
      %3500 = vmatprep.subr.mxu0 0.0
      %3501 = vmatpush1.msra.mxu0 0.0
      %3502 = vmatprep.subr.mxu0 0.0
      %3503 = vmatpush1.msra.mxu0 0.0
      %3504 = vmatprep.subr.mxu0 0.0
      %3505 = vmatpush1.msra.mxu0 0.0
      %3506 = vmatprep.subr.mxu0 0.0
      %3507 = vmatpush1.msra.mxu0 0.0
      %3508 = vmatprep.subr.mxu0 0.0
      %3509 = vmatpush1.msra.mxu0 0.0
      %3510 = vmatprep.subr.mxu0 0.0
      %3511 = vmatpush1.msra.mxu0 0.0
      %3512 = vmatprep.subr.mxu0 0.0
      %3513 = vmatpush1.msra.mxu0 0.0
      %3514 = vmatprep.subr.mxu0 0.0
      %3515 = vmatpush1.msra.mxu0 0.0
      %3516 = vmatprep.subr.mxu0 0.0
      %3517 = vmatpush1.msra.mxu0 0.0
      %3518 = vmatprep.subr.mxu0 0.0
      %3519 = vmatpush1.msra.mxu0 0.0
      %3520 = vmatprep.subr.mxu0 0.0
      %3521 = vmatpush1.msra.mxu0 0.0
      %3522 = vmatprep.subr.mxu0 0.0
      %3523 = vmatpush1.msra.mxu0 0.0
      %3524 = vmatprep.subr.mxu0 0.0
      %3525 = vmatpush1.msra.mxu0 0.0
      %3526 = vmatprep.subr.mxu0 0.0
      %3527 = vmatpush1.msra.mxu0 0.0
      %3528 = vmatprep.subr.mxu0 0.0
      %3529 = vmatpush1.msra.mxu0 0.0
      %3530 = vmatprep.mubr.f32.mxu0 0.0
      %3531 = vmatmul.mubr.f32.gmra.mrb[0].mxu0 %v3464
      %v3532 = vpop.f32.mrb[0].mxu0
      %v3533 = vadd.f32 0.0, %v3532
      %v3534 = vpop.f32.mrb[0].mxu0
      %v3535 = vadd.f32 0.0, %v3534
      %3536 = vdwg.mxu0
      %v3537 = vadd.f32 %v3419, %v3533
      %v3538 = vadd.f32 %v3420, %v3535
      %3539 = vrot.lane.b32.xlu0 %v2624, 111
      %v3540 = vpop.permute.xlu0 %3539
      %3541 = vrot.lane.b32.xlu0 %v2625, 111
      %v3542 = vpop.permute.xlu0 %3541
      %3543 = vrot.lane.b32.xlu0 %v2626, 111
      %v3544 = vpop.permute.xlu0 %3543
      %3545 = vrot.lane.b32.xlu0 %v2627, 111
      %v3546 = vpop.permute.xlu0 %3545
      %3547 = vrot.lane.b32.xlu0 %v2628, 111
      %v3548 = vpop.permute.xlu0 %3547
      %3549 = vrot.lane.b32.xlu0 %v2629, 111
      %v3550 = vpop.permute.xlu0 %3549
      %3551 = vrot.lane.b32.xlu0 %v2630, 111
      %v3552 = vpop.permute.xlu0 %3551
      %3553 = vrot.lane.b32.xlu0 %v2631, 111
      %v3554 = vpop.permute.xlu0 %3553
      %v3555 = vsel %vm1137, %v3540, %v3542
      %v3556 = vsel %vm1137, %v3544, %v3546
      %v3557 = vsel %vm1137, %v3548, %v3550
      %v3558 = vsel %vm1137, %v3552, %v3554
      %v3567 = vsel %vm1137, %v3542, 0.0
      %v3568 = vsel %vm1137, %v3546, 0.0
      %v3569 = vsel %vm1137, %v3550, 0.0
      %v3570 = vsel %vm1137, %v3554, 0.0
      %v3571 = vmul.f32 %v3555, %v1148
      %v3572 = vmul.f32 %v3567, %v1152
      %v3573 = vmul.f32 %v3556, %v1148
      %v3574 = vmul.f32 %v3568, %v1152
      %v3575 = vmul.f32 %v3557, %v1148
      %v3576 = vmul.f32 %v3569, %v1152
      %v3577 = vmul.f32 %v3558, %v1148
      %v3578 = vmul.f32 %v3570, %v1152
      %s3579 = scalar_lea.vmem %s4, 16
      %v3580 = vld [vmem:[%s3579] sm:$0x3]
      %v3582 = vsel %vm1367, %v3580, 0
      %3584 = vmatprep.subr.mxu0 %v3572
      %3585 = vmatpush1.msra.mxu0 %v3571
      %3586 = vmatprep.subr.mxu0 %v3574
      %3587 = vmatpush1.msra.mxu0 %v3573
      %3588 = vmatprep.subr.mxu0 %v3576
      %3589 = vmatpush1.msra.mxu0 %v3575
      %3590 = vmatprep.subr.mxu0 %v3578
      %3591 = vmatpush1.msra.mxu0 %v3577
      %3592 = vmatprep.subr.mxu0 0.0
      %3593 = vmatpush1.msra.mxu0 0.0
      %3594 = vmatprep.subr.mxu0 0.0
      %3595 = vmatpush1.msra.mxu0 0.0
      %3596 = vmatprep.subr.mxu0 0.0
      %3597 = vmatpush1.msra.mxu0 0.0
      %3598 = vmatprep.subr.mxu0 0.0
      %3599 = vmatpush1.msra.mxu0 0.0
      %3600 = vmatprep.subr.mxu0 0.0
      %3601 = vmatpush1.msra.mxu0 0.0
      %3602 = vmatprep.subr.mxu0 0.0
      %3603 = vmatpush1.msra.mxu0 0.0
      %3604 = vmatprep.subr.mxu0 0.0
      %3605 = vmatpush1.msra.mxu0 0.0
      %3606 = vmatprep.subr.mxu0 0.0
      %3607 = vmatpush1.msra.mxu0 0.0
      %3608 = vmatprep.subr.mxu0 0.0
      %3609 = vmatpush1.msra.mxu0 0.0
      %3610 = vmatprep.subr.mxu0 0.0
      %3611 = vmatpush1.msra.mxu0 0.0
      %3612 = vmatprep.subr.mxu0 0.0
      %3613 = vmatpush1.msra.mxu0 0.0
      %3614 = vmatprep.subr.mxu0 0.0
      %3615 = vmatpush1.msra.mxu0 0.0
      %3616 = vmatprep.subr.mxu0 0.0
      %3617 = vmatpush1.msra.mxu0 0.0
      %3618 = vmatprep.subr.mxu0 0.0
      %3619 = vmatpush1.msra.mxu0 0.0
      %3620 = vmatprep.subr.mxu0 0.0
      %3621 = vmatpush1.msra.mxu0 0.0
      %3622 = vmatprep.subr.mxu0 0.0
      %3623 = vmatpush1.msra.mxu0 0.0
      %3624 = vmatprep.subr.mxu0 0.0
      %3625 = vmatpush1.msra.mxu0 0.0
      %3626 = vmatprep.subr.mxu0 0.0
      %3627 = vmatpush1.msra.mxu0 0.0
      %3628 = vmatprep.subr.mxu0 0.0
      %3629 = vmatpush1.msra.mxu0 0.0
      %3630 = vmatprep.subr.mxu0 0.0
      %3631 = vmatpush1.msra.mxu0 0.0
      %3632 = vmatprep.subr.mxu0 0.0
      %3633 = vmatpush1.msra.mxu0 0.0
      %3634 = vmatprep.subr.mxu0 0.0
      %3635 = vmatpush1.msra.mxu0 0.0
      %3636 = vmatprep.subr.mxu0 0.0
      %3637 = vmatpush1.msra.mxu0 0.0
      %3638 = vmatprep.subr.mxu0 0.0
      %3639 = vmatpush1.msra.mxu0 0.0
      %3640 = vmatprep.subr.mxu0 0.0
      %3641 = vmatpush1.msra.mxu0 0.0
      %3642 = vmatprep.subr.mxu0 0.0
      %3643 = vmatpush1.msra.mxu0 0.0
      %3644 = vmatprep.subr.mxu0 0.0
      %3645 = vmatpush1.msra.mxu0 0.0
      %3646 = vmatprep.subr.mxu0 0.0
      %3647 = vmatpush1.msra.mxu0 0.0
      %3648 = vmatprep.mubr.f32.mxu0 0.0
      %3649 = vmatmul.mubr.f32.gmra.mrb[0].mxu0 %v3582
      %v3650 = vpop.f32.mrb[0].mxu0
      %v3651 = vadd.f32 0.0, %v3650
      %v3652 = vpop.f32.mrb[0].mxu0
      %v3653 = vadd.f32 0.0, %v3652
      %3654 = vdwg.mxu0
      %v3655 = vadd.f32 %v3537, %v3651
      %v3656 = vadd.f32 %v3538, %v3653
      %v3659 = vcombine.low %v3655, %v3656
      %v3661 = vunpack.c.l.s4 1983009808
      %v3662 = vunpack.c.0.s8 %v3661
      %v3663 = vlaneseq
      %v3664 = vshrl.u32 %v3663, 7
      %v3665 = vsub.s32 %v3662, %v3664
      %v3666 = vrot.slane %v3659, %v3665
      %3668 = vst [vmem:[%s224] sm:$0xf] %v3666
      %p3669 = scmp.lt.s32.totalorder %s16, 1
      %s3670 = scalar_select %p3669, %s16, 1
      %s3671 = smul.addr %s3670, 2
      %s3672 = smul.addr %s3671, 2
      %s3673 = scalar_lea.vmem %s5, %s3672
      // Predicated region
      $region41: #{scell_forward.3} parent=39 // pred_check
        %p3674 = pneg %p144
      $region42: #{scell_forward.3} parent=39 // pred_check_branch
        %3676 = sbr.rel (%p3674) target = $region44
      $region43: #{scell_forward.3} parent=39 // pred_region
        _
      $region44: #{scell_forward.3} parent=39 // pred_fallthru
        _
    $region40: #{scell_forward.3} parent=5 // pred_fallthru
      _
    %p3677 = scmp.le.s32.totalorder 2, %s11
    // Predicated region
    $region45: #{scell_forward.3} parent=5 // pred_check
      %p3678 = pneg %p3677
    $region46: #{scell_forward.3} parent=5 // pred_check_branch
      %3680 = sbr.rel (%p3678) target = $region48
    $region47: #{scell_forward.3} parent=5 // pred_region
      %s3681 = ssub.s32 %s11, 2
      // Predicated region
      $region49: #{scell_forward.3} parent=47 // pred_check
        %p3682 = pneg %p150
      $region50: #{scell_forward.3} parent=47 // pred_check_branch
        %3684 = sbr.rel (%p3682) target = $region52
      $region51: #{scell_forward.3} parent=47 // pred_region
        %p3685 = scmp.lt.s32.totalorder %s17, 1
        %s3686 = scalar_select %p3685, %s17, 1
        %s3687 = smul.addr %s3686, 2
        %s3688 = smul.addr %s3687, 2
        %s3689 = scalar_lea.vmem %s5, %s3688
      $region52: #{scell_forward.3} parent=47 // pred_fallthru
        _
    $region48: #{scell_forward.3} parent=5 // pred_fallthru
      _
  $region6: #{scell_forward.3} parent=0 // loop_footer
    %s15 = sadd.s32 1, %s11
  $region7: #{scell_forward.3} parent=0 // loop_footer_branch
    %10 = sbr.rel target = $region3
  $region8: #{scell_forward.3} parent=0 // loop_exit
    _

</llo_original>
